<compile_context>
chip_gen: v7x
topology: tpu7x:2x2x1
jax: 0.10.0
libtpu: 0.0.40
codegen_flags: <defaults>
</compile_context>

<pallas_src>
import jax
import jax.numpy as jnp
from jax.experimental import pallas as pl
from jax.experimental.pallas import tpu as pltpu

# ---- Discriminator(chn_num=4) configuration (Linear(1968, ...) forces L_in=500) ----
CHN = 4            # chn_num
L_IN = 500         # conv 246 -> pool 123 -> 16*123 = 1968
K = 10             # Conv1d kernel_size
STRIDE = 2         # Conv1d stride
C_OUT = 16         # Conv1d out_channels
L_CONV = (L_IN - K) // STRIDE + 1   # 246
L_POOL = L_CONV // 2                # 123
LP = 128                            # lane-padded pooled length
FLAT = C_OUT * L_POOL               # 1968
HID = 600
BN_EPS = 1e-5
CH_BLK = 8                          # channels of w2 streamed per grid step
N_STEPS = C_OUT // CH_BLK           # 2


def fused_kernel(pt_ref, w1_ref, w2_ref, b2_ref, w3_ref, b3_ref,
                 out_ref, pooled_ref, h_ref):
    g = pl.program_id(0)
    n = out_ref.shape[0]
    npos = n * LP                        # padded columns per even/odd half
    inv_cnt = 1.0 / float(n * L_CONV)    # real (unpadded) BN element count

    @pl.when(g == 0)
    def _():
        # Conv1d as ONE GEMM over [even | odd] stacked, per-sample 128-aligned
        # output positions. b1 is omitted: a per-channel constant is exactly
        # removed by the training-mode BatchNorm (gamma=1, beta=0) that follows.
        # Zero-padded columns produce exact 0 here, so they do not perturb sums.
        conv = jnp.dot(w1_ref[...], pt_ref[...],
                       preferred_element_type=jnp.float32)      # (16, 2*n*LP)
        s1 = jnp.sum(conv, axis=1, keepdims=True)
        s2 = jnp.sum(conv * conv, axis=1, keepdims=True)
        mean = s1 * inv_cnt
        var = jnp.maximum(s2 * inv_cnt - mean * mean, 0.0)      # one-pass, clamped
        a = (conv - mean) * jax.lax.rsqrt(var + BN_EPS)         # BatchNorm1d
        a = jnp.where(a >= 0, a, 0.2 * a)                       # LeakyReLU(0.2)
        pooled_t = jnp.maximum(a[:, :npos], a[:, npos:])        # MaxPool1d(2)
        for i in range(n):                                      # (C_OUT, n, LP)
            pooled_ref[:, i, :] = pooled_t[:, i * LP:(i + 1) * LP]
        h_ref[...] = jnp.zeros_like(h_ref)

    # Dense stage: stream CH_BLK (LP, HID) bf16 slabs of the pre-permuted w2 per
    # grid step and accumulate h += pooled_c @ w2_c (bf16 MXU, f32 accumulate).
    # Padded (junk) pooled lanes hit zero-padded w2 rows -> contribute 0.
    base = g * CH_BLK
    for dc in range(CH_BLK):
        lhs = pooled_ref[base + dc].astype(jnp.bfloat16)        # (n, LP) bf16
        h_ref[...] += jnp.dot(lhs, w2_ref[dc],
                              preferred_element_type=jnp.float32)

    @pl.when(g == pl.num_programs(0) - 1)
    def _():
        h = h_ref[...] + b2_ref[...]                            # Linear bias
        h = jnp.where(h >= 0, h, 0.2 * h)                       # LeakyReLU(0.2)
        # Linear(600, 1) as a multiply-reduce (avoids a 1-lane MXU matmul).
        out_ref[...] = (jnp.sum(h * w3_ref[...], axis=-1, keepdims=True)
                        + b3_ref[...])


def prepare_params(params):
    """One-time, out-of-jit weight prep (do NOT re-run per forward call).

    Folds PyTorch's channel-major flatten into w2, pads 123 -> 128 with zeros,
    and casts w2 to bf16: w2p[c, l, j] = w2[j, c*L_POOL + l] for l < 123, else 0.
    """
    w1, b1, w2, b2, w3, b3 = params
    del b1  # exactly cancelled by training-mode BatchNorm (gamma=1, beta=0)
    w1t = w1.reshape(C_OUT, CHN * K)                                       # (16, 40)
    w2_3 = jnp.transpose(w2.reshape(HID, C_OUT, L_POOL), (1, 2, 0))        # (16,123,600)
    w2p = jnp.pad(w2_3, ((0, 0), (0, LP - L_POOL), (0, 0))).astype(jnp.bfloat16)
    return (w1t, w2p, b2.reshape(1, HID), w3.reshape(1, HID), b3.reshape(1, 1))


@jax.jit
def discriminator_forward(x, labels, prep):
    del labels  # unused, exactly as in the PyTorch forward
    n = x.shape[0]
    w1t, w2p, b2r, w3r, b3r = prep

    # im2col in transposed layout: rows = (in_channel, tap), columns are
    # per-sample 128-lane-aligned: col = eo*(n*LP) + i*LP + l (l >= 123 zero-pad),
    # with even conv positions in the first n*LP columns and odd in the rest.
    # TODO(synk): at large batch, build patches in-kernel from raw x to avoid
    # the ~10x im2col HBM inflation; irrelevant at this batch size.
    idx = jnp.arange(L_CONV)[:, None] * STRIDE + jnp.arange(K)[None, :]
    patches = x[:, :, idx]                                      # (n, CHN, 246, K)

    def to_pt(p):                                               # (n,CHN,123,K) -> (CHN*K, n*LP)
        p = jnp.transpose(p, (1, 3, 0, 2))                      # (CHN, K, n, 123)
        p = jnp.pad(p, ((0, 0), (0, 0), (0, 0), (0, LP - L_POOL)))
        return p.reshape(CHN * K, n * LP)

    pt = jnp.concatenate([to_pt(patches[:, :, 0::2, :]),
                          to_pt(patches[:, :, 1::2, :])], axis=1)   # (40, 2*n*LP)

    out = pl.pallas_call(
        fused_kernel,
        out_shape=jax.ShapeDtypeStruct((n, 1), jnp.float32),
        grid_spec=pltpu.PrefetchScalarGridSpec(
            num_scalar_prefetch=0,
            grid=(N_STEPS,),
            in_specs=[
                pl.BlockSpec((CHN * K, 2 * n * LP), lambda g: (0, 0)),
                pl.BlockSpec((C_OUT, CHN * K), lambda g: (0, 0)),
                pl.BlockSpec((CH_BLK, LP, HID), lambda g: (g, 0, 0)),
                pl.BlockSpec((1, HID), lambda g: (0, 0)),
                pl.BlockSpec((1, HID), lambda g: (0, 0)),
                pl.BlockSpec((1, 1), lambda g: (0, 0)),
            ],
            out_specs=pl.BlockSpec((n, 1), lambda g: (0, 0)),
            scratch_shapes=[
                pltpu.VMEM((C_OUT, n, LP), jnp.float32),   # pooled activations
                pltpu.VMEM((n, HID), jnp.float32),         # dense accumulator
            ],
        ),
        compiler_params=pltpu.CompilerParams(
            dimension_semantics=("arbitrary",)),
    )(pt, w1t, w2p, b2r, w3r, b3r)
    return out


def init_params(key):
    ks = jax.random.split(key, 6)
    w1 = jax.random.normal(ks[0], (C_OUT, CHN, K), jnp.float32) * 0.1   # Conv1d weight
    b1 = jax.random.normal(ks[1], (C_OUT,), jnp.float32) * 0.1          # Conv1d bias
    w2 = jax.random.normal(ks[2], (HID, FLAT), jnp.float32) * 0.05      # Linear(1968,600)
    b2 = jax.random.normal(ks[3], (HID,), jnp.float32) * 0.05
    w3 = jax.random.normal(ks[4], (1, HID), jnp.float32) * 0.05         # Linear(600,1)
    b3 = jax.random.normal(ks[5], (1,), jnp.float32) * 0.05
    return (w1, b1, w2, b2, w3, b3)


def reference_forward(x, params):
    # Pure-JAX reference mirroring the PyTorch forward (training-mode BN).
    w1, b1, w2, b2, w3, b3 = params
    conv = jax.lax.conv_general_dilated(
        x, w1, window_strides=(STRIDE,), padding="VALID",
        dimension_numbers=("NCH", "OIH", "NCH"),
        precision=jax.lax.Precision.HIGHEST)
    conv = conv + b1[None, :, None]
    mean = jnp.mean(conv, axis=(0, 2), keepdims=True)
    var = jnp.mean((conv - mean) ** 2, axis=(0, 2), keepdims=True)
    a = (conv - mean) * jax.lax.rsqrt(var + BN_EPS)
    a = jnp.where(a >= 0, a, 0.2 * a)
    pooled = jnp.maximum(a[:, :, 0::2], a[:, :, 1::2])          # (N, 16, 123)
    flat = pooled.reshape(x.shape[0], -1)
    h = jnp.dot(flat, w2.T, precision=jax.lax.Precision.HIGHEST) + b2
    h = jnp.where(h >= 0, h, 0.2 * h)
    return jnp.dot(h, w3.T, precision=jax.lax.Precision.HIGHEST) + b3


if __name__ == "__main__":
    key = jax.random.PRNGKey(0)
    kx, kl, kp = jax.random.split(key, 3)
    x = jax.random.normal(kx, (2, CHN, L_IN), jnp.float32)      # (N, chn_num, L)
    labels = jax.random.randint(kl, (2,), 0, 2)                 # ignored by forward
    params = init_params(kp)
    prep = prepare_params(params)                               # one-time weight prep

    out = jax.block_until_ready(discriminator_forward(x, labels, prep))
    ref = reference_forward(x, params)

    assert out.shape == (2, 1), out.shape
    assert jnp.allclose(out, ref, rtol=2e-2, atol=2e-2), (out, ref)
    # TODO(synk): BatchNorm running-stat updates (training-side effect) are not
    # modeled; they do not affect the returned forward value.
    print("KERNEL_OK")
</pallas_src>

<mosaic_0001>
module attributes {stable_mosaic.version = 11 : i64} {
  func.func @fused_kernel(%arg0: i32, %arg1: memref<40x512xf32, #tpu.memory_space<vmem>>, %arg2: memref<16x40xf32, #tpu.memory_space<vmem>>, %arg3: memref<8x128x600xbf16, #tpu.memory_space<vmem>>, %arg4: memref<1x600xf32, #tpu.memory_space<vmem>>, %arg5: memref<1x600xf32, #tpu.memory_space<vmem>>, %arg6: memref<1x1xf32, #tpu.memory_space<vmem>>, %arg7: memref<2x1xf32, #tpu.memory_space<vmem>>, %arg8: memref<16x2x128xf32, #tpu.memory_space<vmem>>, %arg9: memref<2x600xf32, #tpu.memory_space<vmem>>) attributes {dimension_semantics = [#tpu.dimension_semantics<arbitrary>], iteration_bounds = array<i64: 2>, scalar_prefetch = 0 : i64, scratch_operands = 2 : i64, tpu.core_type = #tpu.core_type<tc>, window_params = [{pipeline_mode = #tpu.pipeline_mode<synchronous>, transform_indices = @transform_0, window_bounds = array<i64: 40, 512>}, {pipeline_mode = #tpu.pipeline_mode<synchronous>, transform_indices = @transform_1, window_bounds = array<i64: 16, 40>}, {transform_indices = @transform_2, window_bounds = array<i64: 8, 128, 600>}, {pipeline_mode = #tpu.pipeline_mode<synchronous>, transform_indices = @transform_3, window_bounds = array<i64: 1, 600>}, {pipeline_mode = #tpu.pipeline_mode<synchronous>, transform_indices = @transform_4, window_bounds = array<i64: 1, 600>}, {pipeline_mode = #tpu.pipeline_mode<synchronous>, transform_indices = @transform_5, window_bounds = array<i64: 1, 1>}, {pipeline_mode = #tpu.pipeline_mode<synchronous>, transform_indices = @transform_6, window_bounds = array<i64: 2, 1>}]} {
    %c0_i32 = arith.constant 0 : i32
    %0 = arith.cmpi eq, %arg0, %c0_i32 : i32
    %1 = arith.extui %0 : i1 to i32
    %c0_i32_0 = arith.constant 0 : i32
    %2 = arith.cmpi ne, %1, %c0_i32_0 : i32
    scf.if %2 {
      %c0_75 = arith.constant 0 : index
      %c0_76 = arith.constant 0 : index
      %95 = vector.load %arg2[%c0_75, %c0_76] : memref<16x40xf32, #tpu.memory_space<vmem>>, vector<16x40xf32>
      %c0_77 = arith.constant 0 : index
      %c0_78 = arith.constant 0 : index
      %96 = vector.load %arg1[%c0_77, %c0_78] : memref<40x512xf32, #tpu.memory_space<vmem>>, vector<40x512xf32>
      %cst_79 = arith.constant dense<0.000000e+00> : vector<16x512xf32>
      %97 = tpu.matmul %95, %96, %cst_79 {dimension_numbers = #tpu.dot_dimension_numbers<[1], [0], [0], [1], [0, 0, 1, 1], [], []>} : vector<16x40xf32>, vector<40x512xf32>, vector<16x512xf32> -> vector<16x512xf32>
      %cst_80 = arith.constant dense<0.000000e+00> : vector<16xf32>
      %98 = vector.multi_reduction <add>, %97, %cst_80 [1] : vector<16x512xf32> to vector<16xf32>
      %99 = vector.shape_cast %98 : vector<16xf32> to vector<16x1xf32>
      %100 = arith.mulf %97, %97 : vector<16x512xf32>
      %cst_81 = arith.constant dense<0.000000e+00> : vector<16xf32>
      %101 = vector.multi_reduction <add>, %100, %cst_81 [1] : vector<16x512xf32> to vector<16xf32>
      %102 = vector.shape_cast %101 : vector<16xf32> to vector<16x1xf32>
      %cst_82 = arith.constant 0.00203252025 : f32
      %103 = vector.broadcast %cst_82 : f32 to vector<16x1xf32>
      %104 = arith.mulf %99, %103 : vector<16x1xf32>
      %cst_83 = arith.constant 0.00203252025 : f32
      %105 = vector.broadcast %cst_83 : f32 to vector<16x1xf32>
      %106 = arith.mulf %102, %105 : vector<16x1xf32>
      %107 = arith.mulf %104, %104 : vector<16x1xf32>
      %108 = arith.subf %106, %107 : vector<16x1xf32>
      %cst_84 = arith.constant 0.000000e+00 : f32
      %109 = vector.broadcast %cst_84 : f32 to vector<16x1xf32>
      %110 = arith.maximumf %108, %109 : vector<16x1xf32>
      %111 = vector.broadcast %104 : vector<16x1xf32> to vector<16x512xf32>
      %112 = arith.subf %97, %111 : vector<16x512xf32>
      %cst_85 = arith.constant 9.99999974E-6 : f32
      %113 = vector.broadcast %cst_85 : f32 to vector<16x1xf32>
      %114 = arith.addf %110, %113 : vector<16x1xf32>
      %115 = math.rsqrt %114 : vector<16x1xf32>
      %116 = vector.broadcast %115 : vector<16x1xf32> to vector<16x512xf32>
      %117 = arith.mulf %112, %116 : vector<16x512xf32>
      %cst_86 = arith.constant 0.000000e+00 : f32
      %118 = vector.broadcast %cst_86 : f32 to vector<16x512xf32>
      %119 = arith.cmpf oge, %117, %118 : vector<16x512xf32>
      %cst_87 = arith.constant 2.000000e-01 : f32
      %120 = vector.broadcast %cst_87 : f32 to vector<16x512xf32>
      %121 = arith.mulf %120, %117 : vector<16x512xf32>
      %122 = arith.select %119, %117, %121 : vector<16x512xi1>, vector<16x512xf32>
      %123 = vector.extract_strided_slice %122 {offsets = [0, 0], sizes = [16, 256], strides = [1, 1]} : vector<16x512xf32> to vector<16x256xf32>
      %124 = vector.extract_strided_slice %122 {offsets = [0, 256], sizes = [16, 256], strides = [1, 1]} : vector<16x512xf32> to vector<16x256xf32>
      %125 = arith.maximumf %123, %124 : vector<16x256xf32>
      %126 = vector.extract_strided_slice %125 {offsets = [0, 0], sizes = [16, 128], strides = [1, 1]} : vector<16x256xf32> to vector<16x128xf32>
      %c0_88 = arith.constant 0 : index
      %c0_89 = arith.constant 0 : index
      %c0_90 = arith.constant 0 : index
      %127 = vector.load %arg8[%c0_88, %c0_89, %c0_90] : memref<16x2x128xf32, #tpu.memory_space<vmem>>, vector<16x1x128xf32>
      %128 = vector.shape_cast %127 : vector<16x1x128xf32> to vector<16x128xf32>
      %129 = vector.shape_cast %126 : vector<16x128xf32> to vector<16x1x128xf32>
      tpu.vector_store %arg8[%c0_88, %c0_89, %c0_90], %129 {strides = array<i32>} : memref<16x2x128xf32, #tpu.memory_space<vmem>>, vector<16x1x128xf32>,
      %130 = vector.extract_strided_slice %125 {offsets = [0, 128], sizes = [16, 128], strides = [1, 1]} : vector<16x256xf32> to vector<16x128xf32>
      %c0_91 = arith.constant 0 : index
      %c1_92 = arith.constant 1 : index
      %c0_93 = arith.constant 0 : index
      %131 = vector.load %arg8[%c0_91, %c1_92, %c0_93] : memref<16x2x128xf32, #tpu.memory_space<vmem>>, vector<16x1x128xf32>
      %132 = vector.shape_cast %131 : vector<16x1x128xf32> to vector<16x128xf32>
      %133 = vector.shape_cast %130 : vector<16x128xf32> to vector<16x1x128xf32>
      tpu.vector_store %arg8[%c0_91, %c1_92, %c0_93], %133 {strides = array<i32>} : memref<16x2x128xf32, #tpu.memory_space<vmem>>, vector<16x1x128xf32>,
      %cst_94 = arith.constant 0.000000e+00 : f32
      %134 = vector.broadcast %cst_94 : f32 to vector<2x600xf32>
      %c0_95 = arith.constant 0 : index
      %c0_96 = arith.constant 0 : index
      %135 = vector.load %arg9[%c0_95, %c0_96] : memref<2x600xf32, #tpu.memory_space<vmem>>, vector<2x600xf32>
      tpu.vector_store %arg9[%c0_95, %c0_96], %134 {strides = array<i32>} : memref<2x600xf32, #tpu.memory_space<vmem>>, vector<2x600xf32>,
    } else {
    }
    %c8_i32 = arith.constant 8 : i32
    %3 = arith.muli %arg0, %c8_i32 : i32
    %c0_i32_1 = arith.constant 0 : i32
    %4 = arith.addi %3, %c0_i32_1 : i32
    %5 = arith.index_cast %4 : i32 to index
    %c0 = arith.constant 0 : index
    %c0_2 = arith.constant 0 : index
    %6 = vector.load %arg8[%5, %c0, %c0_2] : memref<16x2x128xf32, #tpu.memory_space<vmem>>, vector<1x2x128xf32>
    %7 = vector.shape_cast %6 : vector<1x2x128xf32> to vector<2x128xf32>
    %8 = arith.truncf %7 : vector<2x128xf32> to vector<2x128xbf16>
    %c0_3 = arith.constant 0 : index
    %c0_4 = arith.constant 0 : index
    %9 = vector.load %arg9[%c0_3, %c0_4] : memref<2x600xf32, #tpu.memory_space<vmem>>, vector<2x600xf32>
    %c0_5 = arith.constant 0 : index
    %c0_6 = arith.constant 0 : index
    %c0_7 = arith.constant 0 : index
    %10 = vector.load %arg3[%c0_5, %c0_6, %c0_7] : memref<8x128x600xbf16, #tpu.memory_space<vmem>>, vector<1x128x600xbf16>
    %11 = vector.shape_cast %10 : vector<1x128x600xbf16> to vector<128x600xbf16>
    %cst = arith.constant dense<0.000000e+00> : vector<2x600xf32>
    %12 = tpu.matmul %8, %11, %cst {dimension_numbers = #tpu.dot_dimension_numbers<[1], [0], [0], [1], [0, 0, 1, 1], [], []>} : vector<2x128xbf16>, vector<128x600xbf16>, vector<2x600xf32> -> vector<2x600xf32>
    %13 = arith.addf %9, %12 : vector<2x600xf32>
    %c0_8 = arith.constant 0 : index
    %c0_9 = arith.constant 0 : index
    %14 = vector.load %arg9[%c0_8, %c0_9] : memref<2x600xf32, #tpu.memory_space<vmem>>, vector<2x600xf32>
    tpu.vector_store %arg9[%c0_8, %c0_9], %13 {strides = array<i32>} : memref<2x600xf32, #tpu.memory_space<vmem>>, vector<2x600xf32>,
    %c1_i32 = arith.constant 1 : i32
    %15 = arith.addi %3, %c1_i32 : i32
    %16 = arith.index_cast %15 : i32 to index
    %c0_10 = arith.constant 0 : index
    %c0_11 = arith.constant 0 : index
    %17 = vector.load %arg8[%16, %c0_10, %c0_11] : memref<16x2x128xf32, #tpu.memory_space<vmem>>, vector<1x2x128xf32>
    %18 = vector.shape_cast %17 : vector<1x2x128xf32> to vector<2x128xf32>
    %19 = arith.truncf %18 : vector<2x128xf32> to vector<2x128xbf16>
    %c0_12 = arith.constant 0 : index
    %c0_13 = arith.constant 0 : index
    %20 = vector.load %arg9[%c0_12, %c0_13] : memref<2x600xf32, #tpu.memory_space<vmem>>, vector<2x600xf32>
    %c1 = arith.constant 1 : index
    %c0_14 = arith.constant 0 : index
    %c0_15 = arith.constant 0 : index
    %21 = vector.load %arg3[%c1, %c0_14, %c0_15] : memref<8x128x600xbf16, #tpu.memory_space<vmem>>, vector<1x128x600xbf16>
    %22 = vector.shape_cast %21 : vector<1x128x600xbf16> to vector<128x600xbf16>
    %cst_16 = arith.constant dense<0.000000e+00> : vector<2x600xf32>
    %23 = tpu.matmul %19, %22, %cst_16 {dimension_numbers = #tpu.dot_dimension_numbers<[1], [0], [0], [1], [0, 0, 1, 1], [], []>} : vector<2x128xbf16>, vector<128x600xbf16>, vector<2x600xf32> -> vector<2x600xf32>
    %24 = arith.addf %20, %23 : vector<2x600xf32>
    %c0_17 = arith.constant 0 : index
    %c0_18 = arith.constant 0 : index
    %25 = vector.load %arg9[%c0_17, %c0_18] : memref<2x600xf32, #tpu.memory_space<vmem>>, vector<2x600xf32>
    tpu.vector_store %arg9[%c0_17, %c0_18], %24 {strides = array<i32>} : memref<2x600xf32, #tpu.memory_space<vmem>>, vector<2x600xf32>,
    %c2_i32 = arith.constant 2 : i32
    %26 = arith.addi %3, %c2_i32 : i32
    %27 = arith.index_cast %26 : i32 to index
    %c0_19 = arith.constant 0 : index
    %c0_20 = arith.constant 0 : index
    %28 = vector.load %arg8[%27, %c0_19, %c0_20] : memref<16x2x128xf32, #tpu.memory_space<vmem>>, vector<1x2x128xf32>
    %29 = vector.shape_cast %28 : vector<1x2x128xf32> to vector<2x128xf32>
    %30 = arith.truncf %29 : vector<2x128xf32> to vector<2x128xbf16>
    %c0_21 = arith.constant 0 : index
    %c0_22 = arith.constant 0 : index
    %31 = vector.load %arg9[%c0_21, %c0_22] : memref<2x600xf32, #tpu.memory_space<vmem>>, vector<2x600xf32>
    %c2 = arith.constant 2 : index
    %c0_23 = arith.constant 0 : index
    %c0_24 = arith.constant 0 : index
    %32 = vector.load %arg3[%c2, %c0_23, %c0_24] : memref<8x128x600xbf16, #tpu.memory_space<vmem>>, vector<1x128x600xbf16>
    %33 = vector.shape_cast %32 : vector<1x128x600xbf16> to vector<128x600xbf16>
    %cst_25 = arith.constant dense<0.000000e+00> : vector<2x600xf32>
    %34 = tpu.matmul %30, %33, %cst_25 {dimension_numbers = #tpu.dot_dimension_numbers<[1], [0], [0], [1], [0, 0, 1, 1], [], []>} : vector<2x128xbf16>, vector<128x600xbf16>, vector<2x600xf32> -> vector<2x600xf32>
    %35 = arith.addf %31, %34 : vector<2x600xf32>
    %c0_26 = arith.constant 0 : index
    %c0_27 = arith.constant 0 : index
    %36 = vector.load %arg9[%c0_26, %c0_27] : memref<2x600xf32, #tpu.memory_space<vmem>>, vector<2x600xf32>
    tpu.vector_store %arg9[%c0_26, %c0_27], %35 {strides = array<i32>} : memref<2x600xf32, #tpu.memory_space<vmem>>, vector<2x600xf32>,
    %c3_i32 = arith.constant 3 : i32
    %37 = arith.addi %3, %c3_i32 : i32
    %38 = arith.index_cast %37 : i32 to index
    %c0_28 = arith.constant 0 : index
    %c0_29 = arith.constant 0 : index
    %39 = vector.load %arg8[%38, %c0_28, %c0_29] : memref<16x2x128xf32, #tpu.memory_space<vmem>>, vector<1x2x128xf32>
    %40 = vector.shape_cast %39 : vector<1x2x128xf32> to vector<2x128xf32>
    %41 = arith.truncf %40 : vector<2x128xf32> to vector<2x128xbf16>
    %c0_30 = arith.constant 0 : index
    %c0_31 = arith.constant 0 : index
    %42 = vector.load %arg9[%c0_30, %c0_31] : memref<2x600xf32, #tpu.memory_space<vmem>>, vector<2x600xf32>
    %c3 = arith.constant 3 : index
    %c0_32 = arith.constant 0 : index
    %c0_33 = arith.constant 0 : index
    %43 = vector.load %arg3[%c3, %c0_32, %c0_33] : memref<8x128x600xbf16, #tpu.memory_space<vmem>>, vector<1x128x600xbf16>
    %44 = vector.shape_cast %43 : vector<1x128x600xbf16> to vector<128x600xbf16>
    %cst_34 = arith.constant dense<0.000000e+00> : vector<2x600xf32>
    %45 = tpu.matmul %41, %44, %cst_34 {dimension_numbers = #tpu.dot_dimension_numbers<[1], [0], [0], [1], [0, 0, 1, 1], [], []>} : vector<2x128xbf16>, vector<128x600xbf16>, vector<2x600xf32> -> vector<2x600xf32>
    %46 = arith.addf %42, %45 : vector<2x600xf32>
    %c0_35 = arith.constant 0 : index
    %c0_36 = arith.constant 0 : index
    %47 = vector.load %arg9[%c0_35, %c0_36] : memref<2x600xf32, #tpu.memory_space<vmem>>, vector<2x600xf32>
    tpu.vector_store %arg9[%c0_35, %c0_36], %46 {strides = array<i32>} : memref<2x600xf32, #tpu.memory_space<vmem>>, vector<2x600xf32>,
    %c4_i32 = arith.constant 4 : i32
    %48 = arith.addi %3, %c4_i32 : i32
    %49 = arith.index_cast %48 : i32 to index
    %c0_37 = arith.constant 0 : index
    %c0_38 = arith.constant 0 : index
    %50 = vector.load %arg8[%49, %c0_37, %c0_38] : memref<16x2x128xf32, #tpu.memory_space<vmem>>, vector<1x2x128xf32>
    %51 = vector.shape_cast %50 : vector<1x2x128xf32> to vector<2x128xf32>
    %52 = arith.truncf %51 : vector<2x128xf32> to vector<2x128xbf16>
    %c0_39 = arith.constant 0 : index
    %c0_40 = arith.constant 0 : index
    %53 = vector.load %arg9[%c0_39, %c0_40] : memref<2x600xf32, #tpu.memory_space<vmem>>, vector<2x600xf32>
    %c4 = arith.constant 4 : index
    %c0_41 = arith.constant 0 : index
    %c0_42 = arith.constant 0 : index
    %54 = vector.load %arg3[%c4, %c0_41, %c0_42] : memref<8x128x600xbf16, #tpu.memory_space<vmem>>, vector<1x128x600xbf16>
    %55 = vector.shape_cast %54 : vector<1x128x600xbf16> to vector<128x600xbf16>
    %cst_43 = arith.constant dense<0.000000e+00> : vector<2x600xf32>
    %56 = tpu.matmul %52, %55, %cst_43 {dimension_numbers = #tpu.dot_dimension_numbers<[1], [0], [0], [1], [0, 0, 1, 1], [], []>} : vector<2x128xbf16>, vector<128x600xbf16>, vector<2x600xf32> -> vector<2x600xf32>
    %57 = arith.addf %53, %56 : vector<2x600xf32>
    %c0_44 = arith.constant 0 : index
    %c0_45 = arith.constant 0 : index
    %58 = vector.load %arg9[%c0_44, %c0_45] : memref<2x600xf32, #tpu.memory_space<vmem>>, vector<2x600xf32>
    tpu.vector_store %arg9[%c0_44, %c0_45], %57 {strides = array<i32>} : memref<2x600xf32, #tpu.memory_space<vmem>>, vector<2x600xf32>,
    %c5_i32 = arith.constant 5 : i32
    %59 = arith.addi %3, %c5_i32 : i32
    %60 = arith.index_cast %59 : i32 to index
    %c0_46 = arith.constant 0 : index
    %c0_47 = arith.constant 0 : index
    %61 = vector.load %arg8[%60, %c0_46, %c0_47] : memref<16x2x128xf32, #tpu.memory_space<vmem>>, vector<1x2x128xf32>
    %62 = vector.shape_cast %61 : vector<1x2x128xf32> to vector<2x128xf32>
    %63 = arith.truncf %62 : vector<2x128xf32> to vector<2x128xbf16>
    %c0_48 = arith.constant 0 : index
    %c0_49 = arith.constant 0 : index
    %64 = vector.load %arg9[%c0_48, %c0_49] : memref<2x600xf32, #tpu.memory_space<vmem>>, vector<2x600xf32>
    %c5 = arith.constant 5 : index
    %c0_50 = arith.constant 0 : index
    %c0_51 = arith.constant 0 : index
    %65 = vector.load %arg3[%c5, %c0_50, %c0_51] : memref<8x128x600xbf16, #tpu.memory_space<vmem>>, vector<1x128x600xbf16>
    %66 = vector.shape_cast %65 : vector<1x128x600xbf16> to vector<128x600xbf16>
    %cst_52 = arith.constant dense<0.000000e+00> : vector<2x600xf32>
    %67 = tpu.matmul %63, %66, %cst_52 {dimension_numbers = #tpu.dot_dimension_numbers<[1], [0], [0], [1], [0, 0, 1, 1], [], []>} : vector<2x128xbf16>, vector<128x600xbf16>, vector<2x600xf32> -> vector<2x600xf32>
    %68 = arith.addf %64, %67 : vector<2x600xf32>
    %c0_53 = arith.constant 0 : index
    %c0_54 = arith.constant 0 : index
    %69 = vector.load %arg9[%c0_53, %c0_54] : memref<2x600xf32, #tpu.memory_space<vmem>>, vector<2x600xf32>
    tpu.vector_store %arg9[%c0_53, %c0_54], %68 {strides = array<i32>} : memref<2x600xf32, #tpu.memory_space<vmem>>, vector<2x600xf32>,
    %c6_i32 = arith.constant 6 : i32
    %70 = arith.addi %3, %c6_i32 : i32
    %71 = arith.index_cast %70 : i32 to index
    %c0_55 = arith.constant 0 : index
    %c0_56 = arith.constant 0 : index
    %72 = vector.load %arg8[%71, %c0_55, %c0_56] : memref<16x2x128xf32, #tpu.memory_space<vmem>>, vector<1x2x128xf32>
    %73 = vector.shape_cast %72 : vector<1x2x128xf32> to vector<2x128xf32>
    %74 = arith.truncf %73 : vector<2x128xf32> to vector<2x128xbf16>
    %c0_57 = arith.constant 0 : index
    %c0_58 = arith.constant 0 : index
    %75 = vector.load %arg9[%c0_57, %c0_58] : memref<2x600xf32, #tpu.memory_space<vmem>>, vector<2x600xf32>
    %c6 = arith.constant 6 : index
    %c0_59 = arith.constant 0 : index
    %c0_60 = arith.constant 0 : index
    %76 = vector.load %arg3[%c6, %c0_59, %c0_60] : memref<8x128x600xbf16, #tpu.memory_space<vmem>>, vector<1x128x600xbf16>
    %77 = vector.shape_cast %76 : vector<1x128x600xbf16> to vector<128x600xbf16>
    %cst_61 = arith.constant dense<0.000000e+00> : vector<2x600xf32>
    %78 = tpu.matmul %74, %77, %cst_61 {dimension_numbers = #tpu.dot_dimension_numbers<[1], [0], [0], [1], [0, 0, 1, 1], [], []>} : vector<2x128xbf16>, vector<128x600xbf16>, vector<2x600xf32> -> vector<2x600xf32>
    %79 = arith.addf %75, %78 : vector<2x600xf32>
    %c0_62 = arith.constant 0 : index
    %c0_63 = arith.constant 0 : index
    %80 = vector.load %arg9[%c0_62, %c0_63] : memref<2x600xf32, #tpu.memory_space<vmem>>, vector<2x600xf32>
    tpu.vector_store %arg9[%c0_62, %c0_63], %79 {strides = array<i32>} : memref<2x600xf32, #tpu.memory_space<vmem>>, vector<2x600xf32>,
    %c7_i32 = arith.constant 7 : i32
    %81 = arith.addi %3, %c7_i32 : i32
    %82 = arith.index_cast %81 : i32 to index
    %c0_64 = arith.constant 0 : index
    %c0_65 = arith.constant 0 : index
    %83 = vector.load %arg8[%82, %c0_64, %c0_65] : memref<16x2x128xf32, #tpu.memory_space<vmem>>, vector<1x2x128xf32>
    %84 = vector.shape_cast %83 : vector<1x2x128xf32> to vector<2x128xf32>
    %85 = arith.truncf %84 : vector<2x128xf32> to vector<2x128xbf16>
    %c0_66 = arith.constant 0 : index
    %c0_67 = arith.constant 0 : index
    %86 = vector.load %arg9[%c0_66, %c0_67] : memref<2x600xf32, #tpu.memory_space<vmem>>, vector<2x600xf32>
    %c7 = arith.constant 7 : index
    %c0_68 = arith.constant 0 : index
    %c0_69 = arith.constant 0 : index
    %87 = vector.load %arg3[%c7, %c0_68, %c0_69] : memref<8x128x600xbf16, #tpu.memory_space<vmem>>, vector<1x128x600xbf16>
    %88 = vector.shape_cast %87 : vector<1x128x600xbf16> to vector<128x600xbf16>
    %cst_70 = arith.constant dense<0.000000e+00> : vector<2x600xf32>
    %89 = tpu.matmul %85, %88, %cst_70 {dimension_numbers = #tpu.dot_dimension_numbers<[1], [0], [0], [1], [0, 0, 1, 1], [], []>} : vector<2x128xbf16>, vector<128x600xbf16>, vector<2x600xf32> -> vector<2x600xf32>
    %90 = arith.addf %86, %89 : vector<2x600xf32>
    %c0_71 = arith.constant 0 : index
    %c0_72 = arith.constant 0 : index
    %91 = vector.load %arg9[%c0_71, %c0_72] : memref<2x600xf32, #tpu.memory_space<vmem>>, vector<2x600xf32>
    tpu.vector_store %arg9[%c0_71, %c0_72], %90 {strides = array<i32>} : memref<2x600xf32, #tpu.memory_space<vmem>>, vector<2x600xf32>,
    %c1_i32_73 = arith.constant 1 : i32
    %92 = arith.cmpi eq, %arg0, %c1_i32_73 : i32
    %93 = arith.extui %92 : i1 to i32
    %c0_i32_74 = arith.constant 0 : i32
    %94 = arith.cmpi ne, %93, %c0_i32_74 : i32
    scf.if %94 {
      %c0_75 = arith.constant 0 : index
      %c0_76 = arith.constant 0 : index
      %95 = vector.load %arg9[%c0_75, %c0_76] : memref<2x600xf32, #tpu.memory_space<vmem>>, vector<2x600xf32>
      %c0_77 = arith.constant 0 : index
      %c0_78 = arith.constant 0 : index
      %96 = vector.load %arg4[%c0_77, %c0_78] : memref<1x600xf32, #tpu.memory_space<vmem>>, vector<1x600xf32>
      %97 = vector.broadcast %96 : vector<1x600xf32> to vector<2x600xf32>
      %98 = arith.addf %95, %97 : vector<2x600xf32>
      %cst_79 = arith.constant 0.000000e+00 : f32
      %99 = vector.broadcast %cst_79 : f32 to vector<2x600xf32>
      %100 = arith.cmpf oge, %98, %99 : vector<2x600xf32>
      %cst_80 = arith.constant 2.000000e-01 : f32
      %101 = vector.broadcast %cst_80 : f32 to vector<2x600xf32>
      %102 = arith.mulf %101, %98 : vector<2x600xf32>
      %103 = arith.select %100, %98, %102 : vector<2x600xi1>, vector<2x600xf32>
      %c0_81 = arith.constant 0 : index
      %c0_82 = arith.constant 0 : index
      %104 = vector.load %arg5[%c0_81, %c0_82] : memref<1x600xf32, #tpu.memory_space<vmem>>, vector<1x600xf32>
      %105 = vector.broadcast %104 : vector<1x600xf32> to vector<2x600xf32>
      %106 = arith.mulf %103, %105 : vector<2x600xf32>
      %cst_83 = arith.constant dense<0.000000e+00> : vector<2xf32>
      %107 = vector.multi_reduction <add>, %106, %cst_83 [1] : vector<2x600xf32> to vector<2xf32>
      %108 = vector.shape_cast %107 : vector<2xf32> to vector<2x1xf32>
      %c0_84 = arith.constant 0 : index
      %c0_85 = arith.constant 0 : index
      %109 = vector.load %arg6[%c0_84, %c0_85] : memref<1x1xf32, #tpu.memory_space<vmem>>, vector<1x1xf32>
      %110 = vector.broadcast %109 : vector<1x1xf32> to vector<2x1xf32>
      %111 = arith.addf %108, %110 : vector<2x1xf32>
      %c0_86 = arith.constant 0 : index
      %c0_87 = arith.constant 0 : index
      %112 = vector.load %arg7[%c0_86, %c0_87] : memref<2x1xf32, #tpu.memory_space<vmem>>, vector<2x1xf32>
      tpu.vector_store %arg7[%c0_86, %c0_87], %111 {strides = array<i32>} : memref<2x1xf32, #tpu.memory_space<vmem>>, vector<2x1xf32>,
    } else {
    }
    return
  }
  func.func @transform_0(%arg0: i32) -> (i32, i32) {
    %c0_i32 = arith.constant 0 : i32
    %c0_i32_0 = arith.constant 0 : i32
    %c0_i32_1 = arith.constant 0 : i32
    return %c0_i32, %c0_i32_0 : i32, i32
  }
  func.func @transform_1(%arg0: i32) -> (i32, i32) {
    %c0_i32 = arith.constant 0 : i32
    %c0_i32_0 = arith.constant 0 : i32
    %c0_i32_1 = arith.constant 0 : i32
    return %c0_i32, %c0_i32_0 : i32, i32
  }
  func.func @transform_2(%arg0: i32) -> (i32, i32, i32) {
    %c0_i32 = arith.constant 0 : i32
    %c0_i32_0 = arith.constant 0 : i32
    %c0_i32_1 = arith.constant 0 : i32
    return %arg0, %c0_i32, %c0_i32_0 : i32, i32, i32
  }
  func.func @transform_3(%arg0: i32) -> (i32, i32) {
    %c0_i32 = arith.constant 0 : i32
    %c0_i32_0 = arith.constant 0 : i32
    %c0_i32_1 = arith.constant 0 : i32
    return %c0_i32, %c0_i32_0 : i32, i32
  }
  func.func @transform_4(%arg0: i32) -> (i32, i32) {
    %c0_i32 = arith.constant 0 : i32
    %c0_i32_0 = arith.constant 0 : i32
    %c0_i32_1 = arith.constant 0 : i32
    return %c0_i32, %c0_i32_0 : i32, i32
  }
  func.func @transform_5(%arg0: i32) -> (i32, i32) {
    %c0_i32 = arith.constant 0 : i32
    %c0_i32_0 = arith.constant 0 : i32
    %c0_i32_1 = arith.constant 0 : i32
    return %c0_i32, %c0_i32_0 : i32, i32
  }
  func.func @transform_6(%arg0: i32) -> (i32, i32) {
    %c0_i32 = arith.constant 0 : i32
    %c0_i32_0 = arith.constant 0 : i32
    %c0_i32_1 = arith.constant 0 : i32
    return %c0_i32, %c0_i32_0 : i32, i32
  }
}

</mosaic_0001>

<llo_original>
// kernel: discriminator_forward.1
$region0: #{discriminator_forward.1}
  #allocation0 [shape = 'u32[]', space=smem, size = 0x4, offset = 0x4, fixed_abs, tag = 'smem constant byte address 0x4 - core index']
  #allocation1 [shape = 'u32[144,128]{1,0:T(1,128)}', space=vmem, size = 0x12000, scoped, tag = 'internal scratch']
  #allocation2 [shape = 'f32[16,2,128]{2,1,0:T(2,128)}', space=vmem, size = 0x4000, scoped, tag = 'scratch operand']
  #allocation3 [shape = 'f32[2,600]{1,0:T(2,128)}', space=vmem, size = 0x1400, scoped, tag = 'scratch operand']
  #allocation4 [shape = 'f32[1,1]{1,0:T(1,128)S(1)}', space=vmem, size = 0x200, scoped, tag = 'scoped memory for discriminator_forward.1']
  %s0 = inlined_call_operand.vmem [shape: f32[40,512], index: 0, kind: input, shape index: {}]
  %s1 = inlined_call_operand.vmem [shape: f32[16,40], index: 1, kind: input, shape index: {}]
  %s2 = inlined_call_operand.vmem [shape: bf16[16,128,600], index: 2, kind: input, shape index: {}]
  %s3 = inlined_call_operand.vmem [shape: f32[1,600], index: 3, kind: input, shape index: {}]
  %s4 = inlined_call_operand.vmem [shape: f32[1,600], index: 4, kind: input, shape index: {}]
  %s5 = inlined_call_operand.<no memory space> [shape: f32[1,1], index: 5, kind: input, shape index: {}]
  %s6 = inlined_call_operand.vmem [shape: f32[2,1], index: 6, kind: output, shape index: {}]
  %s7 = sld [smem:[#allocation0]]
  $region65: #{discriminator_forward.1} parent=0
    _
  %s9 = ssub.s32 1, %s7
  %s10 = scalar_select 0, %s9, %s7
  %v11 = vstv %s5
  %12 = vst [vmem:[#allocation4] sm:$0x1] %v11
  loop: start=0, step=1, limit=4
  $region2: #{discriminator_forward.1} parent=0 // loop_pre_header
    _
  $region3: #{discriminator_forward.1} parent=0 // loop_header
    %s14 = sphi 0, %s18
    %p15 = scmp.ge.s32.totalorder %s14, 4
    %s22 = sphi 0, %s22
    %s24 = sphi 0, %s22
    %s25 = sphi 0, %s24
    %s39 = sphi 0, %s25
    %s43 = sphi 0, %s43
    %s45 = sphi 0, %s43
    %s46 = sphi 0, %s45
    %s60 = sphi 0, %s46
    %s66 = sphi 0, %s68
    %s69 = sphi 0, %s66
    %s70 = sphi 0, %s69
    %s86 = sphi 0, %s70
    %s90 = sphi 0, %s90
    %s92 = sphi 0, %s90
    %s93 = sphi 0, %s92
    %s107 = sphi 0, %s93
    %s111 = sphi 0, %s111
    %s113 = sphi 0, %s111
    %s114 = sphi 0, %s113
    %s128 = sphi 0, %s114
    %s132 = sphi 0, %s132
    %s134 = sphi 0, %s132
    %s135 = sphi 0, %s134
    %s149 = sphi 0, %s135
    %s153 = sphi 0, %s153
    %s155 = sphi 0, %s153
    %s156 = sphi 0, %s155
    %s170 = sphi 0, %s156
  $region4: #{discriminator_forward.1} parent=0 // loop_header_branch
    %17 = sbr.rel (%p15) target = $region8
  $region5: #{discriminator_forward.1} parent=0 // loop_body
    %s19 = ssub.s32 %s14, 1
    %s20 = ssub.s32 %s14, 2
    %s21 = sadd.s32 %s14, 1
    %s23 = sadd.s32 %s22, 1
    %p26 = scmp.eq.s32.totalorder %s14, 1
    %p27 = scmp.ne.s32.totalorder %s22, %s24
    %p28 = scmp.eq.s32.totalorder %s14, 0
    %p29 = por %p27, %p28
    %p30 = scmp.ne.s32.totalorder %s22, %s24
    %p31 = scmp.eq.s32.totalorder %s19, 1
    %p32 = por %p30, %p31
    %p33 = scmp.ne.s32.totalorder %s24, %s25
    %p34 = scmp.eq.s32.totalorder %s19, 0
    %p35 = por %p33, %p34
    %p36 = scmp.ne.s32.totalorder %s24, %s25
    %p37 = scmp.eq.s32.totalorder %s20, 1
    %p38 = por %p36, %p37
    %p40 = scmp.ne.s32.totalorder %s25, %s39
    %p41 = scmp.eq.s32.totalorder %s20, 0
    %p42 = por %p40, %p41
    %s44 = sadd.s32 %s43, 1
    %p47 = scmp.eq.s32.totalorder %s14, 1
    %p48 = scmp.ne.s32.totalorder %s43, %s45
    %p49 = scmp.eq.s32.totalorder %s14, 0
    %p50 = por %p48, %p49
    %p51 = scmp.ne.s32.totalorder %s43, %s45
    %p52 = scmp.eq.s32.totalorder %s19, 1
    %p53 = por %p51, %p52
    %p54 = scmp.ne.s32.totalorder %s45, %s46
    %p55 = scmp.eq.s32.totalorder %s19, 0
    %p56 = por %p54, %p55
    %p57 = scmp.ne.s32.totalorder %s45, %s46
    %p58 = scmp.eq.s32.totalorder %s20, 1
    %p59 = por %p57, %p58
    %p61 = scmp.ne.s32.totalorder %s46, %s60
    %p62 = scmp.eq.s32.totalorder %s20, 0
    %p63 = por %p61, %p62
    %s64 = ssub.s32 %s14, %s21
    %p65 = scmp.eq.s32.totalorder %s64, 0
    %s67 = sadd.s32 %s66, 1
    %s68 = scalar_select %p65, %s66, %s67
    %p71 = pneg %p65
    %p72 = scmp.eq.s32.totalorder %s14, 1
    %p73 = por %p71, %p72
    %p74 = scmp.ne.s32.totalorder %s66, %s69
    %p75 = scmp.eq.s32.totalorder %s14, 0
    %p76 = por %p74, %p75
    %p77 = scmp.ne.s32.totalorder %s66, %s69
    %p78 = scmp.eq.s32.totalorder %s19, 1
    %p79 = por %p77, %p78
    %p80 = scmp.ne.s32.totalorder %s69, %s70
    %p81 = scmp.eq.s32.totalorder %s19, 0
    %p82 = por %p80, %p81
    %p83 = scmp.ne.s32.totalorder %s69, %s70
    %p84 = scmp.eq.s32.totalorder %s20, 1
    %p85 = por %p83, %p84
    %p87 = scmp.ne.s32.totalorder %s70, %s86
    %p88 = scmp.eq.s32.totalorder %s20, 0
    %p89 = por %p87, %p88
    %s91 = sadd.s32 %s90, 1
    %p94 = scmp.eq.s32.totalorder %s14, 1
    %p95 = scmp.ne.s32.totalorder %s90, %s92
    %p96 = scmp.eq.s32.totalorder %s14, 0
    %p97 = por %p95, %p96
    %p98 = scmp.ne.s32.totalorder %s90, %s92
    %p99 = scmp.eq.s32.totalorder %s19, 1
    %p100 = por %p98, %p99
    %p101 = scmp.ne.s32.totalorder %s92, %s93
    %p102 = scmp.eq.s32.totalorder %s19, 0
    %p103 = por %p101, %p102
    %p104 = scmp.ne.s32.totalorder %s92, %s93
    %p105 = scmp.eq.s32.totalorder %s20, 1
    %p106 = por %p104, %p105
    %p108 = scmp.ne.s32.totalorder %s93, %s107
    %p109 = scmp.eq.s32.totalorder %s20, 0
    %p110 = por %p108, %p109
    %s112 = sadd.s32 %s111, 1
    %p115 = scmp.eq.s32.totalorder %s14, 1
    %p116 = scmp.ne.s32.totalorder %s111, %s113
    %p117 = scmp.eq.s32.totalorder %s14, 0
    %p118 = por %p116, %p117
    %p119 = scmp.ne.s32.totalorder %s111, %s113
    %p120 = scmp.eq.s32.totalorder %s19, 1
    %p121 = por %p119, %p120
    %p122 = scmp.ne.s32.totalorder %s113, %s114
    %p123 = scmp.eq.s32.totalorder %s19, 0
    %p124 = por %p122, %p123
    %p125 = scmp.ne.s32.totalorder %s113, %s114
    %p126 = scmp.eq.s32.totalorder %s20, 1
    %p127 = por %p125, %p126
    %p129 = scmp.ne.s32.totalorder %s114, %s128
    %p130 = scmp.eq.s32.totalorder %s20, 0
    %p131 = por %p129, %p130
    %s133 = sadd.s32 %s132, 1
    %p136 = scmp.eq.s32.totalorder %s14, 1
    %p137 = scmp.ne.s32.totalorder %s132, %s134
    %p138 = scmp.eq.s32.totalorder %s14, 0
    %p139 = por %p137, %p138
    %p140 = scmp.ne.s32.totalorder %s132, %s134
    %p141 = scmp.eq.s32.totalorder %s19, 1
    %p142 = por %p140, %p141
    %p143 = scmp.ne.s32.totalorder %s134, %s135
    %p144 = scmp.eq.s32.totalorder %s19, 0
    %p145 = por %p143, %p144
    %p146 = scmp.ne.s32.totalorder %s134, %s135
    %p147 = scmp.eq.s32.totalorder %s20, 1
    %p148 = por %p146, %p147
    %p150 = scmp.ne.s32.totalorder %s135, %s149
    %p151 = scmp.eq.s32.totalorder %s20, 0
    %p152 = por %p150, %p151
    %s154 = sadd.s32 %s153, 1
    %p157 = scmp.eq.s32.totalorder %s14, 1
    %p158 = scmp.ne.s32.totalorder %s153, %s155
    %p159 = scmp.eq.s32.totalorder %s14, 0
    %p160 = por %p158, %p159
    %p161 = scmp.ne.s32.totalorder %s153, %s155
    %p162 = scmp.eq.s32.totalorder %s19, 1
    %p163 = por %p161, %p162
    %p164 = scmp.ne.s32.totalorder %s155, %s156
    %p165 = scmp.eq.s32.totalorder %s19, 0
    %p166 = por %p164, %p165
    %p167 = scmp.ne.s32.totalorder %s155, %s156
    %p168 = scmp.eq.s32.totalorder %s20, 1
    %p169 = por %p167, %p168
    %p171 = scmp.ne.s32.totalorder %s156, %s170
    %p172 = scmp.eq.s32.totalorder %s20, 0
    %p173 = por %p171, %p172
    %p174 = scmp.le.s32.totalorder 1, %s14
    %p175 = scmp.lt.s32.totalorder %s14, 3
    %p176 = pnand %p174, %p175
    %p177 = pneg %p176
    // Predicated region
    $region9: #{discriminator_forward.1} parent=5 // pred_check
      _
    $region10: #{discriminator_forward.1} parent=5 // pred_check_branch
      %179 = sbr.rel (%p176) target = $region12
    $region11: #{discriminator_forward.1} parent=5 // pred_region
      %s180 = ssub.s32 %s14, 1
      // Predicated region
      $region13: #{discriminator_forward.1} parent=11 // pred_check
        %p181 = pneg %p35
      $region14: #{discriminator_forward.1} parent=11 // pred_check_branch
        %183 = sbr.rel (%p181) target = $region16
      $region15: #{discriminator_forward.1} parent=11 // pred_region
        _
      $region16: #{discriminator_forward.1} parent=11 // pred_fallthru
        _
      // Predicated region
      $region17: #{discriminator_forward.1} parent=11 // pred_check
        %p184 = pneg %p56
      $region18: #{discriminator_forward.1} parent=11 // pred_check_branch
        %186 = sbr.rel (%p184) target = $region20
      $region19: #{discriminator_forward.1} parent=11 // pred_region
        _
      $region20: #{discriminator_forward.1} parent=11 // pred_fallthru
        _
      // Predicated region
      $region21: #{discriminator_forward.1} parent=11 // pred_check
        %p187 = pneg %p103
      $region22: #{discriminator_forward.1} parent=11 // pred_check_branch
        %189 = sbr.rel (%p187) target = $region24
      $region23: #{discriminator_forward.1} parent=11 // pred_region
        _
      $region24: #{discriminator_forward.1} parent=11 // pred_fallthru
        _
      // Predicated region
      $region25: #{discriminator_forward.1} parent=11 // pred_check
        %p190 = pneg %p124
      $region26: #{discriminator_forward.1} parent=11 // pred_check_branch
        %192 = sbr.rel (%p190) target = $region28
      $region27: #{discriminator_forward.1} parent=11 // pred_region
        _
      $region28: #{discriminator_forward.1} parent=11 // pred_fallthru
        _
      // Predicated region
      $region29: #{discriminator_forward.1} parent=11 // pred_check
        %p193 = pneg %p145
      $region30: #{discriminator_forward.1} parent=11 // pred_check_branch
        %195 = sbr.rel (%p193) target = $region32
      $region31: #{discriminator_forward.1} parent=11 // pred_region
        _
      $region32: #{discriminator_forward.1} parent=11 // pred_fallthru
        _
    $region12: #{discriminator_forward.1} parent=5 // pred_fallthru
      _
    %p196 = scmp.lt.s32.totalorder %s14, 2
    // Predicated region
    $region33: #{discriminator_forward.1} parent=5 // pred_check
      %p197 = pneg %p196
    $region34: #{discriminator_forward.1} parent=5 // pred_check_branch
      %199 = sbr.rel (%p197) target = $region36
    $region35: #{discriminator_forward.1} parent=5 // pred_region
      // Predicated region
      $region37: #{discriminator_forward.1} parent=35 // pred_check
        %p200 = pneg %p76
      $region38: #{discriminator_forward.1} parent=35 // pred_check_branch
        %202 = sbr.rel (%p200) target = $region40
      $region39: #{discriminator_forward.1} parent=35 // pred_region
        %s203 = smul.u32 8, %s14
        %p204 = scmp.lt.s32.totalorder %s203, 15
        %s205 = scalar_select %p204, %s203, 15
        %s206 = smul.addr %s205, 80
        %s207 = smul.addr %s206, 4
        %s208 = scalar_lea.vmem %s2, %s207
        %s209 = smul.u32 8, %s14
      $region40: #{discriminator_forward.1} parent=35 // pred_fallthru
        _
    $region36: #{discriminator_forward.1} parent=5 // pred_fallthru
      _
    %p210 = scmp.le.s32.totalorder 1, %s14
    %p211 = scmp.lt.s32.totalorder %s14, 3
    %p212 = pnand %p210, %p211
    %p213 = pneg %p212
    // Predicated region
    $region41: #{discriminator_forward.1} parent=5 // pred_check
      _
    $region42: #{discriminator_forward.1} parent=5 // pred_check_branch
      %215 = sbr.rel (%p212) target = $region44
    $region43: #{discriminator_forward.1} parent=5 // pred_region
      %s216 = ssub.s32 %s14, 1
      %p217 = pneg %p35
      %p218 = pneg %p32
      %p219 = pneg %p56
      %p220 = pneg %p53
      %s221 = smul.u32 8, %s19
      %p222 = scmp.lt.s32.totalorder %s221, 15
      %s223 = scalar_select %p222, %s221, 15
      %s224 = smul.addr %s223, 80
      %s225 = smul.addr %s224, 4
      %s226 = scalar_lea.vmem %s2, %s225
      %p227 = pneg %p82
      %p228 = pneg %p79
      %p229 = pneg %p103
      %p230 = pneg %p100
      %p231 = pneg %p124
      %p232 = pneg %p121
      %p233 = pneg %p145
      %p234 = pneg %p142
      %p235 = pneg %p166
      %p236 = pneg %p163
      %s237 = smul.u32 8, %s19
      %p238 = scmp.lt.s32.totalorder %s237, 15
      %s239 = scalar_select %p238, %s237, 15
      %s240 = smul.addr %s239, 80
      %s241 = smul.addr %s240, 4
      %s242 = scalar_lea.vmem %s2, %s241
      %s243 = smul.u32 8, %s19
      %p245 = scmp.eq.s32.totalorder %s19, 0
      // Predicated region
      $region45: #{discriminator_forward.1} parent=43 // pred_check
        %p246 = pneg %p245
      $region46: #{discriminator_forward.1} parent=43 // pred_check_branch
        %248 = sbr.rel (%p246) target = $region48
      $region47: #{discriminator_forward.1} parent=43 // pred_region
        %v249 = vld [vmem:[%s1] sm:$0xff]
        %v250 = vld [vmem:[%s1 + $0x8] sm:$0xff]
        %v251 = vld [vmem:[%s0] sm:$0xff]
        %v252 = vld [vmem:[%s0 + $0x8] sm:$0xff]
        %v253 = vld [vmem:[%s0 + $0x10] sm:$0xff]
        %v254 = vld [vmem:[%s0 + $0x18] sm:$0xff]
        %v255 = vld [vmem:[%s0 + $0x20] sm:$0xff]
        %v256 = vld [vmem:[%s0 + $0x28] sm:$0xff]
        %v257 = vld [vmem:[%s0 + $0x30] sm:$0xff]
        %v258 = vld [vmem:[%s0 + $0x38] sm:$0xff]
        %v259 = vld [vmem:[%s0 + $0x40] sm:$0xff]
        %v260 = vld [vmem:[%s0 + $0x48] sm:$0xff]
        %v261 = vld [vmem:[%s0 + $0x50] sm:$0xff]
        %v262 = vld [vmem:[%s0 + $0x58] sm:$0xff]
        %v263 = vld [vmem:[%s0 + $0x60] sm:$0xff]
        %v264 = vld [vmem:[%s0 + $0x68] sm:$0xff]
        %v265 = vld [vmem:[%s0 + $0x70] sm:$0xff]
        %v266 = vld [vmem:[%s0 + $0x78] sm:$0xff]
        %v267 = vld [vmem:[%s0 + $0x80] sm:$0xff]
        %v268 = vld [vmem:[%s0 + $0x88] sm:$0xff]
        %v269 = vld [vmem:[%s0 + $0x90] sm:$0xff]
        %v270 = vld [vmem:[%s0 + $0x98] sm:$0xff]
        %vm271 = vcmask 326656
        %v273 = vsel %vm271, %v249, 0
        %v276 = vsel %vm271, %v250, 0
        %278 = vmatprep.subr.mxu0 %v252
        %279 = vmatpush1.msra.mxu0 %v251
        %280 = vmatprep.subr.mxu0 %v256
        %281 = vmatpush1.msra.mxu0 %v255
        %282 = vmatprep.subr.mxu0 %v260
        %283 = vmatpush1.msra.mxu0 %v259
        %284 = vmatprep.subr.mxu0 %v264
        %285 = vmatpush1.msra.mxu0 %v263
        %286 = vmatprep.subr.mxu0 %v268
        %287 = vmatpush1.msra.mxu0 %v267
        %288 = vmatprep.subr.mxu0 0.0
        %289 = vmatpush1.msra.mxu0 0.0
        %290 = vmatprep.subr.mxu0 0.0
        %291 = vmatpush1.msra.mxu0 0.0
        %292 = vmatprep.subr.mxu0 0.0
        %293 = vmatpush1.msra.mxu0 0.0
        %294 = vmatprep.subr.mxu0 0.0
        %295 = vmatpush1.msra.mxu0 0.0
        %296 = vmatprep.subr.mxu0 0.0
        %297 = vmatpush1.msra.mxu0 0.0
        %298 = vmatprep.subr.mxu0 0.0
        %299 = vmatpush1.msra.mxu0 0.0
        %300 = vmatprep.subr.mxu0 0.0
        %301 = vmatpush1.msra.mxu0 0.0
        %302 = vmatprep.subr.mxu0 0.0
        %303 = vmatpush1.msra.mxu0 0.0
        %304 = vmatprep.subr.mxu0 0.0
        %305 = vmatpush1.msra.mxu0 0.0
        %306 = vmatprep.subr.mxu0 0.0
        %307 = vmatpush1.msra.mxu0 0.0
        %308 = vmatprep.subr.mxu0 0.0
        %309 = vmatpush1.msra.mxu0 0.0
        %310 = vmatprep.subr.mxu0 0.0
        %311 = vmatpush1.msra.mxu0 0.0
        %312 = vmatprep.subr.mxu0 0.0
        %313 = vmatpush1.msra.mxu0 0.0
        %314 = vmatprep.subr.mxu0 0.0
        %315 = vmatpush1.msra.mxu0 0.0
        %316 = vmatprep.subr.mxu0 0.0
        %317 = vmatpush1.msra.mxu0 0.0
        %318 = vmatprep.subr.mxu0 0.0
        %319 = vmatpush1.msra.mxu0 0.0
        %320 = vmatprep.subr.mxu0 0.0
        %321 = vmatpush1.msra.mxu0 0.0
        %322 = vmatprep.subr.mxu0 0.0
        %323 = vmatpush1.msra.mxu0 0.0
        %324 = vmatprep.subr.mxu0 0.0
        %325 = vmatpush1.msra.mxu0 0.0
        %326 = vmatprep.subr.mxu0 0.0
        %327 = vmatpush1.msra.mxu0 0.0
        %328 = vmatprep.subr.mxu0 0.0
        %329 = vmatpush1.msra.mxu0 0.0
        %330 = vmatprep.subr.mxu0 0.0
        %331 = vmatpush1.msra.mxu0 0.0
        %332 = vmatprep.subr.mxu0 0.0
        %333 = vmatpush1.msra.mxu0 0.0
        %334 = vmatprep.subr.mxu0 0.0
        %335 = vmatpush1.msra.mxu0 0.0
        %336 = vmatprep.subr.mxu0 0.0
        %337 = vmatpush1.msra.mxu0 0.0
        %338 = vmatprep.subr.mxu0 0.0
        %339 = vmatpush1.msra.mxu0 0.0
        %340 = vmatprep.subr.mxu0 0.0
        %341 = vmatpush1.msra.mxu0 0.0
        %342 = vmatprep.mubr.f32.mxu0 0.0
        %343 = vmatmul.mubr.f32.gmra.mrb[0].mxu0 %v273
        %v344 = vpop.f32.mrb[0].mxu0
        %v345 = vadd.f32 0.0, %v344
        %v346 = vpop.f32.mrb[0].mxu0
        %v347 = vadd.f32 0.0, %v346
        %348 = vmatprep.mubr.f32.mxu0 0.0
        %349 = vmatmul.mubr.f32.gmra.mrb[0].mxu0 %v276
        %v350 = vpop.f32.mrb[0].mxu0
        %v351 = vadd.f32 0.0, %v350
        %v352 = vpop.f32.mrb[0].mxu0
        %v353 = vadd.f32 0.0, %v352
        %354 = vdwg.mxu0
        %355 = vmatprep.subr.mxu0 %v254
        %356 = vmatpush1.msra.mxu0 %v253
        %357 = vmatprep.subr.mxu0 %v258
        %358 = vmatpush1.msra.mxu0 %v257
        %359 = vmatprep.subr.mxu0 %v262
        %360 = vmatpush1.msra.mxu0 %v261
        %361 = vmatprep.subr.mxu0 %v266
        %362 = vmatpush1.msra.mxu0 %v265
        %363 = vmatprep.subr.mxu0 %v270
        %364 = vmatpush1.msra.mxu0 %v269
        %365 = vmatprep.subr.mxu0 0.0
        %366 = vmatpush1.msra.mxu0 0.0
        %367 = vmatprep.subr.mxu0 0.0
        %368 = vmatpush1.msra.mxu0 0.0
        %369 = vmatprep.subr.mxu0 0.0
        %370 = vmatpush1.msra.mxu0 0.0
        %371 = vmatprep.subr.mxu0 0.0
        %372 = vmatpush1.msra.mxu0 0.0
        %373 = vmatprep.subr.mxu0 0.0
        %374 = vmatpush1.msra.mxu0 0.0
        %375 = vmatprep.subr.mxu0 0.0
        %376 = vmatpush1.msra.mxu0 0.0
        %377 = vmatprep.subr.mxu0 0.0
        %378 = vmatpush1.msra.mxu0 0.0
        %379 = vmatprep.subr.mxu0 0.0
        %380 = vmatpush1.msra.mxu0 0.0
        %381 = vmatprep.subr.mxu0 0.0
        %382 = vmatpush1.msra.mxu0 0.0
        %383 = vmatprep.subr.mxu0 0.0
        %384 = vmatpush1.msra.mxu0 0.0
        %385 = vmatprep.subr.mxu0 0.0
        %386 = vmatpush1.msra.mxu0 0.0
        %387 = vmatprep.subr.mxu0 0.0
        %388 = vmatpush1.msra.mxu0 0.0
        %389 = vmatprep.subr.mxu0 0.0
        %390 = vmatpush1.msra.mxu0 0.0
        %391 = vmatprep.subr.mxu0 0.0
        %392 = vmatpush1.msra.mxu0 0.0
        %393 = vmatprep.subr.mxu0 0.0
        %394 = vmatpush1.msra.mxu0 0.0
        %395 = vmatprep.subr.mxu0 0.0
        %396 = vmatpush1.msra.mxu0 0.0
        %397 = vmatprep.subr.mxu0 0.0
        %398 = vmatpush1.msra.mxu0 0.0
        %399 = vmatprep.subr.mxu0 0.0
        %400 = vmatpush1.msra.mxu0 0.0
        %401 = vmatprep.subr.mxu0 0.0
        %402 = vmatpush1.msra.mxu0 0.0
        %403 = vmatprep.subr.mxu0 0.0
        %404 = vmatpush1.msra.mxu0 0.0
        %405 = vmatprep.subr.mxu0 0.0
        %406 = vmatpush1.msra.mxu0 0.0
        %407 = vmatprep.subr.mxu0 0.0
        %408 = vmatpush1.msra.mxu0 0.0
        %409 = vmatprep.subr.mxu0 0.0
        %410 = vmatpush1.msra.mxu0 0.0
        %411 = vmatprep.subr.mxu0 0.0
        %412 = vmatpush1.msra.mxu0 0.0
        %413 = vmatprep.subr.mxu0 0.0
        %414 = vmatpush1.msra.mxu0 0.0
        %415 = vmatprep.subr.mxu0 0.0
        %416 = vmatpush1.msra.mxu0 0.0
        %417 = vmatprep.subr.mxu0 0.0
        %418 = vmatpush1.msra.mxu0 0.0
        %419 = vmatprep.mubr.f32.mxu0 0.0
        %420 = vmatmul.mubr.f32.gmra.mrb[0].mxu0 %v273
        %v421 = vpop.f32.mrb[0].mxu0
        %v422 = vadd.f32 0.0, %v421
        %v423 = vpop.f32.mrb[0].mxu0
        %v424 = vadd.f32 0.0, %v423
        %425 = vmatprep.mubr.f32.mxu0 0.0
        %426 = vmatmul.mubr.f32.gmra.mrb[0].mxu0 %v276
        %v427 = vpop.f32.mrb[0].mxu0
        %v428 = vadd.f32 0.0, %v427
        %v429 = vpop.f32.mrb[0].mxu0
        %v430 = vadd.f32 0.0, %v429
        %431 = vdwg.mxu0
        %v432 = vadd.f32 %v345, %v347
        %v433 = vadd.f32 %v432, %v422
        %v434 = vadd.f32 %v433, %v424
        %435 = vadd.xlane.f32.xlu0 %v434
        %v436 = vpop.xlane.xlu0 %435
        %v437 = vadd.f32 %v351, %v353
        %v438 = vadd.f32 %v437, %v428
        %v439 = vadd.f32 %v438, %v430
        %440 = vadd.xlane.f32.xlu0 %v439
        %v441 = vpop.xlane.xlu0 %440
        %v442 = vmul.f32 %v345, %v345
        %v443 = vmul.f32 %v347, %v347
        %v444 = vmul.f32 %v422, %v422
        %v445 = vmul.f32 %v424, %v424
        %v446 = vmul.f32 %v351, %v351
        %v447 = vmul.f32 %v353, %v353
        %v448 = vmul.f32 %v428, %v428
        %v449 = vmul.f32 %v430, %v430
        %v450 = vadd.f32 %v442, %v443
        %v451 = vadd.f32 %v450, %v444
        %v452 = vadd.f32 %v451, %v445
        %453 = vadd.xlane.f32.xlu0 %v452
        %v454 = vpop.xlane.xlu0 %453
        %v455 = vadd.f32 %v446, %v447
        %v456 = vadd.f32 %v455, %v448
        %v457 = vadd.f32 %v456, %v449
        %458 = vadd.xlane.f32.xlu0 %v457
        %v459 = vpop.xlane.xlu0 %458
        %v460 = vmul.f32 %v436, 0.0020325202
        %v461 = vmul.f32 %v441, 0.0020325202
        %v462 = vmul.f32 %v454, 0.0020325202
        %v463 = vmul.f32 %v459, 0.0020325202
        %v464 = vmul.f32 %v460, %v460
        %v465 = vmul.f32 %v461, %v461
        %v466 = vsub.f32 %v462, %v464
        %v467 = vsub.f32 %v463, %v465
        %v468 = vmax.f32 %v466, 0.0
        %v469 = vmax.f32 %v467, 0.0
        %v470 = vsub.f32 %v345, %v460
        %v471 = vsub.f32 %v347, %v460
        %v472 = vsub.f32 %v422, %v460
        %v473 = vsub.f32 %v424, %v460
        %v474 = vsub.f32 %v351, %v461
        %v475 = vsub.f32 %v353, %v461
        %v476 = vsub.f32 %v428, %v461
        %v477 = vsub.f32 %v430, %v461
        %v478 = vadd.f32 %v468, 1e-05
        %v479 = vadd.f32 %v469, 1e-05
        %v480 = vrsqrt.pop %v478
        %v481 = vrsqrt.pop %v479
        %v482 = vmul.f32 %v470, %v480
        %v483 = vmul.f32 %v471, %v480
        %v484 = vmul.f32 %v472, %v480
        %v485 = vmul.f32 %v473, %v480
        %v486 = vmul.f32 %v474, %v481
        %v487 = vmul.f32 %v475, %v481
        %v488 = vmul.f32 %v476, %v481
        %v489 = vmul.f32 %v477, %v481
        %vm490 = vcmp.ge.f32.partialorder %v482, 0.0
        %vm491 = vcmp.ge.f32.partialorder %v483, 0.0
        %vm492 = vcmp.ge.f32.partialorder %v484, 0.0
        %vm493 = vcmp.ge.f32.partialorder %v485, 0.0
        %vm494 = vcmp.ge.f32.partialorder %v486, 0.0
        %vm495 = vcmp.ge.f32.partialorder %v487, 0.0
        %vm496 = vcmp.ge.f32.partialorder %v488, 0.0
        %vm497 = vcmp.ge.f32.partialorder %v489, 0.0
        %v498 = vmul.f32 %v482, 0.2
        %v499 = vmul.f32 %v483, 0.2
        %v500 = vmul.f32 %v484, 0.2
        %v501 = vmul.f32 %v485, 0.2
        %v502 = vmul.f32 %v486, 0.2
        %v503 = vmul.f32 %v487, 0.2
        %v504 = vmul.f32 %v488, 0.2
        %v505 = vmul.f32 %v489, 0.2
        %v506 = vsel %vm490, %v482, %v498
        %v507 = vsel %vm491, %v483, %v499
        %v508 = vsel %vm492, %v484, %v500
        %v509 = vsel %vm493, %v485, %v501
        %v510 = vsel %vm494, %v486, %v502
        %v511 = vsel %vm495, %v487, %v503
        %v512 = vsel %vm496, %v488, %v504
        %v513 = vsel %vm497, %v489, %v505
        %v514 = vmax.f32 %v506, %v508
        %v515 = vmax.f32 %v507, %v509
        %v516 = vmax.f32 %v510, %v512
        %v517 = vmax.f32 %v511, %v513
        %v520 = vcombine.high %v514, %v514
        %v522 = vunpack.c.l.s4 1966171168
        %v523 = vunpack.c.0.s8 %v522
        %v524 = vlaneseq
        %v525 = vshrl.u32 %v524, 7
        %v526 = vsub.s32 %v523, %v525
        %v527 = vrot.slane %v514, %v526
        %v529 = vunpack.c.l.s4 1966171168
        %v530 = vunpack.c.0.s8 %v529
        %v531 = vlaneseq
        %v532 = vshrl.u32 %v531, 7
        %v533 = vsub.s32 %v530, %v532
        %v534 = vrot.slane %v520, %v533
        %v535 = vcombine.high %v527, %v527
        %v536 = vcombine.high %v534, %v534
        %v538 = vunpack.c.l.s4 1966171168
        %v539 = vunpack.c.0.s8 %v538
        %v540 = vlaneseq
        %v541 = vshrl.u32 %v540, 7
        %v542 = vsub.s32 %v539, %v541
        %v543 = vrot.slane %v527, %v542
        %v545 = vunpack.c.l.s4 1966171168
        %v546 = vunpack.c.0.s8 %v545
        %v547 = vlaneseq
        %v548 = vshrl.u32 %v547, 7
        %v549 = vsub.s32 %v546, %v548
        %v550 = vrot.slane %v534, %v549
        %v552 = vunpack.c.l.s4 1966171168
        %v553 = vunpack.c.0.s8 %v552
        %v554 = vlaneseq
        %v555 = vshrl.u32 %v554, 7
        %v556 = vsub.s32 %v553, %v555
        %v557 = vrot.slane %v535, %v556
        %v559 = vunpack.c.l.s4 1966171168
        %v560 = vunpack.c.0.s8 %v559
        %v561 = vlaneseq
        %v562 = vshrl.u32 %v561, 7
        %v563 = vsub.s32 %v560, %v562
        %v564 = vrot.slane %v536, %v563
        %v565 = vcombine.high %v543, %v543
        %v566 = vcombine.high %v550, %v550
        %v567 = vcombine.high %v557, %v557
        %v568 = vcombine.high %v564, %v564
        %v569 = vcombine.high %v516, %v516
        %v571 = vunpack.c.l.s4 1966171168
        %v572 = vunpack.c.0.s8 %v571
        %v573 = vlaneseq
        %v574 = vshrl.u32 %v573, 7
        %v575 = vsub.s32 %v572, %v574
        %v576 = vrot.slane %v516, %v575
        %v578 = vunpack.c.l.s4 1966171168
        %v579 = vunpack.c.0.s8 %v578
        %v580 = vlaneseq
        %v581 = vshrl.u32 %v580, 7
        %v582 = vsub.s32 %v579, %v581
        %v583 = vrot.slane %v569, %v582
        %v584 = vcombine.high %v576, %v576
        %v585 = vcombine.high %v583, %v583
        %v587 = vunpack.c.l.s4 1966171168
        %v588 = vunpack.c.0.s8 %v587
        %v589 = vlaneseq
        %v590 = vshrl.u32 %v589, 7
        %v591 = vsub.s32 %v588, %v590
        %v592 = vrot.slane %v576, %v591
        %v594 = vunpack.c.l.s4 1966171168
        %v595 = vunpack.c.0.s8 %v594
        %v596 = vlaneseq
        %v597 = vshrl.u32 %v596, 7
        %v598 = vsub.s32 %v595, %v597
        %v599 = vrot.slane %v583, %v598
        %v601 = vunpack.c.l.s4 1966171168
        %v602 = vunpack.c.0.s8 %v601
        %v603 = vlaneseq
        %v604 = vshrl.u32 %v603, 7
        %v605 = vsub.s32 %v602, %v604
        %v606 = vrot.slane %v584, %v605
        %v608 = vunpack.c.l.s4 1966171168
        %v609 = vunpack.c.0.s8 %v608
        %v610 = vlaneseq
        %v611 = vshrl.u32 %v610, 7
        %v612 = vsub.s32 %v609, %v611
        %v613 = vrot.slane %v585, %v612
        %v614 = vcombine.high %v592, %v592
        %v615 = vcombine.high %v599, %v599
        %v616 = vcombine.high %v606, %v606
        %v617 = vcombine.high %v613, %v613
        %634 = vst [vmem:[#allocation2] sm:$0x1] %v543
        %635 = vst [vmem:[#allocation2 + $0x2] sm:$0x1] %v557
        %636 = vst [vmem:[#allocation2 + $0x4] sm:$0x1] %v565
        %637 = vst [vmem:[#allocation2 + $0x6] sm:$0x1] %v567
        %638 = vst [vmem:[#allocation2 + $0x8] sm:$0x1] %v550
        %639 = vst [vmem:[#allocation2 + $0xa] sm:$0x1] %v564
        %640 = vst [vmem:[#allocation2 + $0xc] sm:$0x1] %v566
        %641 = vst [vmem:[#allocation2 + $0xe] sm:$0x1] %v568
        %642 = vst [vmem:[#allocation2 + $0x10] sm:$0x1] %v592
        %643 = vst [vmem:[#allocation2 + $0x12] sm:$0x1] %v606
        %644 = vst [vmem:[#allocation2 + $0x14] sm:$0x1] %v614
        %645 = vst [vmem:[#allocation2 + $0x16] sm:$0x1] %v616
        %646 = vst [vmem:[#allocation2 + $0x18] sm:$0x1] %v599
        %647 = vst [vmem:[#allocation2 + $0x1a] sm:$0x1] %v613
        %648 = vst [vmem:[#allocation2 + $0x1c] sm:$0x1] %v615
        %649 = vst [vmem:[#allocation2 + $0x1e] sm:$0x1] %v617
        %v652 = vcombine.high %v515, %v515
        %v654 = vunpack.c.l.s4 1966171168
        %v655 = vunpack.c.0.s8 %v654
        %v656 = vlaneseq
        %v657 = vshrl.u32 %v656, 7
        %v658 = vsub.s32 %v655, %v657
        %v659 = vrot.slane %v515, %v658
        %v661 = vunpack.c.l.s4 1966171168
        %v662 = vunpack.c.0.s8 %v661
        %v663 = vlaneseq
        %v664 = vshrl.u32 %v663, 7
        %v665 = vsub.s32 %v662, %v664
        %v666 = vrot.slane %v652, %v665
        %v667 = vcombine.high %v659, %v659
        %v668 = vcombine.high %v666, %v666
        %v670 = vunpack.c.l.s4 1966171168
        %v671 = vunpack.c.0.s8 %v670
        %v672 = vlaneseq
        %v673 = vshrl.u32 %v672, 7
        %v674 = vsub.s32 %v671, %v673
        %v675 = vrot.slane %v659, %v674
        %v677 = vunpack.c.l.s4 1966171168
        %v678 = vunpack.c.0.s8 %v677
        %v679 = vlaneseq
        %v680 = vshrl.u32 %v679, 7
        %v681 = vsub.s32 %v678, %v680
        %v682 = vrot.slane %v666, %v681
        %v684 = vunpack.c.l.s4 1966171168
        %v685 = vunpack.c.0.s8 %v684
        %v686 = vlaneseq
        %v687 = vshrl.u32 %v686, 7
        %v688 = vsub.s32 %v685, %v687
        %v689 = vrot.slane %v667, %v688
        %v691 = vunpack.c.l.s4 1966171168
        %v692 = vunpack.c.0.s8 %v691
        %v693 = vlaneseq
        %v694 = vshrl.u32 %v693, 7
        %v695 = vsub.s32 %v692, %v694
        %v696 = vrot.slane %v668, %v695
        %v697 = vcombine.high %v675, %v675
        %v698 = vcombine.high %v682, %v682
        %v699 = vcombine.high %v689, %v689
        %v700 = vcombine.high %v696, %v696
        %v701 = vcombine.high %v517, %v517
        %v703 = vunpack.c.l.s4 1966171168
        %v704 = vunpack.c.0.s8 %v703
        %v705 = vlaneseq
        %v706 = vshrl.u32 %v705, 7
        %v707 = vsub.s32 %v704, %v706
        %v708 = vrot.slane %v517, %v707
        %v710 = vunpack.c.l.s4 1966171168
        %v711 = vunpack.c.0.s8 %v710
        %v712 = vlaneseq
        %v713 = vshrl.u32 %v712, 7
        %v714 = vsub.s32 %v711, %v713
        %v715 = vrot.slane %v701, %v714
        %v716 = vcombine.high %v708, %v708
        %v717 = vcombine.high %v715, %v715
        %v719 = vunpack.c.l.s4 1966171168
        %v720 = vunpack.c.0.s8 %v719
        %v721 = vlaneseq
        %v722 = vshrl.u32 %v721, 7
        %v723 = vsub.s32 %v720, %v722
        %v724 = vrot.slane %v708, %v723
        %v726 = vunpack.c.l.s4 1966171168
        %v727 = vunpack.c.0.s8 %v726
        %v728 = vlaneseq
        %v729 = vshrl.u32 %v728, 7
        %v730 = vsub.s32 %v727, %v729
        %v731 = vrot.slane %v715, %v730
        %v733 = vunpack.c.l.s4 1966171168
        %v734 = vunpack.c.0.s8 %v733
        %v735 = vlaneseq
        %v736 = vshrl.u32 %v735, 7
        %v737 = vsub.s32 %v734, %v736
        %v738 = vrot.slane %v716, %v737
        %v740 = vunpack.c.l.s4 1966171168
        %v741 = vunpack.c.0.s8 %v740
        %v742 = vlaneseq
        %v743 = vshrl.u32 %v742, 7
        %v744 = vsub.s32 %v741, %v743
        %v745 = vrot.slane %v717, %v744
        %v746 = vcombine.high %v724, %v724
        %v747 = vcombine.high %v731, %v731
        %v748 = vcombine.high %v738, %v738
        %v749 = vcombine.high %v745, %v745
        %766 = vst [vmem:[#allocation2 + $0x1] sm:$0x1] %v675
        %767 = vst [vmem:[#allocation2 + $0x3] sm:$0x1] %v689
        %768 = vst [vmem:[#allocation2 + $0x5] sm:$0x1] %v697
        %769 = vst [vmem:[#allocation2 + $0x7] sm:$0x1] %v699
        %770 = vst [vmem:[#allocation2 + $0x9] sm:$0x1] %v682
        %771 = vst [vmem:[#allocation2 + $0xb] sm:$0x1] %v696
        %772 = vst [vmem:[#allocation2 + $0xd] sm:$0x1] %v698
        %773 = vst [vmem:[#allocation2 + $0xf] sm:$0x1] %v700
        %774 = vst [vmem:[#allocation2 + $0x11] sm:$0x1] %v724
        %775 = vst [vmem:[#allocation2 + $0x13] sm:$0x1] %v738
        %776 = vst [vmem:[#allocation2 + $0x15] sm:$0x1] %v746
        %777 = vst [vmem:[#allocation2 + $0x17] sm:$0x1] %v748
        %778 = vst [vmem:[#allocation2 + $0x19] sm:$0x1] %v731
        %779 = vst [vmem:[#allocation2 + $0x1b] sm:$0x1] %v745
        %780 = vst [vmem:[#allocation2 + $0x1d] sm:$0x1] %v747
        %781 = vst [vmem:[#allocation2 + $0x1f] sm:$0x1] %v749
        %782 = vst [vmem:[#allocation3] sm:$0xff] 0.0
        %vm783 = vcmask 713728
        %784 = vst.msk [vmem:[#allocation3 + $0x8] sm:$0x3] %vm783, 0.0
      $region48: #{discriminator_forward.1} parent=43 // pred_fallthru
        _
      %s785 = smul.u32 %s19, 8
      %s786 = smul.u32 %s785, 2
      %s787 = scalar_lea.vmem [#allocation2], %s786
      %v788 = vld [vmem:[%s787] sm:$0x3]
      %v789 = vpack.c.bf16 %v788, %v788
      %v790 = vld [vmem:[#allocation3] sm:$0xff]
      %v791 = vld [vmem:[#allocation3 + $0x8] sm:$0x3]
      %v792 = vld [vmem:[%s242] sm:$0xff]
      %v793 = vld [vmem:[%s242 + $0x8] sm:$0xff]
      %v794 = vld [vmem:[%s242 + $0x10] sm:$0xf]
      %v795 = vld [vmem:[%s242 + $0x14] sm:$0xff]
      %v796 = vld [vmem:[%s242 + $0x1c] sm:$0xff]
      %v797 = vld [vmem:[%s242 + $0x24] sm:$0xf]
      %v798 = vld [vmem:[%s242 + $0x28] sm:$0xff]
      %v799 = vld [vmem:[%s242 + $0x30] sm:$0xff]
      %v800 = vld [vmem:[%s242 + $0x38] sm:$0xf]
      %v801 = vld [vmem:[%s242 + $0x3c] sm:$0xff]
      %v802 = vld [vmem:[%s242 + $0x44] sm:$0xff]
      %v803 = vld [vmem:[%s242 + $0x4c] sm:$0xf]
      %v804 = vld [vmem:[%s242 + $0x50] sm:$0xff]
      %v805 = vld [vmem:[%s242 + $0x58] sm:$0xff]
      %v806 = vld [vmem:[%s242 + $0x60] sm:$0xf]
      %v807 = vld [vmem:[%s242 + $0x64] sm:$0xff]
      %v808 = vld [vmem:[%s242 + $0x6c] sm:$0xff]
      %v809 = vld [vmem:[%s242 + $0x74] sm:$0xf]
      %v810 = vld [vmem:[%s242 + $0x78] sm:$0xff]
      %v811 = vld [vmem:[%s242 + $0x80] sm:$0xff]
      %v812 = vld [vmem:[%s242 + $0x88] sm:$0xf]
      %v813 = vld [vmem:[%s242 + $0x8c] sm:$0xff]
      %v814 = vld [vmem:[%s242 + $0x94] sm:$0xff]
      %v815 = vld [vmem:[%s242 + $0x9c] sm:$0xf]
      %v816 = vld [vmem:[%s242 + $0xa0] sm:$0xff]
      %v817 = vld [vmem:[%s242 + $0xa8] sm:$0xff]
      %v818 = vld [vmem:[%s242 + $0xb0] sm:$0xf]
      %v819 = vld [vmem:[%s242 + $0xb4] sm:$0xff]
      %v820 = vld [vmem:[%s242 + $0xbc] sm:$0xff]
      %v821 = vld [vmem:[%s242 + $0xc4] sm:$0xf]
      %v822 = vld [vmem:[%s242 + $0xc8] sm:$0xff]
      %v823 = vld [vmem:[%s242 + $0xd0] sm:$0xff]
      %v824 = vld [vmem:[%s242 + $0xd8] sm:$0xf]
      %v825 = vld [vmem:[%s242 + $0xdc] sm:$0xff]
      %v826 = vld [vmem:[%s242 + $0xe4] sm:$0xff]
      %v827 = vld [vmem:[%s242 + $0xec] sm:$0xf]
      %v828 = vld [vmem:[%s242 + $0xf0] sm:$0xff]
      %v829 = vld [vmem:[%s242 + $0xf8] sm:$0xff]
      %v830 = vld [vmem:[%s242 + $0x100] sm:$0xf]
      %v831 = vld [vmem:[%s242 + $0x104] sm:$0xff]
      %v832 = vld [vmem:[%s242 + $0x10c] sm:$0xff]
      %v833 = vld [vmem:[%s242 + $0x114] sm:$0xf]
      %v834 = vld [vmem:[%s242 + $0x118] sm:$0xff]
      %v835 = vld [vmem:[%s242 + $0x120] sm:$0xff]
      %v836 = vld [vmem:[%s242 + $0x128] sm:$0xf]
      %v837 = vld [vmem:[%s242 + $0x12c] sm:$0xff]
      %v838 = vld [vmem:[%s242 + $0x134] sm:$0xff]
      %v839 = vld [vmem:[%s242 + $0x13c] sm:$0xf]
      %v888 = vunpack.c.l.b16 %v792
      %v889 = vunpack.c.h.b16 %v792
      %v890 = vunpack.c.l.b16 %v793
      %v891 = vunpack.c.h.b16 %v793
      %v892 = vunpack.c.l.b16 %v794
      %v893 = vunpack.c.l.b16 %v795
      %v894 = vunpack.c.h.b16 %v795
      %v895 = vunpack.c.l.b16 %v796
      %v896 = vunpack.c.h.b16 %v796
      %v897 = vunpack.c.l.b16 %v797
      %v898 = vunpack.c.l.b16 %v798
      %v899 = vunpack.c.h.b16 %v798
      %v900 = vunpack.c.l.b16 %v799
      %v901 = vunpack.c.h.b16 %v799
      %v902 = vunpack.c.l.b16 %v800
      %v903 = vunpack.c.l.b16 %v801
      %v904 = vunpack.c.h.b16 %v801
      %v905 = vunpack.c.l.b16 %v802
      %v906 = vunpack.c.h.b16 %v802
      %v907 = vunpack.c.l.b16 %v803
      %v908 = vunpack.c.l.b16 %v804
      %v909 = vunpack.c.h.b16 %v804
      %v910 = vunpack.c.l.b16 %v805
      %v911 = vunpack.c.h.b16 %v805
      %v912 = vunpack.c.l.b16 %v806
      %v913 = vunpack.c.l.b16 %v807
      %v914 = vunpack.c.h.b16 %v807
      %v915 = vunpack.c.l.b16 %v808
      %v916 = vunpack.c.h.b16 %v808
      %v917 = vunpack.c.l.b16 %v809
      %v918 = vunpack.c.l.b16 %v810
      %v919 = vunpack.c.h.b16 %v810
      %v920 = vunpack.c.l.b16 %v811
      %v921 = vunpack.c.h.b16 %v811
      %v922 = vunpack.c.l.b16 %v812
      %v923 = vunpack.c.l.b16 %v813
      %v924 = vunpack.c.h.b16 %v813
      %v925 = vunpack.c.l.b16 %v814
      %v926 = vunpack.c.h.b16 %v814
      %v927 = vunpack.c.l.b16 %v815
      %v928 = vunpack.c.l.b16 %v816
      %v929 = vunpack.c.h.b16 %v816
      %v930 = vunpack.c.l.b16 %v817
      %v931 = vunpack.c.h.b16 %v817
      %v932 = vunpack.c.l.b16 %v818
      %v933 = vunpack.c.l.b16 %v819
      %v934 = vunpack.c.h.b16 %v819
      %v935 = vunpack.c.l.b16 %v820
      %v936 = vunpack.c.h.b16 %v820
      %v937 = vunpack.c.l.b16 %v821
      %v938 = vunpack.c.l.b16 %v822
      %v939 = vunpack.c.h.b16 %v822
      %v940 = vunpack.c.l.b16 %v823
      %v941 = vunpack.c.h.b16 %v823
      %v942 = vunpack.c.l.b16 %v824
      %v943 = vunpack.c.l.b16 %v825
      %v944 = vunpack.c.h.b16 %v825
      %v945 = vunpack.c.l.b16 %v826
      %v946 = vunpack.c.h.b16 %v826
      %v947 = vunpack.c.l.b16 %v827
      %v948 = vunpack.c.l.b16 %v828
      %v949 = vunpack.c.h.b16 %v828
      %v950 = vunpack.c.l.b16 %v829
      %v951 = vunpack.c.h.b16 %v829
      %v952 = vunpack.c.l.b16 %v830
      %v953 = vunpack.c.l.b16 %v831
      %v954 = vunpack.c.h.b16 %v831
      %v955 = vunpack.c.l.b16 %v832
      %v956 = vunpack.c.h.b16 %v832
      %v957 = vunpack.c.l.b16 %v833
      %v958 = vunpack.c.l.b16 %v834
      %v959 = vunpack.c.h.b16 %v834
      %v960 = vunpack.c.l.b16 %v835
      %v961 = vunpack.c.h.b16 %v835
      %v962 = vunpack.c.l.b16 %v836
      %v963 = vunpack.c.l.b16 %v837
      %v964 = vunpack.c.h.b16 %v837
      %v965 = vunpack.c.l.b16 %v838
      %v966 = vunpack.c.h.b16 %v838
      %v967 = vunpack.c.l.b16 %v839
      %v968 = vpack.c.b16 %v893, %v888
      %v969 = vpack.c.b16 %v894, %v889
      %v970 = vpack.c.b16 %v895, %v890
      %v971 = vpack.c.b16 %v896, %v891
      %v972 = vpack.c.b16 %v897, %v892
      %v973 = vpack.c.b16 %v903, %v898
      %v974 = vpack.c.b16 %v904, %v899
      %v975 = vpack.c.b16 %v905, %v900
      %v976 = vpack.c.b16 %v906, %v901
      %v977 = vpack.c.b16 %v907, %v902
      %v978 = vpack.c.b16 %v913, %v908
      %v979 = vpack.c.b16 %v914, %v909
      %v980 = vpack.c.b16 %v915, %v910
      %v981 = vpack.c.b16 %v916, %v911
      %v982 = vpack.c.b16 %v917, %v912
      %v983 = vpack.c.b16 %v923, %v918
      %v984 = vpack.c.b16 %v924, %v919
      %v985 = vpack.c.b16 %v925, %v920
      %v986 = vpack.c.b16 %v926, %v921
      %v987 = vpack.c.b16 %v927, %v922
      %v988 = vpack.c.b16 %v933, %v928
      %v989 = vpack.c.b16 %v934, %v929
      %v990 = vpack.c.b16 %v935, %v930
      %v991 = vpack.c.b16 %v936, %v931
      %v992 = vpack.c.b16 %v937, %v932
      %v993 = vpack.c.b16 %v943, %v938
      %v994 = vpack.c.b16 %v944, %v939
      %v995 = vpack.c.b16 %v945, %v940
      %v996 = vpack.c.b16 %v946, %v941
      %v997 = vpack.c.b16 %v947, %v942
      %v998 = vpack.c.b16 %v953, %v948
      %v999 = vpack.c.b16 %v954, %v949
      %v1000 = vpack.c.b16 %v955, %v950
      %v1001 = vpack.c.b16 %v956, %v951
      %v1002 = vpack.c.b16 %v957, %v952
      %v1003 = vpack.c.b16 %v963, %v958
      %v1004 = vpack.c.b16 %v964, %v959
      %v1005 = vpack.c.b16 %v965, %v960
      %v1006 = vpack.c.b16 %v966, %v961
      %v1007 = vpack.c.b16 %v967, %v962
      %1048 = vmatprep.subr.bf16.mxu0 %v969
      %1049 = vmatpush1.bf16.msra.mxu0 %v968
      %1050 = vmatprep.subr.bf16.mxu0 %v974
      %1051 = vmatpush1.bf16.msra.mxu0 %v973
      %1052 = vmatprep.subr.bf16.mxu0 %v979
      %1053 = vmatpush1.bf16.msra.mxu0 %v978
      %1054 = vmatprep.subr.bf16.mxu0 %v984
      %1055 = vmatpush1.bf16.msra.mxu0 %v983
      %1056 = vmatprep.subr.bf16.mxu0 %v989
      %1057 = vmatpush1.bf16.msra.mxu0 %v988
      %1058 = vmatprep.subr.bf16.mxu0 %v994
      %1059 = vmatpush1.bf16.msra.mxu0 %v993
      %1060 = vmatprep.subr.bf16.mxu0 %v999
      %1061 = vmatpush1.bf16.msra.mxu0 %v998
      %1062 = vmatprep.subr.bf16.mxu0 %v1004
      %1063 = vmatpush1.bf16.msra.mxu0 %v1003
      %1064 = vmatprep.subr.bf16.mxu0 0
      %1065 = vmatpush1.bf16.msra.mxu0 0
      %1066 = vmatprep.subr.bf16.mxu0 0
      %1067 = vmatpush1.bf16.msra.mxu0 0
      %1068 = vmatprep.subr.bf16.mxu0 0
      %1069 = vmatpush1.bf16.msra.mxu0 0
      %1070 = vmatprep.subr.bf16.mxu0 0
      %1071 = vmatpush1.bf16.msra.mxu0 0
      %1072 = vmatprep.subr.bf16.mxu0 0
      %1073 = vmatpush1.bf16.msra.mxu0 0
      %1074 = vmatprep.subr.bf16.mxu0 0
      %1075 = vmatpush1.bf16.msra.mxu0 0
      %1076 = vmatprep.subr.bf16.mxu0 0
      %1077 = vmatpush1.bf16.msra.mxu0 0
      %1078 = vmatprep.subr.bf16.mxu0 0
      %1079 = vmatpush1.bf16.msra.mxu0 0
      %1080 = vmatprep.mubr.bf16.mxu0 0
      %1081 = vmatmul.mubr.bf16.gmra.mrb[0].mxu0 %v789
      %v1082 = vpop.f32.mrb[0].mxu0
      %v1083 = vadd.f32 0.0, %v1082
      %v1084 = vpop.f32.mrb[0].mxu0
      %v1085 = vadd.f32 0.0, %v1084
      %v1086 = vpop.f32.mrb[0].mxu0
      %v1087 = vpop.f32.mrb[0].mxu0
      %1088 = vdwg.mxu0
      %1089 = vmatprep.subr.bf16.mxu0 %v971
      %1090 = vmatpush1.bf16.msra.mxu0 %v970
      %1091 = vmatprep.subr.bf16.mxu0 %v976
      %1092 = vmatpush1.bf16.msra.mxu0 %v975
      %1093 = vmatprep.subr.bf16.mxu0 %v981
      %1094 = vmatpush1.bf16.msra.mxu0 %v980
      %1095 = vmatprep.subr.bf16.mxu0 %v986
      %1096 = vmatpush1.bf16.msra.mxu0 %v985
      %1097 = vmatprep.subr.bf16.mxu0 %v991
      %1098 = vmatpush1.bf16.msra.mxu0 %v990
      %1099 = vmatprep.subr.bf16.mxu0 %v996
      %1100 = vmatpush1.bf16.msra.mxu0 %v995
      %1101 = vmatprep.subr.bf16.mxu0 %v1001
      %1102 = vmatpush1.bf16.msra.mxu0 %v1000
      %1103 = vmatprep.subr.bf16.mxu0 %v1006
      %1104 = vmatpush1.bf16.msra.mxu0 %v1005
      %1105 = vmatprep.subr.bf16.mxu0 0
      %1106 = vmatpush1.bf16.msra.mxu0 0
      %1107 = vmatprep.subr.bf16.mxu0 0
      %1108 = vmatpush1.bf16.msra.mxu0 0
      %1109 = vmatprep.subr.bf16.mxu0 0
      %1110 = vmatpush1.bf16.msra.mxu0 0
      %1111 = vmatprep.subr.bf16.mxu0 0
      %1112 = vmatpush1.bf16.msra.mxu0 0
      %1113 = vmatprep.subr.bf16.mxu0 0
      %1114 = vmatpush1.bf16.msra.mxu0 0
      %1115 = vmatprep.subr.bf16.mxu0 0
      %1116 = vmatpush1.bf16.msra.mxu0 0
      %1117 = vmatprep.subr.bf16.mxu0 0
      %1118 = vmatpush1.bf16.msra.mxu0 0
      %1119 = vmatprep.subr.bf16.mxu0 0
      %1120 = vmatpush1.bf16.msra.mxu0 0
      %1121 = vmatprep.mubr.bf16.mxu0 0
      %1122 = vmatmul.mubr.bf16.gmra.mrb[0].mxu0 %v789
      %v1123 = vpop.f32.mrb[0].mxu0
      %v1124 = vadd.f32 0.0, %v1123
      %v1125 = vpop.f32.mrb[0].mxu0
      %v1126 = vadd.f32 0.0, %v1125
      %v1127 = vpop.f32.mrb[0].mxu0
      %v1128 = vpop.f32.mrb[0].mxu0
      %1129 = vdwg.mxu0
      %1130 = vmatprep.subr.bf16.mxu0 0
      %1131 = vmatpush1.bf16.msra.mxu0 %v972
      %1132 = vmatprep.subr.bf16.mxu0 0
      %1133 = vmatpush1.bf16.msra.mxu0 %v977
      %1134 = vmatprep.subr.bf16.mxu0 0
      %1135 = vmatpush1.bf16.msra.mxu0 %v982
      %1136 = vmatprep.subr.bf16.mxu0 0
      %1137 = vmatpush1.bf16.msra.mxu0 %v987
      %1138 = vmatprep.subr.bf16.mxu0 0
      %1139 = vmatpush1.bf16.msra.mxu0 %v992
      %1140 = vmatprep.subr.bf16.mxu0 0
      %1141 = vmatpush1.bf16.msra.mxu0 %v997
      %1142 = vmatprep.subr.bf16.mxu0 0
      %1143 = vmatpush1.bf16.msra.mxu0 %v1002
      %1144 = vmatprep.subr.bf16.mxu0 0
      %1145 = vmatpush1.bf16.msra.mxu0 %v1007
      %1146 = vmatprep.subr.bf16.mxu0 0
      %1147 = vmatpush1.bf16.msra.mxu0 0
      %1148 = vmatprep.subr.bf16.mxu0 0
      %1149 = vmatpush1.bf16.msra.mxu0 0
      %1150 = vmatprep.subr.bf16.mxu0 0
      %1151 = vmatpush1.bf16.msra.mxu0 0
      %1152 = vmatprep.subr.bf16.mxu0 0
      %1153 = vmatpush1.bf16.msra.mxu0 0
      %1154 = vmatprep.subr.bf16.mxu0 0
      %1155 = vmatpush1.bf16.msra.mxu0 0
      %1156 = vmatprep.subr.bf16.mxu0 0
      %1157 = vmatpush1.bf16.msra.mxu0 0
      %1158 = vmatprep.subr.bf16.mxu0 0
      %1159 = vmatpush1.bf16.msra.mxu0 0
      %1160 = vmatprep.subr.bf16.mxu0 0
      %1161 = vmatpush1.bf16.msra.mxu0 0
      %1162 = vmatprep.mubr.bf16.mxu0 0
      %1163 = vmatmul.mubr.bf16.gmra.mrb[0].mxu0 %v789
      %v1164 = vpop.f32.mrb[0].mxu0
      %v1165 = vadd.f32 0.0, %v1164
      %v1166 = vpop.f32.mrb[0].mxu0
      %v1167 = vpop.f32.mrb[0].mxu0
      %v1168 = vpop.f32.mrb[0].mxu0
      %1169 = vdwg.mxu0
      %v1175 = vcombine.low %v1083, %v1085
      %v1176 = vcombine.low %v1124, %v1126
      %v1178 = vunpack.c.l.s4 1983009808
      %v1179 = vunpack.c.0.s8 %v1178
      %v1180 = vlaneseq
      %v1181 = vshrl.u32 %v1180, 7
      %v1182 = vsub.s32 %v1179, %v1181
      %v1183 = vrot.slane %v1175, %v1182
      %v1185 = vunpack.c.l.s4 1983009808
      %v1186 = vunpack.c.0.s8 %v1185
      %v1187 = vlaneseq
      %v1188 = vshrl.u32 %v1187, 7
      %v1189 = vsub.s32 %v1186, %v1188
      %v1190 = vrot.slane %v1176, %v1189
      %v1191 = vcombine.low %v1183, %v1190
      %v1193 = vunpack.c.l.s4 1983009808
      %v1194 = vunpack.c.0.s8 %v1193
      %v1195 = vlaneseq
      %v1196 = vshrl.u32 %v1195, 7
      %v1197 = vsub.s32 %v1194, %v1196
      %v1198 = vrot.slane %v1165, %v1197
      %v1201 = vadd.f32 %v790, %v1191
      %v1202 = vadd.f32 %v791, %v1198
      %1203 = vst [vmem:[#allocation3] sm:$0xff] %v1201
      %vm1204 = vcmask 713728
      %1205 = vst.msk [vmem:[#allocation3 + $0x8] sm:$0x3] %vm1204, %v1202
      %s1206 = sadd.s32 %s785, 1
      %s1207 = smul.u32 %s1206, 2
      %s1208 = scalar_lea.vmem [#allocation2], %s1207
      %v1209 = vld [vmem:[%s1208] sm:$0x3]
      %v1210 = vpack.c.bf16 %v1209, %v1209
      %v1211 = vld [vmem:[#allocation3] sm:$0xff]
      %v1212 = vld [vmem:[#allocation3 + $0x8] sm:$0x3]
      %s1213 = scalar_lea.vmem %s242, 320
      %v1214 = vld [vmem:[%s1213] sm:$0xff]
      %v1215 = vld [vmem:[%s1213 + $0x8] sm:$0xff]
      %v1216 = vld [vmem:[%s1213 + $0x10] sm:$0xf]
      %v1217 = vld [vmem:[%s1213 + $0x14] sm:$0xff]
      %v1218 = vld [vmem:[%s1213 + $0x1c] sm:$0xff]
      %v1219 = vld [vmem:[%s1213 + $0x24] sm:$0xf]
      %v1220 = vld [vmem:[%s1213 + $0x28] sm:$0xff]
      %v1221 = vld [vmem:[%s1213 + $0x30] sm:$0xff]
      %v1222 = vld [vmem:[%s1213 + $0x38] sm:$0xf]
      %v1223 = vld [vmem:[%s1213 + $0x3c] sm:$0xff]
      %v1224 = vld [vmem:[%s1213 + $0x44] sm:$0xff]
      %v1225 = vld [vmem:[%s1213 + $0x4c] sm:$0xf]
      %v1226 = vld [vmem:[%s1213 + $0x50] sm:$0xff]
      %v1227 = vld [vmem:[%s1213 + $0x58] sm:$0xff]
      %v1228 = vld [vmem:[%s1213 + $0x60] sm:$0xf]
      %v1229 = vld [vmem:[%s1213 + $0x64] sm:$0xff]
      %v1230 = vld [vmem:[%s1213 + $0x6c] sm:$0xff]
      %v1231 = vld [vmem:[%s1213 + $0x74] sm:$0xf]
      %v1232 = vld [vmem:[%s1213 + $0x78] sm:$0xff]
      %v1233 = vld [vmem:[%s1213 + $0x80] sm:$0xff]
      %v1234 = vld [vmem:[%s1213 + $0x88] sm:$0xf]
      %v1235 = vld [vmem:[%s1213 + $0x8c] sm:$0xff]
      %v1236 = vld [vmem:[%s1213 + $0x94] sm:$0xff]
      %v1237 = vld [vmem:[%s1213 + $0x9c] sm:$0xf]
      %v1238 = vld [vmem:[%s1213 + $0xa0] sm:$0xff]
      %v1239 = vld [vmem:[%s1213 + $0xa8] sm:$0xff]
      %v1240 = vld [vmem:[%s1213 + $0xb0] sm:$0xf]
      %v1241 = vld [vmem:[%s1213 + $0xb4] sm:$0xff]
      %v1242 = vld [vmem:[%s1213 + $0xbc] sm:$0xff]
      %v1243 = vld [vmem:[%s1213 + $0xc4] sm:$0xf]
      %v1244 = vld [vmem:[%s1213 + $0xc8] sm:$0xff]
      %v1245 = vld [vmem:[%s1213 + $0xd0] sm:$0xff]
      %v1246 = vld [vmem:[%s1213 + $0xd8] sm:$0xf]
      %v1247 = vld [vmem:[%s1213 + $0xdc] sm:$0xff]
      %v1248 = vld [vmem:[%s1213 + $0xe4] sm:$0xff]
      %v1249 = vld [vmem:[%s1213 + $0xec] sm:$0xf]
      %v1250 = vld [vmem:[%s1213 + $0xf0] sm:$0xff]
      %v1251 = vld [vmem:[%s1213 + $0xf8] sm:$0xff]
      %v1252 = vld [vmem:[%s1213 + $0x100] sm:$0xf]
      %v1253 = vld [vmem:[%s1213 + $0x104] sm:$0xff]
      %v1254 = vld [vmem:[%s1213 + $0x10c] sm:$0xff]
      %v1255 = vld [vmem:[%s1213 + $0x114] sm:$0xf]
      %v1256 = vld [vmem:[%s1213 + $0x118] sm:$0xff]
      %v1257 = vld [vmem:[%s1213 + $0x120] sm:$0xff]
      %v1258 = vld [vmem:[%s1213 + $0x128] sm:$0xf]
      %v1259 = vld [vmem:[%s1213 + $0x12c] sm:$0xff]
      %v1260 = vld [vmem:[%s1213 + $0x134] sm:$0xff]
      %v1261 = vld [vmem:[%s1213 + $0x13c] sm:$0xf]
      %v1310 = vunpack.c.l.b16 %v1214
      %v1311 = vunpack.c.h.b16 %v1214
      %v1312 = vunpack.c.l.b16 %v1215
      %v1313 = vunpack.c.h.b16 %v1215
      %v1314 = vunpack.c.l.b16 %v1216
      %v1315 = vunpack.c.l.b16 %v1217
      %v1316 = vunpack.c.h.b16 %v1217
      %v1317 = vunpack.c.l.b16 %v1218
      %v1318 = vunpack.c.h.b16 %v1218
      %v1319 = vunpack.c.l.b16 %v1219
      %v1320 = vunpack.c.l.b16 %v1220
      %v1321 = vunpack.c.h.b16 %v1220
      %v1322 = vunpack.c.l.b16 %v1221
      %v1323 = vunpack.c.h.b16 %v1221
      %v1324 = vunpack.c.l.b16 %v1222
      %v1325 = vunpack.c.l.b16 %v1223
      %v1326 = vunpack.c.h.b16 %v1223
      %v1327 = vunpack.c.l.b16 %v1224
      %v1328 = vunpack.c.h.b16 %v1224
      %v1329 = vunpack.c.l.b16 %v1225
      %v1330 = vunpack.c.l.b16 %v1226
      %v1331 = vunpack.c.h.b16 %v1226
      %v1332 = vunpack.c.l.b16 %v1227
      %v1333 = vunpack.c.h.b16 %v1227
      %v1334 = vunpack.c.l.b16 %v1228
      %v1335 = vunpack.c.l.b16 %v1229
      %v1336 = vunpack.c.h.b16 %v1229
      %v1337 = vunpack.c.l.b16 %v1230
      %v1338 = vunpack.c.h.b16 %v1230
      %v1339 = vunpack.c.l.b16 %v1231
      %v1340 = vunpack.c.l.b16 %v1232
      %v1341 = vunpack.c.h.b16 %v1232
      %v1342 = vunpack.c.l.b16 %v1233
      %v1343 = vunpack.c.h.b16 %v1233
      %v1344 = vunpack.c.l.b16 %v1234
      %v1345 = vunpack.c.l.b16 %v1235
      %v1346 = vunpack.c.h.b16 %v1235
      %v1347 = vunpack.c.l.b16 %v1236
      %v1348 = vunpack.c.h.b16 %v1236
      %v1349 = vunpack.c.l.b16 %v1237
      %v1350 = vunpack.c.l.b16 %v1238
      %v1351 = vunpack.c.h.b16 %v1238
      %v1352 = vunpack.c.l.b16 %v1239
      %v1353 = vunpack.c.h.b16 %v1239
      %v1354 = vunpack.c.l.b16 %v1240
      %v1355 = vunpack.c.l.b16 %v1241
      %v1356 = vunpack.c.h.b16 %v1241
      %v1357 = vunpack.c.l.b16 %v1242
      %v1358 = vunpack.c.h.b16 %v1242
      %v1359 = vunpack.c.l.b16 %v1243
      %v1360 = vunpack.c.l.b16 %v1244
      %v1361 = vunpack.c.h.b16 %v1244
      %v1362 = vunpack.c.l.b16 %v1245
      %v1363 = vunpack.c.h.b16 %v1245
      %v1364 = vunpack.c.l.b16 %v1246
      %v1365 = vunpack.c.l.b16 %v1247
      %v1366 = vunpack.c.h.b16 %v1247
      %v1367 = vunpack.c.l.b16 %v1248
      %v1368 = vunpack.c.h.b16 %v1248
      %v1369 = vunpack.c.l.b16 %v1249
      %v1370 = vunpack.c.l.b16 %v1250
      %v1371 = vunpack.c.h.b16 %v1250
      %v1372 = vunpack.c.l.b16 %v1251
      %v1373 = vunpack.c.h.b16 %v1251
      %v1374 = vunpack.c.l.b16 %v1252
      %v1375 = vunpack.c.l.b16 %v1253
      %v1376 = vunpack.c.h.b16 %v1253
      %v1377 = vunpack.c.l.b16 %v1254
      %v1378 = vunpack.c.h.b16 %v1254
      %v1379 = vunpack.c.l.b16 %v1255
      %v1380 = vunpack.c.l.b16 %v1256
      %v1381 = vunpack.c.h.b16 %v1256
      %v1382 = vunpack.c.l.b16 %v1257
      %v1383 = vunpack.c.h.b16 %v1257
      %v1384 = vunpack.c.l.b16 %v1258
      %v1385 = vunpack.c.l.b16 %v1259
      %v1386 = vunpack.c.h.b16 %v1259
      %v1387 = vunpack.c.l.b16 %v1260
      %v1388 = vunpack.c.h.b16 %v1260
      %v1389 = vunpack.c.l.b16 %v1261
      %v1390 = vpack.c.b16 %v1315, %v1310
      %v1391 = vpack.c.b16 %v1316, %v1311
      %v1392 = vpack.c.b16 %v1317, %v1312
      %v1393 = vpack.c.b16 %v1318, %v1313
      %v1394 = vpack.c.b16 %v1319, %v1314
      %v1395 = vpack.c.b16 %v1325, %v1320
      %v1396 = vpack.c.b16 %v1326, %v1321
      %v1397 = vpack.c.b16 %v1327, %v1322
      %v1398 = vpack.c.b16 %v1328, %v1323
      %v1399 = vpack.c.b16 %v1329, %v1324
      %v1400 = vpack.c.b16 %v1335, %v1330
      %v1401 = vpack.c.b16 %v1336, %v1331
      %v1402 = vpack.c.b16 %v1337, %v1332
      %v1403 = vpack.c.b16 %v1338, %v1333
      %v1404 = vpack.c.b16 %v1339, %v1334
      %v1405 = vpack.c.b16 %v1345, %v1340
      %v1406 = vpack.c.b16 %v1346, %v1341
      %v1407 = vpack.c.b16 %v1347, %v1342
      %v1408 = vpack.c.b16 %v1348, %v1343
      %v1409 = vpack.c.b16 %v1349, %v1344
      %v1410 = vpack.c.b16 %v1355, %v1350
      %v1411 = vpack.c.b16 %v1356, %v1351
      %v1412 = vpack.c.b16 %v1357, %v1352
      %v1413 = vpack.c.b16 %v1358, %v1353
      %v1414 = vpack.c.b16 %v1359, %v1354
      %v1415 = vpack.c.b16 %v1365, %v1360
      %v1416 = vpack.c.b16 %v1366, %v1361
      %v1417 = vpack.c.b16 %v1367, %v1362
      %v1418 = vpack.c.b16 %v1368, %v1363
      %v1419 = vpack.c.b16 %v1369, %v1364
      %v1420 = vpack.c.b16 %v1375, %v1370
      %v1421 = vpack.c.b16 %v1376, %v1371
      %v1422 = vpack.c.b16 %v1377, %v1372
      %v1423 = vpack.c.b16 %v1378, %v1373
      %v1424 = vpack.c.b16 %v1379, %v1374
      %v1425 = vpack.c.b16 %v1385, %v1380
      %v1426 = vpack.c.b16 %v1386, %v1381
      %v1427 = vpack.c.b16 %v1387, %v1382
      %v1428 = vpack.c.b16 %v1388, %v1383
      %v1429 = vpack.c.b16 %v1389, %v1384
      %1470 = vmatprep.subr.bf16.mxu0 %v1391
      %1471 = vmatpush1.bf16.msra.mxu0 %v1390
      %1472 = vmatprep.subr.bf16.mxu0 %v1396
      %1473 = vmatpush1.bf16.msra.mxu0 %v1395
      %1474 = vmatprep.subr.bf16.mxu0 %v1401
      %1475 = vmatpush1.bf16.msra.mxu0 %v1400
      %1476 = vmatprep.subr.bf16.mxu0 %v1406
      %1477 = vmatpush1.bf16.msra.mxu0 %v1405
      %1478 = vmatprep.subr.bf16.mxu0 %v1411
      %1479 = vmatpush1.bf16.msra.mxu0 %v1410
      %1480 = vmatprep.subr.bf16.mxu0 %v1416
      %1481 = vmatpush1.bf16.msra.mxu0 %v1415
      %1482 = vmatprep.subr.bf16.mxu0 %v1421
      %1483 = vmatpush1.bf16.msra.mxu0 %v1420
      %1484 = vmatprep.subr.bf16.mxu0 %v1426
      %1485 = vmatpush1.bf16.msra.mxu0 %v1425
      %1486 = vmatprep.subr.bf16.mxu0 0
      %1487 = vmatpush1.bf16.msra.mxu0 0
      %1488 = vmatprep.subr.bf16.mxu0 0
      %1489 = vmatpush1.bf16.msra.mxu0 0
      %1490 = vmatprep.subr.bf16.mxu0 0
      %1491 = vmatpush1.bf16.msra.mxu0 0
      %1492 = vmatprep.subr.bf16.mxu0 0
      %1493 = vmatpush1.bf16.msra.mxu0 0
      %1494 = vmatprep.subr.bf16.mxu0 0
      %1495 = vmatpush1.bf16.msra.mxu0 0
      %1496 = vmatprep.subr.bf16.mxu0 0
      %1497 = vmatpush1.bf16.msra.mxu0 0
      %1498 = vmatprep.subr.bf16.mxu0 0
      %1499 = vmatpush1.bf16.msra.mxu0 0
      %1500 = vmatprep.subr.bf16.mxu0 0
      %1501 = vmatpush1.bf16.msra.mxu0 0
      %1502 = vmatprep.mubr.bf16.mxu0 0
      %1503 = vmatmul.mubr.bf16.gmra.mrb[0].mxu0 %v1210
      %v1504 = vpop.f32.mrb[0].mxu0
      %v1505 = vadd.f32 0.0, %v1504
      %v1506 = vpop.f32.mrb[0].mxu0
      %v1507 = vadd.f32 0.0, %v1506
      %v1508 = vpop.f32.mrb[0].mxu0
      %v1509 = vpop.f32.mrb[0].mxu0
      %1510 = vdwg.mxu0
      %1511 = vmatprep.subr.bf16.mxu0 %v1393
      %1512 = vmatpush1.bf16.msra.mxu0 %v1392
      %1513 = vmatprep.subr.bf16.mxu0 %v1398
      %1514 = vmatpush1.bf16.msra.mxu0 %v1397
      %1515 = vmatprep.subr.bf16.mxu0 %v1403
      %1516 = vmatpush1.bf16.msra.mxu0 %v1402
      %1517 = vmatprep.subr.bf16.mxu0 %v1408
      %1518 = vmatpush1.bf16.msra.mxu0 %v1407
      %1519 = vmatprep.subr.bf16.mxu0 %v1413
      %1520 = vmatpush1.bf16.msra.mxu0 %v1412
      %1521 = vmatprep.subr.bf16.mxu0 %v1418
      %1522 = vmatpush1.bf16.msra.mxu0 %v1417
      %1523 = vmatprep.subr.bf16.mxu0 %v1423
      %1524 = vmatpush1.bf16.msra.mxu0 %v1422
      %1525 = vmatprep.subr.bf16.mxu0 %v1428
      %1526 = vmatpush1.bf16.msra.mxu0 %v1427
      %1527 = vmatprep.subr.bf16.mxu0 0
      %1528 = vmatpush1.bf16.msra.mxu0 0
      %1529 = vmatprep.subr.bf16.mxu0 0
      %1530 = vmatpush1.bf16.msra.mxu0 0
      %1531 = vmatprep.subr.bf16.mxu0 0
      %1532 = vmatpush1.bf16.msra.mxu0 0
      %1533 = vmatprep.subr.bf16.mxu0 0
      %1534 = vmatpush1.bf16.msra.mxu0 0
      %1535 = vmatprep.subr.bf16.mxu0 0
      %1536 = vmatpush1.bf16.msra.mxu0 0
      %1537 = vmatprep.subr.bf16.mxu0 0
      %1538 = vmatpush1.bf16.msra.mxu0 0
      %1539 = vmatprep.subr.bf16.mxu0 0
      %1540 = vmatpush1.bf16.msra.mxu0 0
      %1541 = vmatprep.subr.bf16.mxu0 0
      %1542 = vmatpush1.bf16.msra.mxu0 0
      %1543 = vmatprep.mubr.bf16.mxu0 0
      %1544 = vmatmul.mubr.bf16.gmra.mrb[0].mxu0 %v1210
      %v1545 = vpop.f32.mrb[0].mxu0
      %v1546 = vadd.f32 0.0, %v1545
      %v1547 = vpop.f32.mrb[0].mxu0
      %v1548 = vadd.f32 0.0, %v1547
      %v1549 = vpop.f32.mrb[0].mxu0
      %v1550 = vpop.f32.mrb[0].mxu0
      %1551 = vdwg.mxu0
      %1552 = vmatprep.subr.bf16.mxu0 0
      %1553 = vmatpush1.bf16.msra.mxu0 %v1394
      %1554 = vmatprep.subr.bf16.mxu0 0
      %1555 = vmatpush1.bf16.msra.mxu0 %v1399
      %1556 = vmatprep.subr.bf16.mxu0 0
      %1557 = vmatpush1.bf16.msra.mxu0 %v1404
      %1558 = vmatprep.subr.bf16.mxu0 0
      %1559 = vmatpush1.bf16.msra.mxu0 %v1409
      %1560 = vmatprep.subr.bf16.mxu0 0
      %1561 = vmatpush1.bf16.msra.mxu0 %v1414
      %1562 = vmatprep.subr.bf16.mxu0 0
      %1563 = vmatpush1.bf16.msra.mxu0 %v1419
      %1564 = vmatprep.subr.bf16.mxu0 0
      %1565 = vmatpush1.bf16.msra.mxu0 %v1424
      %1566 = vmatprep.subr.bf16.mxu0 0
      %1567 = vmatpush1.bf16.msra.mxu0 %v1429
      %1568 = vmatprep.subr.bf16.mxu0 0
      %1569 = vmatpush1.bf16.msra.mxu0 0
      %1570 = vmatprep.subr.bf16.mxu0 0
      %1571 = vmatpush1.bf16.msra.mxu0 0
      %1572 = vmatprep.subr.bf16.mxu0 0
      %1573 = vmatpush1.bf16.msra.mxu0 0
      %1574 = vmatprep.subr.bf16.mxu0 0
      %1575 = vmatpush1.bf16.msra.mxu0 0
      %1576 = vmatprep.subr.bf16.mxu0 0
      %1577 = vmatpush1.bf16.msra.mxu0 0
      %1578 = vmatprep.subr.bf16.mxu0 0
      %1579 = vmatpush1.bf16.msra.mxu0 0
      %1580 = vmatprep.subr.bf16.mxu0 0
      %1581 = vmatpush1.bf16.msra.mxu0 0
      %1582 = vmatprep.subr.bf16.mxu0 0
      %1583 = vmatpush1.bf16.msra.mxu0 0
      %1584 = vmatprep.mubr.bf16.mxu0 0
      %1585 = vmatmul.mubr.bf16.gmra.mrb[0].mxu0 %v1210
      %v1586 = vpop.f32.mrb[0].mxu0
      %v1587 = vadd.f32 0.0, %v1586
      %v1588 = vpop.f32.mrb[0].mxu0
      %v1589 = vpop.f32.mrb[0].mxu0
      %v1590 = vpop.f32.mrb[0].mxu0
      %1591 = vdwg.mxu0
      %v1597 = vcombine.low %v1505, %v1507
      %v1598 = vcombine.low %v1546, %v1548
      %v1600 = vunpack.c.l.s4 1983009808
      %v1601 = vunpack.c.0.s8 %v1600
      %v1602 = vlaneseq
      %v1603 = vshrl.u32 %v1602, 7
      %v1604 = vsub.s32 %v1601, %v1603
      %v1605 = vrot.slane %v1597, %v1604
      %v1607 = vunpack.c.l.s4 1983009808
      %v1608 = vunpack.c.0.s8 %v1607
      %v1609 = vlaneseq
      %v1610 = vshrl.u32 %v1609, 7
      %v1611 = vsub.s32 %v1608, %v1610
      %v1612 = vrot.slane %v1598, %v1611
      %v1613 = vcombine.low %v1605, %v1612
      %v1615 = vunpack.c.l.s4 1983009808
      %v1616 = vunpack.c.0.s8 %v1615
      %v1617 = vlaneseq
      %v1618 = vshrl.u32 %v1617, 7
      %v1619 = vsub.s32 %v1616, %v1618
      %v1620 = vrot.slane %v1587, %v1619
      %v1623 = vadd.f32 %v1211, %v1613
      %v1624 = vadd.f32 %v1212, %v1620
      %1625 = vst [vmem:[#allocation3] sm:$0xff] %v1623
      %1626 = vst.msk [vmem:[#allocation3 + $0x8] sm:$0x3] %vm1204, %v1624
      %s1627 = sadd.s32 %s785, 2
      %s1628 = smul.u32 %s1627, 2
      %s1629 = scalar_lea.vmem [#allocation2], %s1628
      %v1630 = vld [vmem:[%s1629] sm:$0x3]
      %v1631 = vpack.c.bf16 %v1630, %v1630
      %v1632 = vld [vmem:[#allocation3] sm:$0xff]
      %v1633 = vld [vmem:[#allocation3 + $0x8] sm:$0x3]
      %s1634 = scalar_lea.vmem %s242, 640
      %v1635 = vld [vmem:[%s1634] sm:$0xff]
      %v1636 = vld [vmem:[%s1634 + $0x8] sm:$0xff]
      %v1637 = vld [vmem:[%s1634 + $0x10] sm:$0xf]
      %v1638 = vld [vmem:[%s1634 + $0x14] sm:$0xff]
      %v1639 = vld [vmem:[%s1634 + $0x1c] sm:$0xff]
      %v1640 = vld [vmem:[%s1634 + $0x24] sm:$0xf]
      %v1641 = vld [vmem:[%s1634 + $0x28] sm:$0xff]
      %v1642 = vld [vmem:[%s1634 + $0x30] sm:$0xff]
      %v1643 = vld [vmem:[%s1634 + $0x38] sm:$0xf]
      %v1644 = vld [vmem:[%s1634 + $0x3c] sm:$0xff]
      %v1645 = vld [vmem:[%s1634 + $0x44] sm:$0xff]
      %v1646 = vld [vmem:[%s1634 + $0x4c] sm:$0xf]
      %v1647 = vld [vmem:[%s1634 + $0x50] sm:$0xff]
      %v1648 = vld [vmem:[%s1634 + $0x58] sm:$0xff]
      %v1649 = vld [vmem:[%s1634 + $0x60] sm:$0xf]
      %v1650 = vld [vmem:[%s1634 + $0x64] sm:$0xff]
      %v1651 = vld [vmem:[%s1634 + $0x6c] sm:$0xff]
      %v1652 = vld [vmem:[%s1634 + $0x74] sm:$0xf]
      %v1653 = vld [vmem:[%s1634 + $0x78] sm:$0xff]
      %v1654 = vld [vmem:[%s1634 + $0x80] sm:$0xff]
      %v1655 = vld [vmem:[%s1634 + $0x88] sm:$0xf]
      %v1656 = vld [vmem:[%s1634 + $0x8c] sm:$0xff]
      %v1657 = vld [vmem:[%s1634 + $0x94] sm:$0xff]
      %v1658 = vld [vmem:[%s1634 + $0x9c] sm:$0xf]
      %v1659 = vld [vmem:[%s1634 + $0xa0] sm:$0xff]
      %v1660 = vld [vmem:[%s1634 + $0xa8] sm:$0xff]
      %v1661 = vld [vmem:[%s1634 + $0xb0] sm:$0xf]
      %v1662 = vld [vmem:[%s1634 + $0xb4] sm:$0xff]
      %v1663 = vld [vmem:[%s1634 + $0xbc] sm:$0xff]
      %v1664 = vld [vmem:[%s1634 + $0xc4] sm:$0xf]
      %v1665 = vld [vmem:[%s1634 + $0xc8] sm:$0xff]
      %v1666 = vld [vmem:[%s1634 + $0xd0] sm:$0xff]
      %v1667 = vld [vmem:[%s1634 + $0xd8] sm:$0xf]
      %v1668 = vld [vmem:[%s1634 + $0xdc] sm:$0xff]
      %v1669 = vld [vmem:[%s1634 + $0xe4] sm:$0xff]
      %v1670 = vld [vmem:[%s1634 + $0xec] sm:$0xf]
      %v1671 = vld [vmem:[%s1634 + $0xf0] sm:$0xff]
      %v1672 = vld [vmem:[%s1634 + $0xf8] sm:$0xff]
      %v1673 = vld [vmem:[%s1634 + $0x100] sm:$0xf]
      %v1674 = vld [vmem:[%s1634 + $0x104] sm:$0xff]
      %v1675 = vld [vmem:[%s1634 + $0x10c] sm:$0xff]
      %v1676 = vld [vmem:[%s1634 + $0x114] sm:$0xf]
      %v1677 = vld [vmem:[%s1634 + $0x118] sm:$0xff]
      %v1678 = vld [vmem:[%s1634 + $0x120] sm:$0xff]
      %v1679 = vld [vmem:[%s1634 + $0x128] sm:$0xf]
      %v1680 = vld [vmem:[%s1634 + $0x12c] sm:$0xff]
      %v1681 = vld [vmem:[%s1634 + $0x134] sm:$0xff]
      %v1682 = vld [vmem:[%s1634 + $0x13c] sm:$0xf]
      %v1731 = vunpack.c.l.b16 %v1635
      %v1732 = vunpack.c.h.b16 %v1635
      %v1733 = vunpack.c.l.b16 %v1636
      %v1734 = vunpack.c.h.b16 %v1636
      %v1735 = vunpack.c.l.b16 %v1637
      %v1736 = vunpack.c.l.b16 %v1638
      %v1737 = vunpack.c.h.b16 %v1638
      %v1738 = vunpack.c.l.b16 %v1639
      %v1739 = vunpack.c.h.b16 %v1639
      %v1740 = vunpack.c.l.b16 %v1640
      %v1741 = vunpack.c.l.b16 %v1641
      %v1742 = vunpack.c.h.b16 %v1641
      %v1743 = vunpack.c.l.b16 %v1642
      %v1744 = vunpack.c.h.b16 %v1642
      %v1745 = vunpack.c.l.b16 %v1643
      %v1746 = vunpack.c.l.b16 %v1644
      %v1747 = vunpack.c.h.b16 %v1644
      %v1748 = vunpack.c.l.b16 %v1645
      %v1749 = vunpack.c.h.b16 %v1645
      %v1750 = vunpack.c.l.b16 %v1646
      %v1751 = vunpack.c.l.b16 %v1647
      %v1752 = vunpack.c.h.b16 %v1647
      %v1753 = vunpack.c.l.b16 %v1648
      %v1754 = vunpack.c.h.b16 %v1648
      %v1755 = vunpack.c.l.b16 %v1649
      %v1756 = vunpack.c.l.b16 %v1650
      %v1757 = vunpack.c.h.b16 %v1650
      %v1758 = vunpack.c.l.b16 %v1651
      %v1759 = vunpack.c.h.b16 %v1651
      %v1760 = vunpack.c.l.b16 %v1652
      %v1761 = vunpack.c.l.b16 %v1653
      %v1762 = vunpack.c.h.b16 %v1653
      %v1763 = vunpack.c.l.b16 %v1654
      %v1764 = vunpack.c.h.b16 %v1654
      %v1765 = vunpack.c.l.b16 %v1655
      %v1766 = vunpack.c.l.b16 %v1656
      %v1767 = vunpack.c.h.b16 %v1656
      %v1768 = vunpack.c.l.b16 %v1657
      %v1769 = vunpack.c.h.b16 %v1657
      %v1770 = vunpack.c.l.b16 %v1658
      %v1771 = vunpack.c.l.b16 %v1659
      %v1772 = vunpack.c.h.b16 %v1659
      %v1773 = vunpack.c.l.b16 %v1660
      %v1774 = vunpack.c.h.b16 %v1660
      %v1775 = vunpack.c.l.b16 %v1661
      %v1776 = vunpack.c.l.b16 %v1662
      %v1777 = vunpack.c.h.b16 %v1662
      %v1778 = vunpack.c.l.b16 %v1663
      %v1779 = vunpack.c.h.b16 %v1663
      %v1780 = vunpack.c.l.b16 %v1664
      %v1781 = vunpack.c.l.b16 %v1665
      %v1782 = vunpack.c.h.b16 %v1665
      %v1783 = vunpack.c.l.b16 %v1666
      %v1784 = vunpack.c.h.b16 %v1666
      %v1785 = vunpack.c.l.b16 %v1667
      %v1786 = vunpack.c.l.b16 %v1668
      %v1787 = vunpack.c.h.b16 %v1668
      %v1788 = vunpack.c.l.b16 %v1669
      %v1789 = vunpack.c.h.b16 %v1669
      %v1790 = vunpack.c.l.b16 %v1670
      %v1791 = vunpack.c.l.b16 %v1671
      %v1792 = vunpack.c.h.b16 %v1671
      %v1793 = vunpack.c.l.b16 %v1672
      %v1794 = vunpack.c.h.b16 %v1672
      %v1795 = vunpack.c.l.b16 %v1673
      %v1796 = vunpack.c.l.b16 %v1674
      %v1797 = vunpack.c.h.b16 %v1674
      %v1798 = vunpack.c.l.b16 %v1675
      %v1799 = vunpack.c.h.b16 %v1675
      %v1800 = vunpack.c.l.b16 %v1676
      %v1801 = vunpack.c.l.b16 %v1677
      %v1802 = vunpack.c.h.b16 %v1677
      %v1803 = vunpack.c.l.b16 %v1678
      %v1804 = vunpack.c.h.b16 %v1678
      %v1805 = vunpack.c.l.b16 %v1679
      %v1806 = vunpack.c.l.b16 %v1680
      %v1807 = vunpack.c.h.b16 %v1680
      %v1808 = vunpack.c.l.b16 %v1681
      %v1809 = vunpack.c.h.b16 %v1681
      %v1810 = vunpack.c.l.b16 %v1682
      %v1811 = vpack.c.b16 %v1736, %v1731
      %v1812 = vpack.c.b16 %v1737, %v1732
      %v1813 = vpack.c.b16 %v1738, %v1733
      %v1814 = vpack.c.b16 %v1739, %v1734
      %v1815 = vpack.c.b16 %v1740, %v1735
      %v1816 = vpack.c.b16 %v1746, %v1741
      %v1817 = vpack.c.b16 %v1747, %v1742
      %v1818 = vpack.c.b16 %v1748, %v1743
      %v1819 = vpack.c.b16 %v1749, %v1744
      %v1820 = vpack.c.b16 %v1750, %v1745
      %v1821 = vpack.c.b16 %v1756, %v1751
      %v1822 = vpack.c.b16 %v1757, %v1752
      %v1823 = vpack.c.b16 %v1758, %v1753
      %v1824 = vpack.c.b16 %v1759, %v1754
      %v1825 = vpack.c.b16 %v1760, %v1755
      %v1826 = vpack.c.b16 %v1766, %v1761
      %v1827 = vpack.c.b16 %v1767, %v1762
      %v1828 = vpack.c.b16 %v1768, %v1763
      %v1829 = vpack.c.b16 %v1769, %v1764
      %v1830 = vpack.c.b16 %v1770, %v1765
      %v1831 = vpack.c.b16 %v1776, %v1771
      %v1832 = vpack.c.b16 %v1777, %v1772
      %v1833 = vpack.c.b16 %v1778, %v1773
      %v1834 = vpack.c.b16 %v1779, %v1774
      %v1835 = vpack.c.b16 %v1780, %v1775
      %v1836 = vpack.c.b16 %v1786, %v1781
      %v1837 = vpack.c.b16 %v1787, %v1782
      %v1838 = vpack.c.b16 %v1788, %v1783
      %v1839 = vpack.c.b16 %v1789, %v1784
      %v1840 = vpack.c.b16 %v1790, %v1785
      %v1841 = vpack.c.b16 %v1796, %v1791
      %v1842 = vpack.c.b16 %v1797, %v1792
      %v1843 = vpack.c.b16 %v1798, %v1793
      %v1844 = vpack.c.b16 %v1799, %v1794
      %v1845 = vpack.c.b16 %v1800, %v1795
      %v1846 = vpack.c.b16 %v1806, %v1801
      %v1847 = vpack.c.b16 %v1807, %v1802
      %v1848 = vpack.c.b16 %v1808, %v1803
      %v1849 = vpack.c.b16 %v1809, %v1804
      %v1850 = vpack.c.b16 %v1810, %v1805
      %1891 = vmatprep.subr.bf16.mxu0 %v1812
      %1892 = vmatpush1.bf16.msra.mxu0 %v1811
      %1893 = vmatprep.subr.bf16.mxu0 %v1817
      %1894 = vmatpush1.bf16.msra.mxu0 %v1816
      %1895 = vmatprep.subr.bf16.mxu0 %v1822
      %1896 = vmatpush1.bf16.msra.mxu0 %v1821
      %1897 = vmatprep.subr.bf16.mxu0 %v1827
      %1898 = vmatpush1.bf16.msra.mxu0 %v1826
      %1899 = vmatprep.subr.bf16.mxu0 %v1832
      %1900 = vmatpush1.bf16.msra.mxu0 %v1831
      %1901 = vmatprep.subr.bf16.mxu0 %v1837
      %1902 = vmatpush1.bf16.msra.mxu0 %v1836
      %1903 = vmatprep.subr.bf16.mxu0 %v1842
      %1904 = vmatpush1.bf16.msra.mxu0 %v1841
      %1905 = vmatprep.subr.bf16.mxu0 %v1847
      %1906 = vmatpush1.bf16.msra.mxu0 %v1846
      %1907 = vmatprep.subr.bf16.mxu0 0
      %1908 = vmatpush1.bf16.msra.mxu0 0
      %1909 = vmatprep.subr.bf16.mxu0 0
      %1910 = vmatpush1.bf16.msra.mxu0 0
      %1911 = vmatprep.subr.bf16.mxu0 0
      %1912 = vmatpush1.bf16.msra.mxu0 0
      %1913 = vmatprep.subr.bf16.mxu0 0
      %1914 = vmatpush1.bf16.msra.mxu0 0
      %1915 = vmatprep.subr.bf16.mxu0 0
      %1916 = vmatpush1.bf16.msra.mxu0 0
      %1917 = vmatprep.subr.bf16.mxu0 0
      %1918 = vmatpush1.bf16.msra.mxu0 0
      %1919 = vmatprep.subr.bf16.mxu0 0
      %1920 = vmatpush1.bf16.msra.mxu0 0
      %1921 = vmatprep.subr.bf16.mxu0 0
      %1922 = vmatpush1.bf16.msra.mxu0 0
      %1923 = vmatprep.mubr.bf16.mxu0 0
      %1924 = vmatmul.mubr.bf16.gmra.mrb[0].mxu0 %v1631
      %v1925 = vpop.f32.mrb[0].mxu0
      %v1926 = vadd.f32 0.0, %v1925
      %v1927 = vpop.f32.mrb[0].mxu0
      %v1928 = vadd.f32 0.0, %v1927
      %v1929 = vpop.f32.mrb[0].mxu0
      %v1930 = vpop.f32.mrb[0].mxu0
      %1931 = vdwg.mxu0
      %1932 = vmatprep.subr.bf16.mxu0 %v1814
      %1933 = vmatpush1.bf16.msra.mxu0 %v1813
      %1934 = vmatprep.subr.bf16.mxu0 %v1819
      %1935 = vmatpush1.bf16.msra.mxu0 %v1818
      %1936 = vmatprep.subr.bf16.mxu0 %v1824
      %1937 = vmatpush1.bf16.msra.mxu0 %v1823
      %1938 = vmatprep.subr.bf16.mxu0 %v1829
      %1939 = vmatpush1.bf16.msra.mxu0 %v1828
      %1940 = vmatprep.subr.bf16.mxu0 %v1834
      %1941 = vmatpush1.bf16.msra.mxu0 %v1833
      %1942 = vmatprep.subr.bf16.mxu0 %v1839
      %1943 = vmatpush1.bf16.msra.mxu0 %v1838
      %1944 = vmatprep.subr.bf16.mxu0 %v1844
      %1945 = vmatpush1.bf16.msra.mxu0 %v1843
      %1946 = vmatprep.subr.bf16.mxu0 %v1849
      %1947 = vmatpush1.bf16.msra.mxu0 %v1848
      %1948 = vmatprep.subr.bf16.mxu0 0
      %1949 = vmatpush1.bf16.msra.mxu0 0
      %1950 = vmatprep.subr.bf16.mxu0 0
      %1951 = vmatpush1.bf16.msra.mxu0 0
      %1952 = vmatprep.subr.bf16.mxu0 0
      %1953 = vmatpush1.bf16.msra.mxu0 0
      %1954 = vmatprep.subr.bf16.mxu0 0
      %1955 = vmatpush1.bf16.msra.mxu0 0
      %1956 = vmatprep.subr.bf16.mxu0 0
      %1957 = vmatpush1.bf16.msra.mxu0 0
      %1958 = vmatprep.subr.bf16.mxu0 0
      %1959 = vmatpush1.bf16.msra.mxu0 0
      %1960 = vmatprep.subr.bf16.mxu0 0
      %1961 = vmatpush1.bf16.msra.mxu0 0
      %1962 = vmatprep.subr.bf16.mxu0 0
      %1963 = vmatpush1.bf16.msra.mxu0 0
      %1964 = vmatprep.mubr.bf16.mxu0 0
      %1965 = vmatmul.mubr.bf16.gmra.mrb[0].mxu0 %v1631
      %v1966 = vpop.f32.mrb[0].mxu0
      %v1967 = vadd.f32 0.0, %v1966
      %v1968 = vpop.f32.mrb[0].mxu0
      %v1969 = vadd.f32 0.0, %v1968
      %v1970 = vpop.f32.mrb[0].mxu0
      %v1971 = vpop.f32.mrb[0].mxu0
      %1972 = vdwg.mxu0
      %1973 = vmatprep.subr.bf16.mxu0 0
      %1974 = vmatpush1.bf16.msra.mxu0 %v1815
      %1975 = vmatprep.subr.bf16.mxu0 0
      %1976 = vmatpush1.bf16.msra.mxu0 %v1820
      %1977 = vmatprep.subr.bf16.mxu0 0
      %1978 = vmatpush1.bf16.msra.mxu0 %v1825
      %1979 = vmatprep.subr.bf16.mxu0 0
      %1980 = vmatpush1.bf16.msra.mxu0 %v1830
      %1981 = vmatprep.subr.bf16.mxu0 0
      %1982 = vmatpush1.bf16.msra.mxu0 %v1835
      %1983 = vmatprep.subr.bf16.mxu0 0
      %1984 = vmatpush1.bf16.msra.mxu0 %v1840
      %1985 = vmatprep.subr.bf16.mxu0 0
      %1986 = vmatpush1.bf16.msra.mxu0 %v1845
      %1987 = vmatprep.subr.bf16.mxu0 0
      %1988 = vmatpush1.bf16.msra.mxu0 %v1850
      %1989 = vmatprep.subr.bf16.mxu0 0
      %1990 = vmatpush1.bf16.msra.mxu0 0
      %1991 = vmatprep.subr.bf16.mxu0 0
      %1992 = vmatpush1.bf16.msra.mxu0 0
      %1993 = vmatprep.subr.bf16.mxu0 0
      %1994 = vmatpush1.bf16.msra.mxu0 0
      %1995 = vmatprep.subr.bf16.mxu0 0
      %1996 = vmatpush1.bf16.msra.mxu0 0
      %1997 = vmatprep.subr.bf16.mxu0 0
      %1998 = vmatpush1.bf16.msra.mxu0 0
      %1999 = vmatprep.subr.bf16.mxu0 0
      %2000 = vmatpush1.bf16.msra.mxu0 0
      %2001 = vmatprep.subr.bf16.mxu0 0
      %2002 = vmatpush1.bf16.msra.mxu0 0
      %2003 = vmatprep.subr.bf16.mxu0 0
      %2004 = vmatpush1.bf16.msra.mxu0 0
      %2005 = vmatprep.mubr.bf16.mxu0 0
      %2006 = vmatmul.mubr.bf16.gmra.mrb[0].mxu0 %v1631
      %v2007 = vpop.f32.mrb[0].mxu0
      %v2008 = vadd.f32 0.0, %v2007
      %v2009 = vpop.f32.mrb[0].mxu0
      %v2010 = vpop.f32.mrb[0].mxu0
      %v2011 = vpop.f32.mrb[0].mxu0
      %2012 = vdwg.mxu0
      %v2018 = vcombine.low %v1926, %v1928
      %v2019 = vcombine.low %v1967, %v1969
      %v2021 = vunpack.c.l.s4 1983009808
      %v2022 = vunpack.c.0.s8 %v2021
      %v2023 = vlaneseq
      %v2024 = vshrl.u32 %v2023, 7
      %v2025 = vsub.s32 %v2022, %v2024
      %v2026 = vrot.slane %v2018, %v2025
      %v2028 = vunpack.c.l.s4 1983009808
      %v2029 = vunpack.c.0.s8 %v2028
      %v2030 = vlaneseq
      %v2031 = vshrl.u32 %v2030, 7
      %v2032 = vsub.s32 %v2029, %v2031
      %v2033 = vrot.slane %v2019, %v2032
      %v2034 = vcombine.low %v2026, %v2033
      %v2036 = vunpack.c.l.s4 1983009808
      %v2037 = vunpack.c.0.s8 %v2036
      %v2038 = vlaneseq
      %v2039 = vshrl.u32 %v2038, 7
      %v2040 = vsub.s32 %v2037, %v2039
      %v2041 = vrot.slane %v2008, %v2040
      %v2044 = vadd.f32 %v1632, %v2034
      %v2045 = vadd.f32 %v1633, %v2041
      %2046 = vst [vmem:[#allocation3] sm:$0xff] %v2044
      %2047 = vst.msk [vmem:[#allocation3 + $0x8] sm:$0x3] %vm1204, %v2045
      %s2048 = sadd.s32 %s785, 3
      %s2049 = smul.u32 %s2048, 2
      %s2050 = scalar_lea.vmem [#allocation2], %s2049
      %v2051 = vld [vmem:[%s2050] sm:$0x3]
      %v2052 = vpack.c.bf16 %v2051, %v2051
      %v2053 = vld [vmem:[#allocation3] sm:$0xff]
      %v2054 = vld [vmem:[#allocation3 + $0x8] sm:$0x3]
      %s2055 = scalar_lea.vmem %s242, 960
      %v2056 = vld [vmem:[%s2055] sm:$0xff]
      %v2057 = vld [vmem:[%s2055 + $0x8] sm:$0xff]
      %v2058 = vld [vmem:[%s2055 + $0x10] sm:$0xf]
      %v2059 = vld [vmem:[%s2055 + $0x14] sm:$0xff]
      %v2060 = vld [vmem:[%s2055 + $0x1c] sm:$0xff]
      %v2061 = vld [vmem:[%s2055 + $0x24] sm:$0xf]
      %v2062 = vld [vmem:[%s2055 + $0x28] sm:$0xff]
      %v2063 = vld [vmem:[%s2055 + $0x30] sm:$0xff]
      %v2064 = vld [vmem:[%s2055 + $0x38] sm:$0xf]
      %v2065 = vld [vmem:[%s2055 + $0x3c] sm:$0xff]
      %v2066 = vld [vmem:[%s2055 + $0x44] sm:$0xff]
      %v2067 = vld [vmem:[%s2055 + $0x4c] sm:$0xf]
      %v2068 = vld [vmem:[%s2055 + $0x50] sm:$0xff]
      %v2069 = vld [vmem:[%s2055 + $0x58] sm:$0xff]
      %v2070 = vld [vmem:[%s2055 + $0x60] sm:$0xf]
      %v2071 = vld [vmem:[%s2055 + $0x64] sm:$0xff]
      %v2072 = vld [vmem:[%s2055 + $0x6c] sm:$0xff]
      %v2073 = vld [vmem:[%s2055 + $0x74] sm:$0xf]
      %v2074 = vld [vmem:[%s2055 + $0x78] sm:$0xff]
      %v2075 = vld [vmem:[%s2055 + $0x80] sm:$0xff]
      %v2076 = vld [vmem:[%s2055 + $0x88] sm:$0xf]
      %v2077 = vld [vmem:[%s2055 + $0x8c] sm:$0xff]
      %v2078 = vld [vmem:[%s2055 + $0x94] sm:$0xff]
      %v2079 = vld [vmem:[%s2055 + $0x9c] sm:$0xf]
      %v2080 = vld [vmem:[%s2055 + $0xa0] sm:$0xff]
      %v2081 = vld [vmem:[%s2055 + $0xa8] sm:$0xff]
      %v2082 = vld [vmem:[%s2055 + $0xb0] sm:$0xf]
      %v2083 = vld [vmem:[%s2055 + $0xb4] sm:$0xff]
      %v2084 = vld [vmem:[%s2055 + $0xbc] sm:$0xff]
      %v2085 = vld [vmem:[%s2055 + $0xc4] sm:$0xf]
      %v2086 = vld [vmem:[%s2055 + $0xc8] sm:$0xff]
      %v2087 = vld [vmem:[%s2055 + $0xd0] sm:$0xff]
      %v2088 = vld [vmem:[%s2055 + $0xd8] sm:$0xf]
      %v2089 = vld [vmem:[%s2055 + $0xdc] sm:$0xff]
      %v2090 = vld [vmem:[%s2055 + $0xe4] sm:$0xff]
      %v2091 = vld [vmem:[%s2055 + $0xec] sm:$0xf]
      %v2092 = vld [vmem:[%s2055 + $0xf0] sm:$0xff]
      %v2093 = vld [vmem:[%s2055 + $0xf8] sm:$0xff]
      %v2094 = vld [vmem:[%s2055 + $0x100] sm:$0xf]
      %v2095 = vld [vmem:[%s2055 + $0x104] sm:$0xff]
      %v2096 = vld [vmem:[%s2055 + $0x10c] sm:$0xff]
      %v2097 = vld [vmem:[%s2055 + $0x114] sm:$0xf]
      %v2098 = vld [vmem:[%s2055 + $0x118] sm:$0xff]
      %v2099 = vld [vmem:[%s2055 + $0x120] sm:$0xff]
      %v2100 = vld [vmem:[%s2055 + $0x128] sm:$0xf]
      %v2101 = vld [vmem:[%s2055 + $0x12c] sm:$0xff]
      %v2102 = vld [vmem:[%s2055 + $0x134] sm:$0xff]
      %v2103 = vld [vmem:[%s2055 + $0x13c] sm:$0xf]
      %v2152 = vunpack.c.l.b16 %v2056
      %v2153 = vunpack.c.h.b16 %v2056
      %v2154 = vunpack.c.l.b16 %v2057
      %v2155 = vunpack.c.h.b16 %v2057
      %v2156 = vunpack.c.l.b16 %v2058
      %v2157 = vunpack.c.l.b16 %v2059
      %v2158 = vunpack.c.h.b16 %v2059
      %v2159 = vunpack.c.l.b16 %v2060
      %v2160 = vunpack.c.h.b16 %v2060
      %v2161 = vunpack.c.l.b16 %v2061
      %v2162 = vunpack.c.l.b16 %v2062
      %v2163 = vunpack.c.h.b16 %v2062
      %v2164 = vunpack.c.l.b16 %v2063
      %v2165 = vunpack.c.h.b16 %v2063
      %v2166 = vunpack.c.l.b16 %v2064
      %v2167 = vunpack.c.l.b16 %v2065
      %v2168 = vunpack.c.h.b16 %v2065
      %v2169 = vunpack.c.l.b16 %v2066
      %v2170 = vunpack.c.h.b16 %v2066
      %v2171 = vunpack.c.l.b16 %v2067
      %v2172 = vunpack.c.l.b16 %v2068
      %v2173 = vunpack.c.h.b16 %v2068
      %v2174 = vunpack.c.l.b16 %v2069
      %v2175 = vunpack.c.h.b16 %v2069
      %v2176 = vunpack.c.l.b16 %v2070
      %v2177 = vunpack.c.l.b16 %v2071
      %v2178 = vunpack.c.h.b16 %v2071
      %v2179 = vunpack.c.l.b16 %v2072
      %v2180 = vunpack.c.h.b16 %v2072
      %v2181 = vunpack.c.l.b16 %v2073
      %v2182 = vunpack.c.l.b16 %v2074
      %v2183 = vunpack.c.h.b16 %v2074
      %v2184 = vunpack.c.l.b16 %v2075
      %v2185 = vunpack.c.h.b16 %v2075
      %v2186 = vunpack.c.l.b16 %v2076
      %v2187 = vunpack.c.l.b16 %v2077
      %v2188 = vunpack.c.h.b16 %v2077
      %v2189 = vunpack.c.l.b16 %v2078
      %v2190 = vunpack.c.h.b16 %v2078
      %v2191 = vunpack.c.l.b16 %v2079
      %v2192 = vunpack.c.l.b16 %v2080
      %v2193 = vunpack.c.h.b16 %v2080
      %v2194 = vunpack.c.l.b16 %v2081
      %v2195 = vunpack.c.h.b16 %v2081
      %v2196 = vunpack.c.l.b16 %v2082
      %v2197 = vunpack.c.l.b16 %v2083
      %v2198 = vunpack.c.h.b16 %v2083
      %v2199 = vunpack.c.l.b16 %v2084
      %v2200 = vunpack.c.h.b16 %v2084
      %v2201 = vunpack.c.l.b16 %v2085
      %v2202 = vunpack.c.l.b16 %v2086
      %v2203 = vunpack.c.h.b16 %v2086
      %v2204 = vunpack.c.l.b16 %v2087
      %v2205 = vunpack.c.h.b16 %v2087
      %v2206 = vunpack.c.l.b16 %v2088
      %v2207 = vunpack.c.l.b16 %v2089
      %v2208 = vunpack.c.h.b16 %v2089
      %v2209 = vunpack.c.l.b16 %v2090
      %v2210 = vunpack.c.h.b16 %v2090
      %v2211 = vunpack.c.l.b16 %v2091
      %v2212 = vunpack.c.l.b16 %v2092
      %v2213 = vunpack.c.h.b16 %v2092
      %v2214 = vunpack.c.l.b16 %v2093
      %v2215 = vunpack.c.h.b16 %v2093
      %v2216 = vunpack.c.l.b16 %v2094
      %v2217 = vunpack.c.l.b16 %v2095
      %v2218 = vunpack.c.h.b16 %v2095
      %v2219 = vunpack.c.l.b16 %v2096
      %v2220 = vunpack.c.h.b16 %v2096
      %v2221 = vunpack.c.l.b16 %v2097
      %v2222 = vunpack.c.l.b16 %v2098
      %v2223 = vunpack.c.h.b16 %v2098
      %v2224 = vunpack.c.l.b16 %v2099
      %v2225 = vunpack.c.h.b16 %v2099
      %v2226 = vunpack.c.l.b16 %v2100
      %v2227 = vunpack.c.l.b16 %v2101
      %v2228 = vunpack.c.h.b16 %v2101
      %v2229 = vunpack.c.l.b16 %v2102
      %v2230 = vunpack.c.h.b16 %v2102
      %v2231 = vunpack.c.l.b16 %v2103
      %v2232 = vpack.c.b16 %v2157, %v2152
      %v2233 = vpack.c.b16 %v2158, %v2153
      %v2234 = vpack.c.b16 %v2159, %v2154
      %v2235 = vpack.c.b16 %v2160, %v2155
      %v2236 = vpack.c.b16 %v2161, %v2156
      %v2237 = vpack.c.b16 %v2167, %v2162
      %v2238 = vpack.c.b16 %v2168, %v2163
      %v2239 = vpack.c.b16 %v2169, %v2164
      %v2240 = vpack.c.b16 %v2170, %v2165
      %v2241 = vpack.c.b16 %v2171, %v2166
      %v2242 = vpack.c.b16 %v2177, %v2172
      %v2243 = vpack.c.b16 %v2178, %v2173
      %v2244 = vpack.c.b16 %v2179, %v2174
      %v2245 = vpack.c.b16 %v2180, %v2175
      %v2246 = vpack.c.b16 %v2181, %v2176
      %v2247 = vpack.c.b16 %v2187, %v2182
      %v2248 = vpack.c.b16 %v2188, %v2183
      %v2249 = vpack.c.b16 %v2189, %v2184
      %v2250 = vpack.c.b16 %v2190, %v2185
      %v2251 = vpack.c.b16 %v2191, %v2186
      %v2252 = vpack.c.b16 %v2197, %v2192
      %v2253 = vpack.c.b16 %v2198, %v2193
      %v2254 = vpack.c.b16 %v2199, %v2194
      %v2255 = vpack.c.b16 %v2200, %v2195
      %v2256 = vpack.c.b16 %v2201, %v2196
      %v2257 = vpack.c.b16 %v2207, %v2202
      %v2258 = vpack.c.b16 %v2208, %v2203
      %v2259 = vpack.c.b16 %v2209, %v2204
      %v2260 = vpack.c.b16 %v2210, %v2205
      %v2261 = vpack.c.b16 %v2211, %v2206
      %v2262 = vpack.c.b16 %v2217, %v2212
      %v2263 = vpack.c.b16 %v2218, %v2213
      %v2264 = vpack.c.b16 %v2219, %v2214
      %v2265 = vpack.c.b16 %v2220, %v2215
      %v2266 = vpack.c.b16 %v2221, %v2216
      %v2267 = vpack.c.b16 %v2227, %v2222
      %v2268 = vpack.c.b16 %v2228, %v2223
      %v2269 = vpack.c.b16 %v2229, %v2224
      %v2270 = vpack.c.b16 %v2230, %v2225
      %v2271 = vpack.c.b16 %v2231, %v2226
      %2312 = vmatprep.subr.bf16.mxu0 %v2233
      %2313 = vmatpush1.bf16.msra.mxu0 %v2232
      %2314 = vmatprep.subr.bf16.mxu0 %v2238
      %2315 = vmatpush1.bf16.msra.mxu0 %v2237
      %2316 = vmatprep.subr.bf16.mxu0 %v2243
      %2317 = vmatpush1.bf16.msra.mxu0 %v2242
      %2318 = vmatprep.subr.bf16.mxu0 %v2248
      %2319 = vmatpush1.bf16.msra.mxu0 %v2247
      %2320 = vmatprep.subr.bf16.mxu0 %v2253
      %2321 = vmatpush1.bf16.msra.mxu0 %v2252
      %2322 = vmatprep.subr.bf16.mxu0 %v2258
      %2323 = vmatpush1.bf16.msra.mxu0 %v2257
      %2324 = vmatprep.subr.bf16.mxu0 %v2263
      %2325 = vmatpush1.bf16.msra.mxu0 %v2262
      %2326 = vmatprep.subr.bf16.mxu0 %v2268
      %2327 = vmatpush1.bf16.msra.mxu0 %v2267
      %2328 = vmatprep.subr.bf16.mxu0 0
      %2329 = vmatpush1.bf16.msra.mxu0 0
      %2330 = vmatprep.subr.bf16.mxu0 0
      %2331 = vmatpush1.bf16.msra.mxu0 0
      %2332 = vmatprep.subr.bf16.mxu0 0
      %2333 = vmatpush1.bf16.msra.mxu0 0
      %2334 = vmatprep.subr.bf16.mxu0 0
      %2335 = vmatpush1.bf16.msra.mxu0 0
      %2336 = vmatprep.subr.bf16.mxu0 0
      %2337 = vmatpush1.bf16.msra.mxu0 0
      %2338 = vmatprep.subr.bf16.mxu0 0
      %2339 = vmatpush1.bf16.msra.mxu0 0
      %2340 = vmatprep.subr.bf16.mxu0 0
      %2341 = vmatpush1.bf16.msra.mxu0 0
      %2342 = vmatprep.subr.bf16.mxu0 0
      %2343 = vmatpush1.bf16.msra.mxu0 0
      %2344 = vmatprep.mubr.bf16.mxu0 0
      %2345 = vmatmul.mubr.bf16.gmra.mrb[0].mxu0 %v2052
      %v2346 = vpop.f32.mrb[0].mxu0
      %v2347 = vadd.f32 0.0, %v2346
      %v2348 = vpop.f32.mrb[0].mxu0
      %v2349 = vadd.f32 0.0, %v2348
      %v2350 = vpop.f32.mrb[0].mxu0
      %v2351 = vpop.f32.mrb[0].mxu0
      %2352 = vdwg.mxu0
      %2353 = vmatprep.subr.bf16.mxu0 %v2235
      %2354 = vmatpush1.bf16.msra.mxu0 %v2234
      %2355 = vmatprep.subr.bf16.mxu0 %v2240
      %2356 = vmatpush1.bf16.msra.mxu0 %v2239
      %2357 = vmatprep.subr.bf16.mxu0 %v2245
      %2358 = vmatpush1.bf16.msra.mxu0 %v2244
      %2359 = vmatprep.subr.bf16.mxu0 %v2250
      %2360 = vmatpush1.bf16.msra.mxu0 %v2249
      %2361 = vmatprep.subr.bf16.mxu0 %v2255
      %2362 = vmatpush1.bf16.msra.mxu0 %v2254
      %2363 = vmatprep.subr.bf16.mxu0 %v2260
      %2364 = vmatpush1.bf16.msra.mxu0 %v2259
      %2365 = vmatprep.subr.bf16.mxu0 %v2265
      %2366 = vmatpush1.bf16.msra.mxu0 %v2264
      %2367 = vmatprep.subr.bf16.mxu0 %v2270
      %2368 = vmatpush1.bf16.msra.mxu0 %v2269
      %2369 = vmatprep.subr.bf16.mxu0 0
      %2370 = vmatpush1.bf16.msra.mxu0 0
      %2371 = vmatprep.subr.bf16.mxu0 0
      %2372 = vmatpush1.bf16.msra.mxu0 0
      %2373 = vmatprep.subr.bf16.mxu0 0
      %2374 = vmatpush1.bf16.msra.mxu0 0
      %2375 = vmatprep.subr.bf16.mxu0 0
      %2376 = vmatpush1.bf16.msra.mxu0 0
      %2377 = vmatprep.subr.bf16.mxu0 0
      %2378 = vmatpush1.bf16.msra.mxu0 0
      %2379 = vmatprep.subr.bf16.mxu0 0
      %2380 = vmatpush1.bf16.msra.mxu0 0
      %2381 = vmatprep.subr.bf16.mxu0 0
      %2382 = vmatpush1.bf16.msra.mxu0 0
      %2383 = vmatprep.subr.bf16.mxu0 0
      %2384 = vmatpush1.bf16.msra.mxu0 0
      %2385 = vmatprep.mubr.bf16.mxu0 0
      %2386 = vmatmul.mubr.bf16.gmra.mrb[0].mxu0 %v2052
      %v2387 = vpop.f32.mrb[0].mxu0
      %v2388 = vadd.f32 0.0, %v2387
      %v2389 = vpop.f32.mrb[0].mxu0
      %v2390 = vadd.f32 0.0, %v2389
      %v2391 = vpop.f32.mrb[0].mxu0
      %v2392 = vpop.f32.mrb[0].mxu0
      %2393 = vdwg.mxu0
      %2394 = vmatprep.subr.bf16.mxu0 0
      %2395 = vmatpush1.bf16.msra.mxu0 %v2236
      %2396 = vmatprep.subr.bf16.mxu0 0
      %2397 = vmatpush1.bf16.msra.mxu0 %v2241
      %2398 = vmatprep.subr.bf16.mxu0 0
      %2399 = vmatpush1.bf16.msra.mxu0 %v2246
      %2400 = vmatprep.subr.bf16.mxu0 0
      %2401 = vmatpush1.bf16.msra.mxu0 %v2251
      %2402 = vmatprep.subr.bf16.mxu0 0
      %2403 = vmatpush1.bf16.msra.mxu0 %v2256
      %2404 = vmatprep.subr.bf16.mxu0 0
      %2405 = vmatpush1.bf16.msra.mxu0 %v2261
      %2406 = vmatprep.subr.bf16.mxu0 0
      %2407 = vmatpush1.bf16.msra.mxu0 %v2266
      %2408 = vmatprep.subr.bf16.mxu0 0
      %2409 = vmatpush1.bf16.msra.mxu0 %v2271
      %2410 = vmatprep.subr.bf16.mxu0 0
      %2411 = vmatpush1.bf16.msra.mxu0 0
      %2412 = vmatprep.subr.bf16.mxu0 0
      %2413 = vmatpush1.bf16.msra.mxu0 0
      %2414 = vmatprep.subr.bf16.mxu0 0
      %2415 = vmatpush1.bf16.msra.mxu0 0
      %2416 = vmatprep.subr.bf16.mxu0 0
      %2417 = vmatpush1.bf16.msra.mxu0 0
      %2418 = vmatprep.subr.bf16.mxu0 0
      %2419 = vmatpush1.bf16.msra.mxu0 0
      %2420 = vmatprep.subr.bf16.mxu0 0
      %2421 = vmatpush1.bf16.msra.mxu0 0
      %2422 = vmatprep.subr.bf16.mxu0 0
      %2423 = vmatpush1.bf16.msra.mxu0 0
      %2424 = vmatprep.subr.bf16.mxu0 0
      %2425 = vmatpush1.bf16.msra.mxu0 0
      %2426 = vmatprep.mubr.bf16.mxu0 0
      %2427 = vmatmul.mubr.bf16.gmra.mrb[0].mxu0 %v2052
      %v2428 = vpop.f32.mrb[0].mxu0
      %v2429 = vadd.f32 0.0, %v2428
      %v2430 = vpop.f32.mrb[0].mxu0
      %v2431 = vpop.f32.mrb[0].mxu0
      %v2432 = vpop.f32.mrb[0].mxu0
      %2433 = vdwg.mxu0
      %v2439 = vcombine.low %v2347, %v2349
      %v2440 = vcombine.low %v2388, %v2390
      %v2442 = vunpack.c.l.s4 1983009808
      %v2443 = vunpack.c.0.s8 %v2442
      %v2444 = vlaneseq
      %v2445 = vshrl.u32 %v2444, 7
      %v2446 = vsub.s32 %v2443, %v2445
      %v2447 = vrot.slane %v2439, %v2446
      %v2449 = vunpack.c.l.s4 1983009808
      %v2450 = vunpack.c.0.s8 %v2449
      %v2451 = vlaneseq
      %v2452 = vshrl.u32 %v2451, 7
      %v2453 = vsub.s32 %v2450, %v2452
      %v2454 = vrot.slane %v2440, %v2453
      %v2455 = vcombine.low %v2447, %v2454
      %v2457 = vunpack.c.l.s4 1983009808
      %v2458 = vunpack.c.0.s8 %v2457
      %v2459 = vlaneseq
      %v2460 = vshrl.u32 %v2459, 7
      %v2461 = vsub.s32 %v2458, %v2460
      %v2462 = vrot.slane %v2429, %v2461
      %v2465 = vadd.f32 %v2053, %v2455
      %v2466 = vadd.f32 %v2054, %v2462
      %2467 = vst [vmem:[#allocation3] sm:$0xff] %v2465
      %2468 = vst.msk [vmem:[#allocation3 + $0x8] sm:$0x3] %vm1204, %v2466
      %s2469 = sadd.s32 %s785, 4
      %s2470 = smul.u32 %s2469, 2
      %s2471 = scalar_lea.vmem [#allocation2], %s2470
      %v2472 = vld [vmem:[%s2471] sm:$0x3]
      %v2473 = vpack.c.bf16 %v2472, %v2472
      %v2474 = vld [vmem:[#allocation3] sm:$0xff]
      %v2475 = vld [vmem:[#allocation3 + $0x8] sm:$0x3]
      %s2476 = scalar_lea.vmem %s242, 1280
      %v2477 = vld [vmem:[%s2476] sm:$0xff]
      %v2478 = vld [vmem:[%s2476 + $0x8] sm:$0xff]
      %v2479 = vld [vmem:[%s2476 + $0x10] sm:$0xf]
      %v2480 = vld [vmem:[%s2476 + $0x14] sm:$0xff]
      %v2481 = vld [vmem:[%s2476 + $0x1c] sm:$0xff]
      %v2482 = vld [vmem:[%s2476 + $0x24] sm:$0xf]
      %v2483 = vld [vmem:[%s2476 + $0x28] sm:$0xff]
      %v2484 = vld [vmem:[%s2476 + $0x30] sm:$0xff]
      %v2485 = vld [vmem:[%s2476 + $0x38] sm:$0xf]
      %v2486 = vld [vmem:[%s2476 + $0x3c] sm:$0xff]
      %v2487 = vld [vmem:[%s2476 + $0x44] sm:$0xff]
      %v2488 = vld [vmem:[%s2476 + $0x4c] sm:$0xf]
      %v2489 = vld [vmem:[%s2476 + $0x50] sm:$0xff]
      %v2490 = vld [vmem:[%s2476 + $0x58] sm:$0xff]
      %v2491 = vld [vmem:[%s2476 + $0x60] sm:$0xf]
      %v2492 = vld [vmem:[%s2476 + $0x64] sm:$0xff]
      %v2493 = vld [vmem:[%s2476 + $0x6c] sm:$0xff]
      %v2494 = vld [vmem:[%s2476 + $0x74] sm:$0xf]
      %v2495 = vld [vmem:[%s2476 + $0x78] sm:$0xff]
      %v2496 = vld [vmem:[%s2476 + $0x80] sm:$0xff]
      %v2497 = vld [vmem:[%s2476 + $0x88] sm:$0xf]
      %v2498 = vld [vmem:[%s2476 + $0x8c] sm:$0xff]
      %v2499 = vld [vmem:[%s2476 + $0x94] sm:$0xff]
      %v2500 = vld [vmem:[%s2476 + $0x9c] sm:$0xf]
      %v2501 = vld [vmem:[%s2476 + $0xa0] sm:$0xff]
      %v2502 = vld [vmem:[%s2476 + $0xa8] sm:$0xff]
      %v2503 = vld [vmem:[%s2476 + $0xb0] sm:$0xf]
      %v2504 = vld [vmem:[%s2476 + $0xb4] sm:$0xff]
      %v2505 = vld [vmem:[%s2476 + $0xbc] sm:$0xff]
      %v2506 = vld [vmem:[%s2476 + $0xc4] sm:$0xf]
      %v2507 = vld [vmem:[%s2476 + $0xc8] sm:$0xff]
      %v2508 = vld [vmem:[%s2476 + $0xd0] sm:$0xff]
      %v2509 = vld [vmem:[%s2476 + $0xd8] sm:$0xf]
      %v2510 = vld [vmem:[%s2476 + $0xdc] sm:$0xff]
      %v2511 = vld [vmem:[%s2476 + $0xe4] sm:$0xff]
      %v2512 = vld [vmem:[%s2476 + $0xec] sm:$0xf]
      %v2513 = vld [vmem:[%s2476 + $0xf0] sm:$0xff]
      %v2514 = vld [vmem:[%s2476 + $0xf8] sm:$0xff]
      %v2515 = vld [vmem:[%s2476 + $0x100] sm:$0xf]
      %v2516 = vld [vmem:[%s2476 + $0x104] sm:$0xff]
      %v2517 = vld [vmem:[%s2476 + $0x10c] sm:$0xff]
      %v2518 = vld [vmem:[%s2476 + $0x114] sm:$0xf]
      %v2519 = vld [vmem:[%s2476 + $0x118] sm:$0xff]
      %v2520 = vld [vmem:[%s2476 + $0x120] sm:$0xff]
      %v2521 = vld [vmem:[%s2476 + $0x128] sm:$0xf]
      %v2522 = vld [vmem:[%s2476 + $0x12c] sm:$0xff]
      %v2523 = vld [vmem:[%s2476 + $0x134] sm:$0xff]
      %v2524 = vld [vmem:[%s2476 + $0x13c] sm:$0xf]
      %v2573 = vunpack.c.l.b16 %v2477
      %v2574 = vunpack.c.h.b16 %v2477
      %v2575 = vunpack.c.l.b16 %v2478
      %v2576 = vunpack.c.h.b16 %v2478
      %v2577 = vunpack.c.l.b16 %v2479
      %v2578 = vunpack.c.l.b16 %v2480
      %v2579 = vunpack.c.h.b16 %v2480
      %v2580 = vunpack.c.l.b16 %v2481
      %v2581 = vunpack.c.h.b16 %v2481
      %v2582 = vunpack.c.l.b16 %v2482
      %v2583 = vunpack.c.l.b16 %v2483
      %v2584 = vunpack.c.h.b16 %v2483
      %v2585 = vunpack.c.l.b16 %v2484
      %v2586 = vunpack.c.h.b16 %v2484
      %v2587 = vunpack.c.l.b16 %v2485
      %v2588 = vunpack.c.l.b16 %v2486
      %v2589 = vunpack.c.h.b16 %v2486
      %v2590 = vunpack.c.l.b16 %v2487
      %v2591 = vunpack.c.h.b16 %v2487
      %v2592 = vunpack.c.l.b16 %v2488
      %v2593 = vunpack.c.l.b16 %v2489
      %v2594 = vunpack.c.h.b16 %v2489
      %v2595 = vunpack.c.l.b16 %v2490
      %v2596 = vunpack.c.h.b16 %v2490
      %v2597 = vunpack.c.l.b16 %v2491
      %v2598 = vunpack.c.l.b16 %v2492
      %v2599 = vunpack.c.h.b16 %v2492
      %v2600 = vunpack.c.l.b16 %v2493
      %v2601 = vunpack.c.h.b16 %v2493
      %v2602 = vunpack.c.l.b16 %v2494
      %v2603 = vunpack.c.l.b16 %v2495
      %v2604 = vunpack.c.h.b16 %v2495
      %v2605 = vunpack.c.l.b16 %v2496
      %v2606 = vunpack.c.h.b16 %v2496
      %v2607 = vunpack.c.l.b16 %v2497
      %v2608 = vunpack.c.l.b16 %v2498
      %v2609 = vunpack.c.h.b16 %v2498
      %v2610 = vunpack.c.l.b16 %v2499
      %v2611 = vunpack.c.h.b16 %v2499
      %v2612 = vunpack.c.l.b16 %v2500
      %v2613 = vunpack.c.l.b16 %v2501
      %v2614 = vunpack.c.h.b16 %v2501
      %v2615 = vunpack.c.l.b16 %v2502
      %v2616 = vunpack.c.h.b16 %v2502
      %v2617 = vunpack.c.l.b16 %v2503
      %v2618 = vunpack.c.l.b16 %v2504
      %v2619 = vunpack.c.h.b16 %v2504
      %v2620 = vunpack.c.l.b16 %v2505
      %v2621 = vunpack.c.h.b16 %v2505
      %v2622 = vunpack.c.l.b16 %v2506
      %v2623 = vunpack.c.l.b16 %v2507
      %v2624 = vunpack.c.h.b16 %v2507
      %v2625 = vunpack.c.l.b16 %v2508
      %v2626 = vunpack.c.h.b16 %v2508
      %v2627 = vunpack.c.l.b16 %v2509
      %v2628 = vunpack.c.l.b16 %v2510
      %v2629 = vunpack.c.h.b16 %v2510
      %v2630 = vunpack.c.l.b16 %v2511
      %v2631 = vunpack.c.h.b16 %v2511
      %v2632 = vunpack.c.l.b16 %v2512
      %v2633 = vunpack.c.l.b16 %v2513
      %v2634 = vunpack.c.h.b16 %v2513
      %v2635 = vunpack.c.l.b16 %v2514
      %v2636 = vunpack.c.h.b16 %v2514
      %v2637 = vunpack.c.l.b16 %v2515
      %v2638 = vunpack.c.l.b16 %v2516
      %v2639 = vunpack.c.h.b16 %v2516
      %v2640 = vunpack.c.l.b16 %v2517
      %v2641 = vunpack.c.h.b16 %v2517
      %v2642 = vunpack.c.l.b16 %v2518
      %v2643 = vunpack.c.l.b16 %v2519
      %v2644 = vunpack.c.h.b16 %v2519
      %v2645 = vunpack.c.l.b16 %v2520
      %v2646 = vunpack.c.h.b16 %v2520
      %v2647 = vunpack.c.l.b16 %v2521
      %v2648 = vunpack.c.l.b16 %v2522
      %v2649 = vunpack.c.h.b16 %v2522
      %v2650 = vunpack.c.l.b16 %v2523
      %v2651 = vunpack.c.h.b16 %v2523
      %v2652 = vunpack.c.l.b16 %v2524
      %v2653 = vpack.c.b16 %v2578, %v2573
      %v2654 = vpack.c.b16 %v2579, %v2574
      %v2655 = vpack.c.b16 %v2580, %v2575
      %v2656 = vpack.c.b16 %v2581, %v2576
      %v2657 = vpack.c.b16 %v2582, %v2577
      %v2658 = vpack.c.b16 %v2588, %v2583
      %v2659 = vpack.c.b16 %v2589, %v2584
      %v2660 = vpack.c.b16 %v2590, %v2585
      %v2661 = vpack.c.b16 %v2591, %v2586
      %v2662 = vpack.c.b16 %v2592, %v2587
      %v2663 = vpack.c.b16 %v2598, %v2593
      %v2664 = vpack.c.b16 %v2599, %v2594
      %v2665 = vpack.c.b16 %v2600, %v2595
      %v2666 = vpack.c.b16 %v2601, %v2596
      %v2667 = vpack.c.b16 %v2602, %v2597
      %v2668 = vpack.c.b16 %v2608, %v2603
      %v2669 = vpack.c.b16 %v2609, %v2604
      %v2670 = vpack.c.b16 %v2610, %v2605
      %v2671 = vpack.c.b16 %v2611, %v2606
      %v2672 = vpack.c.b16 %v2612, %v2607
      %v2673 = vpack.c.b16 %v2618, %v2613
      %v2674 = vpack.c.b16 %v2619, %v2614
      %v2675 = vpack.c.b16 %v2620, %v2615
      %v2676 = vpack.c.b16 %v2621, %v2616
      %v2677 = vpack.c.b16 %v2622, %v2617
      %v2678 = vpack.c.b16 %v2628, %v2623
      %v2679 = vpack.c.b16 %v2629, %v2624
      %v2680 = vpack.c.b16 %v2630, %v2625
      %v2681 = vpack.c.b16 %v2631, %v2626
      %v2682 = vpack.c.b16 %v2632, %v2627
      %v2683 = vpack.c.b16 %v2638, %v2633
      %v2684 = vpack.c.b16 %v2639, %v2634
      %v2685 = vpack.c.b16 %v2640, %v2635
      %v2686 = vpack.c.b16 %v2641, %v2636
      %v2687 = vpack.c.b16 %v2642, %v2637
      %v2688 = vpack.c.b16 %v2648, %v2643
      %v2689 = vpack.c.b16 %v2649, %v2644
      %v2690 = vpack.c.b16 %v2650, %v2645
      %v2691 = vpack.c.b16 %v2651, %v2646
      %v2692 = vpack.c.b16 %v2652, %v2647
      %2733 = vmatprep.subr.bf16.mxu0 %v2654
      %2734 = vmatpush1.bf16.msra.mxu0 %v2653
      %2735 = vmatprep.subr.bf16.mxu0 %v2659
      %2736 = vmatpush1.bf16.msra.mxu0 %v2658
      %2737 = vmatprep.subr.bf16.mxu0 %v2664
      %2738 = vmatpush1.bf16.msra.mxu0 %v2663
      %2739 = vmatprep.subr.bf16.mxu0 %v2669
      %2740 = vmatpush1.bf16.msra.mxu0 %v2668
      %2741 = vmatprep.subr.bf16.mxu0 %v2674
      %2742 = vmatpush1.bf16.msra.mxu0 %v2673
      %2743 = vmatprep.subr.bf16.mxu0 %v2679
      %2744 = vmatpush1.bf16.msra.mxu0 %v2678
      %2745 = vmatprep.subr.bf16.mxu0 %v2684
      %2746 = vmatpush1.bf16.msra.mxu0 %v2683
      %2747 = vmatprep.subr.bf16.mxu0 %v2689
      %2748 = vmatpush1.bf16.msra.mxu0 %v2688
      %2749 = vmatprep.subr.bf16.mxu0 0
      %2750 = vmatpush1.bf16.msra.mxu0 0
      %2751 = vmatprep.subr.bf16.mxu0 0
      %2752 = vmatpush1.bf16.msra.mxu0 0
      %2753 = vmatprep.subr.bf16.mxu0 0
      %2754 = vmatpush1.bf16.msra.mxu0 0
      %2755 = vmatprep.subr.bf16.mxu0 0
      %2756 = vmatpush1.bf16.msra.mxu0 0
      %2757 = vmatprep.subr.bf16.mxu0 0
      %2758 = vmatpush1.bf16.msra.mxu0 0
      %2759 = vmatprep.subr.bf16.mxu0 0
      %2760 = vmatpush1.bf16.msra.mxu0 0
      %2761 = vmatprep.subr.bf16.mxu0 0
      %2762 = vmatpush1.bf16.msra.mxu0 0
      %2763 = vmatprep.subr.bf16.mxu0 0
      %2764 = vmatpush1.bf16.msra.mxu0 0
      %2765 = vmatprep.mubr.bf16.mxu0 0
      %2766 = vmatmul.mubr.bf16.gmra.mrb[0].mxu0 %v2473
      %v2767 = vpop.f32.mrb[0].mxu0
      %v2768 = vadd.f32 0.0, %v2767
      %v2769 = vpop.f32.mrb[0].mxu0
      %v2770 = vadd.f32 0.0, %v2769
      %v2771 = vpop.f32.mrb[0].mxu0
      %v2772 = vpop.f32.mrb[0].mxu0
      %2773 = vdwg.mxu0
      %2774 = vmatprep.subr.bf16.mxu0 %v2656
      %2775 = vmatpush1.bf16.msra.mxu0 %v2655
      %2776 = vmatprep.subr.bf16.mxu0 %v2661
      %2777 = vmatpush1.bf16.msra.mxu0 %v2660
      %2778 = vmatprep.subr.bf16.mxu0 %v2666
      %2779 = vmatpush1.bf16.msra.mxu0 %v2665
      %2780 = vmatprep.subr.bf16.mxu0 %v2671
      %2781 = vmatpush1.bf16.msra.mxu0 %v2670
      %2782 = vmatprep.subr.bf16.mxu0 %v2676
      %2783 = vmatpush1.bf16.msra.mxu0 %v2675
      %2784 = vmatprep.subr.bf16.mxu0 %v2681
      %2785 = vmatpush1.bf16.msra.mxu0 %v2680
      %2786 = vmatprep.subr.bf16.mxu0 %v2686
      %2787 = vmatpush1.bf16.msra.mxu0 %v2685
      %2788 = vmatprep.subr.bf16.mxu0 %v2691
      %2789 = vmatpush1.bf16.msra.mxu0 %v2690
      %2790 = vmatprep.subr.bf16.mxu0 0
      %2791 = vmatpush1.bf16.msra.mxu0 0
      %2792 = vmatprep.subr.bf16.mxu0 0
      %2793 = vmatpush1.bf16.msra.mxu0 0
      %2794 = vmatprep.subr.bf16.mxu0 0
      %2795 = vmatpush1.bf16.msra.mxu0 0
      %2796 = vmatprep.subr.bf16.mxu0 0
      %2797 = vmatpush1.bf16.msra.mxu0 0
      %2798 = vmatprep.subr.bf16.mxu0 0
      %2799 = vmatpush1.bf16.msra.mxu0 0
      %2800 = vmatprep.subr.bf16.mxu0 0
      %2801 = vmatpush1.bf16.msra.mxu0 0
      %2802 = vmatprep.subr.bf16.mxu0 0
      %2803 = vmatpush1.bf16.msra.mxu0 0
      %2804 = vmatprep.subr.bf16.mxu0 0
      %2805 = vmatpush1.bf16.msra.mxu0 0
      %2806 = vmatprep.mubr.bf16.mxu0 0
      %2807 = vmatmul.mubr.bf16.gmra.mrb[0].mxu0 %v2473
      %v2808 = vpop.f32.mrb[0].mxu0
      %v2809 = vadd.f32 0.0, %v2808
      %v2810 = vpop.f32.mrb[0].mxu0
      %v2811 = vadd.f32 0.0, %v2810
      %v2812 = vpop.f32.mrb[0].mxu0
      %v2813 = vpop.f32.mrb[0].mxu0
      %2814 = vdwg.mxu0
      %2815 = vmatprep.subr.bf16.mxu0 0
      %2816 = vmatpush1.bf16.msra.mxu0 %v2657
      %2817 = vmatprep.subr.bf16.mxu0 0
      %2818 = vmatpush1.bf16.msra.mxu0 %v2662
      %2819 = vmatprep.subr.bf16.mxu0 0
      %2820 = vmatpush1.bf16.msra.mxu0 %v2667
      %2821 = vmatprep.subr.bf16.mxu0 0
      %2822 = vmatpush1.bf16.msra.mxu0 %v2672
      %2823 = vmatprep.subr.bf16.mxu0 0
      %2824 = vmatpush1.bf16.msra.mxu0 %v2677
      %2825 = vmatprep.subr.bf16.mxu0 0
      %2826 = vmatpush1.bf16.msra.mxu0 %v2682
      %2827 = vmatprep.subr.bf16.mxu0 0
      %2828 = vmatpush1.bf16.msra.mxu0 %v2687
      %2829 = vmatprep.subr.bf16.mxu0 0
      %2830 = vmatpush1.bf16.msra.mxu0 %v2692
      %2831 = vmatprep.subr.bf16.mxu0 0
      %2832 = vmatpush1.bf16.msra.mxu0 0
      %2833 = vmatprep.subr.bf16.mxu0 0
      %2834 = vmatpush1.bf16.msra.mxu0 0
      %2835 = vmatprep.subr.bf16.mxu0 0
      %2836 = vmatpush1.bf16.msra.mxu0 0
      %2837 = vmatprep.subr.bf16.mxu0 0
      %2838 = vmatpush1.bf16.msra.mxu0 0
      %2839 = vmatprep.subr.bf16.mxu0 0
      %2840 = vmatpush1.bf16.msra.mxu0 0
      %2841 = vmatprep.subr.bf16.mxu0 0
      %2842 = vmatpush1.bf16.msra.mxu0 0
      %2843 = vmatprep.subr.bf16.mxu0 0
      %2844 = vmatpush1.bf16.msra.mxu0 0
      %2845 = vmatprep.subr.bf16.mxu0 0
      %2846 = vmatpush1.bf16.msra.mxu0 0
      %2847 = vmatprep.mubr.bf16.mxu0 0
      %2848 = vmatmul.mubr.bf16.gmra.mrb[0].mxu0 %v2473
      %v2849 = vpop.f32.mrb[0].mxu0
      %v2850 = vadd.f32 0.0, %v2849
      %v2851 = vpop.f32.mrb[0].mxu0
      %v2852 = vpop.f32.mrb[0].mxu0
      %v2853 = vpop.f32.mrb[0].mxu0
      %2854 = vdwg.mxu0
      %v2860 = vcombine.low %v2768, %v2770
      %v2861 = vcombine.low %v2809, %v2811
      %v2863 = vunpack.c.l.s4 1983009808
      %v2864 = vunpack.c.0.s8 %v2863
      %v2865 = vlaneseq
      %v2866 = vshrl.u32 %v2865, 7
      %v2867 = vsub.s32 %v2864, %v2866
      %v2868 = vrot.slane %v2860, %v2867
      %v2870 = vunpack.c.l.s4 1983009808
      %v2871 = vunpack.c.0.s8 %v2870
      %v2872 = vlaneseq
      %v2873 = vshrl.u32 %v2872, 7
      %v2874 = vsub.s32 %v2871, %v2873
      %v2875 = vrot.slane %v2861, %v2874
      %v2876 = vcombine.low %v2868, %v2875
      %v2878 = vunpack.c.l.s4 1983009808
      %v2879 = vunpack.c.0.s8 %v2878
      %v2880 = vlaneseq
      %v2881 = vshrl.u32 %v2880, 7
      %v2882 = vsub.s32 %v2879, %v2881
      %v2883 = vrot.slane %v2850, %v2882
      %v2886 = vadd.f32 %v2474, %v2876
      %v2887 = vadd.f32 %v2475, %v2883
      %2888 = vst [vmem:[#allocation3] sm:$0xff] %v2886
      %2889 = vst.msk [vmem:[#allocation3 + $0x8] sm:$0x3] %vm1204, %v2887
      %s2890 = sadd.s32 %s785, 5
      %s2891 = smul.u32 %s2890, 2
      %s2892 = scalar_lea.vmem [#allocation2], %s2891
      %v2893 = vld [vmem:[%s2892] sm:$0x3]
      %v2894 = vpack.c.bf16 %v2893, %v2893
      %v2895 = vld [vmem:[#allocation3] sm:$0xff]
      %v2896 = vld [vmem:[#allocation3 + $0x8] sm:$0x3]
      %s2897 = scalar_lea.vmem %s242, 1600
      %v2898 = vld [vmem:[%s2897] sm:$0xff]
      %v2899 = vld [vmem:[%s2897 + $0x8] sm:$0xff]
      %v2900 = vld [vmem:[%s2897 + $0x10] sm:$0xf]
      %v2901 = vld [vmem:[%s2897 + $0x14] sm:$0xff]
      %v2902 = vld [vmem:[%s2897 + $0x1c] sm:$0xff]
      %v2903 = vld [vmem:[%s2897 + $0x24] sm:$0xf]
      %v2904 = vld [vmem:[%s2897 + $0x28] sm:$0xff]
      %v2905 = vld [vmem:[%s2897 + $0x30] sm:$0xff]
      %v2906 = vld [vmem:[%s2897 + $0x38] sm:$0xf]
      %v2907 = vld [vmem:[%s2897 + $0x3c] sm:$0xff]
      %v2908 = vld [vmem:[%s2897 + $0x44] sm:$0xff]
      %v2909 = vld [vmem:[%s2897 + $0x4c] sm:$0xf]
      %v2910 = vld [vmem:[%s2897 + $0x50] sm:$0xff]
      %v2911 = vld [vmem:[%s2897 + $0x58] sm:$0xff]
      %v2912 = vld [vmem:[%s2897 + $0x60] sm:$0xf]
      %v2913 = vld [vmem:[%s2897 + $0x64] sm:$0xff]
      %v2914 = vld [vmem:[%s2897 + $0x6c] sm:$0xff]
      %v2915 = vld [vmem:[%s2897 + $0x74] sm:$0xf]
      %v2916 = vld [vmem:[%s2897 + $0x78] sm:$0xff]
      %v2917 = vld [vmem:[%s2897 + $0x80] sm:$0xff]
      %v2918 = vld [vmem:[%s2897 + $0x88] sm:$0xf]
      %v2919 = vld [vmem:[%s2897 + $0x8c] sm:$0xff]
      %v2920 = vld [vmem:[%s2897 + $0x94] sm:$0xff]
      %v2921 = vld [vmem:[%s2897 + $0x9c] sm:$0xf]
      %v2922 = vld [vmem:[%s2897 + $0xa0] sm:$0xff]
      %v2923 = vld [vmem:[%s2897 + $0xa8] sm:$0xff]
      %v2924 = vld [vmem:[%s2897 + $0xb0] sm:$0xf]
      %v2925 = vld [vmem:[%s2897 + $0xb4] sm:$0xff]
      %v2926 = vld [vmem:[%s2897 + $0xbc] sm:$0xff]
      %v2927 = vld [vmem:[%s2897 + $0xc4] sm:$0xf]
      %v2928 = vld [vmem:[%s2897 + $0xc8] sm:$0xff]
      %v2929 = vld [vmem:[%s2897 + $0xd0] sm:$0xff]
      %v2930 = vld [vmem:[%s2897 + $0xd8] sm:$0xf]
      %v2931 = vld [vmem:[%s2897 + $0xdc] sm:$0xff]
      %v2932 = vld [vmem:[%s2897 + $0xe4] sm:$0xff]
      %v2933 = vld [vmem:[%s2897 + $0xec] sm:$0xf]
      %v2934 = vld [vmem:[%s2897 + $0xf0] sm:$0xff]
      %v2935 = vld [vmem:[%s2897 + $0xf8] sm:$0xff]
      %v2936 = vld [vmem:[%s2897 + $0x100] sm:$0xf]
      %v2937 = vld [vmem:[%s2897 + $0x104] sm:$0xff]
      %v2938 = vld [vmem:[%s2897 + $0x10c] sm:$0xff]
      %v2939 = vld [vmem:[%s2897 + $0x114] sm:$0xf]
      %v2940 = vld [vmem:[%s2897 + $0x118] sm:$0xff]
      %v2941 = vld [vmem:[%s2897 + $0x120] sm:$0xff]
      %v2942 = vld [vmem:[%s2897 + $0x128] sm:$0xf]
      %v2943 = vld [vmem:[%s2897 + $0x12c] sm:$0xff]
      %v2944 = vld [vmem:[%s2897 + $0x134] sm:$0xff]
      %v2945 = vld [vmem:[%s2897 + $0x13c] sm:$0xf]
      %v2994 = vunpack.c.l.b16 %v2898
      %v2995 = vunpack.c.h.b16 %v2898
      %v2996 = vunpack.c.l.b16 %v2899
      %v2997 = vunpack.c.h.b16 %v2899
      %v2998 = vunpack.c.l.b16 %v2900
      %v2999 = vunpack.c.l.b16 %v2901
      %v3000 = vunpack.c.h.b16 %v2901
      %v3001 = vunpack.c.l.b16 %v2902
      %v3002 = vunpack.c.h.b16 %v2902
      %v3003 = vunpack.c.l.b16 %v2903
      %v3004 = vunpack.c.l.b16 %v2904
      %v3005 = vunpack.c.h.b16 %v2904
      %v3006 = vunpack.c.l.b16 %v2905
      %v3007 = vunpack.c.h.b16 %v2905
      %v3008 = vunpack.c.l.b16 %v2906
      %v3009 = vunpack.c.l.b16 %v2907
      %v3010 = vunpack.c.h.b16 %v2907
      %v3011 = vunpack.c.l.b16 %v2908
      %v3012 = vunpack.c.h.b16 %v2908
      %v3013 = vunpack.c.l.b16 %v2909
      %v3014 = vunpack.c.l.b16 %v2910
      %v3015 = vunpack.c.h.b16 %v2910
      %v3016 = vunpack.c.l.b16 %v2911
      %v3017 = vunpack.c.h.b16 %v2911
      %v3018 = vunpack.c.l.b16 %v2912
      %v3019 = vunpack.c.l.b16 %v2913
      %v3020 = vunpack.c.h.b16 %v2913
      %v3021 = vunpack.c.l.b16 %v2914
      %v3022 = vunpack.c.h.b16 %v2914
      %v3023 = vunpack.c.l.b16 %v2915
      %v3024 = vunpack.c.l.b16 %v2916
      %v3025 = vunpack.c.h.b16 %v2916
      %v3026 = vunpack.c.l.b16 %v2917
      %v3027 = vunpack.c.h.b16 %v2917
      %v3028 = vunpack.c.l.b16 %v2918
      %v3029 = vunpack.c.l.b16 %v2919
      %v3030 = vunpack.c.h.b16 %v2919
      %v3031 = vunpack.c.l.b16 %v2920
      %v3032 = vunpack.c.h.b16 %v2920
      %v3033 = vunpack.c.l.b16 %v2921
      %v3034 = vunpack.c.l.b16 %v2922
      %v3035 = vunpack.c.h.b16 %v2922
      %v3036 = vunpack.c.l.b16 %v2923
      %v3037 = vunpack.c.h.b16 %v2923
      %v3038 = vunpack.c.l.b16 %v2924
      %v3039 = vunpack.c.l.b16 %v2925
      %v3040 = vunpack.c.h.b16 %v2925
      %v3041 = vunpack.c.l.b16 %v2926
      %v3042 = vunpack.c.h.b16 %v2926
      %v3043 = vunpack.c.l.b16 %v2927
      %v3044 = vunpack.c.l.b16 %v2928
      %v3045 = vunpack.c.h.b16 %v2928
      %v3046 = vunpack.c.l.b16 %v2929
      %v3047 = vunpack.c.h.b16 %v2929
      %v3048 = vunpack.c.l.b16 %v2930
      %v3049 = vunpack.c.l.b16 %v2931
      %v3050 = vunpack.c.h.b16 %v2931
      %v3051 = vunpack.c.l.b16 %v2932
      %v3052 = vunpack.c.h.b16 %v2932
      %v3053 = vunpack.c.l.b16 %v2933
      %v3054 = vunpack.c.l.b16 %v2934
      %v3055 = vunpack.c.h.b16 %v2934
      %v3056 = vunpack.c.l.b16 %v2935
      %v3057 = vunpack.c.h.b16 %v2935
      %v3058 = vunpack.c.l.b16 %v2936
      %v3059 = vunpack.c.l.b16 %v2937
      %v3060 = vunpack.c.h.b16 %v2937
      %v3061 = vunpack.c.l.b16 %v2938
      %v3062 = vunpack.c.h.b16 %v2938
      %v3063 = vunpack.c.l.b16 %v2939
      %v3064 = vunpack.c.l.b16 %v2940
      %v3065 = vunpack.c.h.b16 %v2940
      %v3066 = vunpack.c.l.b16 %v2941
      %v3067 = vunpack.c.h.b16 %v2941
      %v3068 = vunpack.c.l.b16 %v2942
      %v3069 = vunpack.c.l.b16 %v2943
      %v3070 = vunpack.c.h.b16 %v2943
      %v3071 = vunpack.c.l.b16 %v2944
      %v3072 = vunpack.c.h.b16 %v2944
      %v3073 = vunpack.c.l.b16 %v2945
      %v3074 = vpack.c.b16 %v2999, %v2994
      %v3075 = vpack.c.b16 %v3000, %v2995
      %v3076 = vpack.c.b16 %v3001, %v2996
      %v3077 = vpack.c.b16 %v3002, %v2997
      %v3078 = vpack.c.b16 %v3003, %v2998
      %v3079 = vpack.c.b16 %v3009, %v3004
      %v3080 = vpack.c.b16 %v3010, %v3005
      %v3081 = vpack.c.b16 %v3011, %v3006
      %v3082 = vpack.c.b16 %v3012, %v3007
      %v3083 = vpack.c.b16 %v3013, %v3008
      %v3084 = vpack.c.b16 %v3019, %v3014
      %v3085 = vpack.c.b16 %v3020, %v3015
      %v3086 = vpack.c.b16 %v3021, %v3016
      %v3087 = vpack.c.b16 %v3022, %v3017
      %v3088 = vpack.c.b16 %v3023, %v3018
      %v3089 = vpack.c.b16 %v3029, %v3024
      %v3090 = vpack.c.b16 %v3030, %v3025
      %v3091 = vpack.c.b16 %v3031, %v3026
      %v3092 = vpack.c.b16 %v3032, %v3027
      %v3093 = vpack.c.b16 %v3033, %v3028
      %v3094 = vpack.c.b16 %v3039, %v3034
      %v3095 = vpack.c.b16 %v3040, %v3035
      %v3096 = vpack.c.b16 %v3041, %v3036
      %v3097 = vpack.c.b16 %v3042, %v3037
      %v3098 = vpack.c.b16 %v3043, %v3038
      %v3099 = vpack.c.b16 %v3049, %v3044
      %v3100 = vpack.c.b16 %v3050, %v3045
      %v3101 = vpack.c.b16 %v3051, %v3046
      %v3102 = vpack.c.b16 %v3052, %v3047
      %v3103 = vpack.c.b16 %v3053, %v3048
      %v3104 = vpack.c.b16 %v3059, %v3054
      %v3105 = vpack.c.b16 %v3060, %v3055
      %v3106 = vpack.c.b16 %v3061, %v3056
      %v3107 = vpack.c.b16 %v3062, %v3057
      %v3108 = vpack.c.b16 %v3063, %v3058
      %v3109 = vpack.c.b16 %v3069, %v3064
      %v3110 = vpack.c.b16 %v3070, %v3065
      %v3111 = vpack.c.b16 %v3071, %v3066
      %v3112 = vpack.c.b16 %v3072, %v3067
      %v3113 = vpack.c.b16 %v3073, %v3068
      %3154 = vmatprep.subr.bf16.mxu0 %v3075
      %3155 = vmatpush1.bf16.msra.mxu0 %v3074
      %3156 = vmatprep.subr.bf16.mxu0 %v3080
      %3157 = vmatpush1.bf16.msra.mxu0 %v3079
      %3158 = vmatprep.subr.bf16.mxu0 %v3085
      %3159 = vmatpush1.bf16.msra.mxu0 %v3084
      %3160 = vmatprep.subr.bf16.mxu0 %v3090
      %3161 = vmatpush1.bf16.msra.mxu0 %v3089
      %3162 = vmatprep.subr.bf16.mxu0 %v3095
      %3163 = vmatpush1.bf16.msra.mxu0 %v3094
      %3164 = vmatprep.subr.bf16.mxu0 %v3100
      %3165 = vmatpush1.bf16.msra.mxu0 %v3099
      %3166 = vmatprep.subr.bf16.mxu0 %v3105
      %3167 = vmatpush1.bf16.msra.mxu0 %v3104
      %3168 = vmatprep.subr.bf16.mxu0 %v3110
      %3169 = vmatpush1.bf16.msra.mxu0 %v3109
      %3170 = vmatprep.subr.bf16.mxu0 0
      %3171 = vmatpush1.bf16.msra.mxu0 0
      %3172 = vmatprep.subr.bf16.mxu0 0
      %3173 = vmatpush1.bf16.msra.mxu0 0
      %3174 = vmatprep.subr.bf16.mxu0 0
      %3175 = vmatpush1.bf16.msra.mxu0 0
      %3176 = vmatprep.subr.bf16.mxu0 0
      %3177 = vmatpush1.bf16.msra.mxu0 0
      %3178 = vmatprep.subr.bf16.mxu0 0
      %3179 = vmatpush1.bf16.msra.mxu0 0
      %3180 = vmatprep.subr.bf16.mxu0 0
      %3181 = vmatpush1.bf16.msra.mxu0 0
      %3182 = vmatprep.subr.bf16.mxu0 0
      %3183 = vmatpush1.bf16.msra.mxu0 0
      %3184 = vmatprep.subr.bf16.mxu0 0
      %3185 = vmatpush1.bf16.msra.mxu0 0
      %3186 = vmatprep.mubr.bf16.mxu0 0
      %3187 = vmatmul.mubr.bf16.gmra.mrb[0].mxu0 %v2894
      %v3188 = vpop.f32.mrb[0].mxu0
      %v3189 = vadd.f32 0.0, %v3188
      %v3190 = vpop.f32.mrb[0].mxu0
      %v3191 = vadd.f32 0.0, %v3190
      %v3192 = vpop.f32.mrb[0].mxu0
      %v3193 = vpop.f32.mrb[0].mxu0
      %3194 = vdwg.mxu0
      %3195 = vmatprep.subr.bf16.mxu0 %v3077
      %3196 = vmatpush1.bf16.msra.mxu0 %v3076
      %3197 = vmatprep.subr.bf16.mxu0 %v3082
      %3198 = vmatpush1.bf16.msra.mxu0 %v3081
      %3199 = vmatprep.subr.bf16.mxu0 %v3087
      %3200 = vmatpush1.bf16.msra.mxu0 %v3086
      %3201 = vmatprep.subr.bf16.mxu0 %v3092
      %3202 = vmatpush1.bf16.msra.mxu0 %v3091
      %3203 = vmatprep.subr.bf16.mxu0 %v3097
      %3204 = vmatpush1.bf16.msra.mxu0 %v3096
      %3205 = vmatprep.subr.bf16.mxu0 %v3102
      %3206 = vmatpush1.bf16.msra.mxu0 %v3101
      %3207 = vmatprep.subr.bf16.mxu0 %v3107
      %3208 = vmatpush1.bf16.msra.mxu0 %v3106
      %3209 = vmatprep.subr.bf16.mxu0 %v3112
      %3210 = vmatpush1.bf16.msra.mxu0 %v3111
      %3211 = vmatprep.subr.bf16.mxu0 0
      %3212 = vmatpush1.bf16.msra.mxu0 0
      %3213 = vmatprep.subr.bf16.mxu0 0
      %3214 = vmatpush1.bf16.msra.mxu0 0
      %3215 = vmatprep.subr.bf16.mxu0 0
      %3216 = vmatpush1.bf16.msra.mxu0 0
      %3217 = vmatprep.subr.bf16.mxu0 0
      %3218 = vmatpush1.bf16.msra.mxu0 0
      %3219 = vmatprep.subr.bf16.mxu0 0
      %3220 = vmatpush1.bf16.msra.mxu0 0
      %3221 = vmatprep.subr.bf16.mxu0 0
      %3222 = vmatpush1.bf16.msra.mxu0 0
      %3223 = vmatprep.subr.bf16.mxu0 0
      %3224 = vmatpush1.bf16.msra.mxu0 0
      %3225 = vmatprep.subr.bf16.mxu0 0
      %3226 = vmatpush1.bf16.msra.mxu0 0
      %3227 = vmatprep.mubr.bf16.mxu0 0
      %3228 = vmatmul.mubr.bf16.gmra.mrb[0].mxu0 %v2894
      %v3229 = vpop.f32.mrb[0].mxu0
      %v3230 = vadd.f32 0.0, %v3229
      %v3231 = vpop.f32.mrb[0].mxu0
      %v3232 = vadd.f32 0.0, %v3231
      %v3233 = vpop.f32.mrb[0].mxu0
      %v3234 = vpop.f32.mrb[0].mxu0
      %3235 = vdwg.mxu0
      %3236 = vmatprep.subr.bf16.mxu0 0
      %3237 = vmatpush1.bf16.msra.mxu0 %v3078
      %3238 = vmatprep.subr.bf16.mxu0 0
      %3239 = vmatpush1.bf16.msra.mxu0 %v3083
      %3240 = vmatprep.subr.bf16.mxu0 0
      %3241 = vmatpush1.bf16.msra.mxu0 %v3088
      %3242 = vmatprep.subr.bf16.mxu0 0
      %3243 = vmatpush1.bf16.msra.mxu0 %v3093
      %3244 = vmatprep.subr.bf16.mxu0 0
      %3245 = vmatpush1.bf16.msra.mxu0 %v3098
      %3246 = vmatprep.subr.bf16.mxu0 0
      %3247 = vmatpush1.bf16.msra.mxu0 %v3103
      %3248 = vmatprep.subr.bf16.mxu0 0
      %3249 = vmatpush1.bf16.msra.mxu0 %v3108
      %3250 = vmatprep.subr.bf16.mxu0 0
      %3251 = vmatpush1.bf16.msra.mxu0 %v3113
      %3252 = vmatprep.subr.bf16.mxu0 0
      %3253 = vmatpush1.bf16.msra.mxu0 0
      %3254 = vmatprep.subr.bf16.mxu0 0
      %3255 = vmatpush1.bf16.msra.mxu0 0
      %3256 = vmatprep.subr.bf16.mxu0 0
      %3257 = vmatpush1.bf16.msra.mxu0 0
      %3258 = vmatprep.subr.bf16.mxu0 0
      %3259 = vmatpush1.bf16.msra.mxu0 0
      %3260 = vmatprep.subr.bf16.mxu0 0
      %3261 = vmatpush1.bf16.msra.mxu0 0
      %3262 = vmatprep.subr.bf16.mxu0 0
      %3263 = vmatpush1.bf16.msra.mxu0 0
      %3264 = vmatprep.subr.bf16.mxu0 0
      %3265 = vmatpush1.bf16.msra.mxu0 0
      %3266 = vmatprep.subr.bf16.mxu0 0
      %3267 = vmatpush1.bf16.msra.mxu0 0
      %3268 = vmatprep.mubr.bf16.mxu0 0
      %3269 = vmatmul.mubr.bf16.gmra.mrb[0].mxu0 %v2894
      %v3270 = vpop.f32.mrb[0].mxu0
      %v3271 = vadd.f32 0.0, %v3270
      %v3272 = vpop.f32.mrb[0].mxu0
      %v3273 = vpop.f32.mrb[0].mxu0
      %v3274 = vpop.f32.mrb[0].mxu0
      %3275 = vdwg.mxu0
      %v3281 = vcombine.low %v3189, %v3191
      %v3282 = vcombine.low %v3230, %v3232
      %v3284 = vunpack.c.l.s4 1983009808
      %v3285 = vunpack.c.0.s8 %v3284
      %v3286 = vlaneseq
      %v3287 = vshrl.u32 %v3286, 7
      %v3288 = vsub.s32 %v3285, %v3287
      %v3289 = vrot.slane %v3281, %v3288
      %v3291 = vunpack.c.l.s4 1983009808
      %v3292 = vunpack.c.0.s8 %v3291
      %v3293 = vlaneseq
      %v3294 = vshrl.u32 %v3293, 7
      %v3295 = vsub.s32 %v3292, %v3294
      %v3296 = vrot.slane %v3282, %v3295
      %v3297 = vcombine.low %v3289, %v3296
      %v3299 = vunpack.c.l.s4 1983009808
      %v3300 = vunpack.c.0.s8 %v3299
      %v3301 = vlaneseq
      %v3302 = vshrl.u32 %v3301, 7
      %v3303 = vsub.s32 %v3300, %v3302
      %v3304 = vrot.slane %v3271, %v3303
      %v3307 = vadd.f32 %v2895, %v3297
      %v3308 = vadd.f32 %v2896, %v3304
      %3309 = vst [vmem:[#allocation3] sm:$0xff] %v3307
      %3310 = vst.msk [vmem:[#allocation3 + $0x8] sm:$0x3] %vm1204, %v3308
      %s3311 = sadd.s32 %s785, 6
      %s3312 = smul.u32 %s3311, 2
      %s3313 = scalar_lea.vmem [#allocation2], %s3312
      %v3314 = vld [vmem:[%s3313] sm:$0x3]
      %v3315 = vpack.c.bf16 %v3314, %v3314
      %v3316 = vld [vmem:[#allocation3] sm:$0xff]
      %v3317 = vld [vmem:[#allocation3 + $0x8] sm:$0x3]
      %s3318 = scalar_lea.vmem %s242, 1920
      %v3319 = vld [vmem:[%s3318] sm:$0xff]
      %v3320 = vld [vmem:[%s3318 + $0x8] sm:$0xff]
      %v3321 = vld [vmem:[%s3318 + $0x10] sm:$0xf]
      %v3322 = vld [vmem:[%s3318 + $0x14] sm:$0xff]
      %v3323 = vld [vmem:[%s3318 + $0x1c] sm:$0xff]
      %v3324 = vld [vmem:[%s3318 + $0x24] sm:$0xf]
      %v3325 = vld [vmem:[%s3318 + $0x28] sm:$0xff]
      %v3326 = vld [vmem:[%s3318 + $0x30] sm:$0xff]
      %v3327 = vld [vmem:[%s3318 + $0x38] sm:$0xf]
      %v3328 = vld [vmem:[%s3318 + $0x3c] sm:$0xff]
      %v3329 = vld [vmem:[%s3318 + $0x44] sm:$0xff]
      %v3330 = vld [vmem:[%s3318 + $0x4c] sm:$0xf]
      %v3331 = vld [vmem:[%s3318 + $0x50] sm:$0xff]
      %v3332 = vld [vmem:[%s3318 + $0x58] sm:$0xff]
      %v3333 = vld [vmem:[%s3318 + $0x60] sm:$0xf]
      %v3334 = vld [vmem:[%s3318 + $0x64] sm:$0xff]
      %v3335 = vld [vmem:[%s3318 + $0x6c] sm:$0xff]
      %v3336 = vld [vmem:[%s3318 + $0x74] sm:$0xf]
      %v3337 = vld [vmem:[%s3318 + $0x78] sm:$0xff]
      %v3338 = vld [vmem:[%s3318 + $0x80] sm:$0xff]
      %v3339 = vld [vmem:[%s3318 + $0x88] sm:$0xf]
      %v3340 = vld [vmem:[%s3318 + $0x8c] sm:$0xff]
      %v3341 = vld [vmem:[%s3318 + $0x94] sm:$0xff]
      %v3342 = vld [vmem:[%s3318 + $0x9c] sm:$0xf]
      %v3343 = vld [vmem:[%s3318 + $0xa0] sm:$0xff]
      %v3344 = vld [vmem:[%s3318 + $0xa8] sm:$0xff]
      %v3345 = vld [vmem:[%s3318 + $0xb0] sm:$0xf]
      %v3346 = vld [vmem:[%s3318 + $0xb4] sm:$0xff]
      %v3347 = vld [vmem:[%s3318 + $0xbc] sm:$0xff]
      %v3348 = vld [vmem:[%s3318 + $0xc4] sm:$0xf]
      %v3349 = vld [vmem:[%s3318 + $0xc8] sm:$0xff]
      %v3350 = vld [vmem:[%s3318 + $0xd0] sm:$0xff]
      %v3351 = vld [vmem:[%s3318 + $0xd8] sm:$0xf]
      %v3352 = vld [vmem:[%s3318 + $0xdc] sm:$0xff]
      %v3353 = vld [vmem:[%s3318 + $0xe4] sm:$0xff]
      %v3354 = vld [vmem:[%s3318 + $0xec] sm:$0xf]
      %v3355 = vld [vmem:[%s3318 + $0xf0] sm:$0xff]
      %v3356 = vld [vmem:[%s3318 + $0xf8] sm:$0xff]
      %v3357 = vld [vmem:[%s3318 + $0x100] sm:$0xf]
      %v3358 = vld [vmem:[%s3318 + $0x104] sm:$0xff]
      %v3359 = vld [vmem:[%s3318 + $0x10c] sm:$0xff]
      %v3360 = vld [vmem:[%s3318 + $0x114] sm:$0xf]
      %v3361 = vld [vmem:[%s3318 + $0x118] sm:$0xff]
      %v3362 = vld [vmem:[%s3318 + $0x120] sm:$0xff]
      %v3363 = vld [vmem:[%s3318 + $0x128] sm:$0xf]
      %v3364 = vld [vmem:[%s3318 + $0x12c] sm:$0xff]
      %v3365 = vld [vmem:[%s3318 + $0x134] sm:$0xff]
      %v3366 = vld [vmem:[%s3318 + $0x13c] sm:$0xf]
      %v3415 = vunpack.c.l.b16 %v3319
      %v3416 = vunpack.c.h.b16 %v3319
      %v3417 = vunpack.c.l.b16 %v3320
      %v3418 = vunpack.c.h.b16 %v3320
      %v3419 = vunpack.c.l.b16 %v3321
      %v3420 = vunpack.c.l.b16 %v3322
      %v3421 = vunpack.c.h.b16 %v3322
      %v3422 = vunpack.c.l.b16 %v3323
      %v3423 = vunpack.c.h.b16 %v3323
      %v3424 = vunpack.c.l.b16 %v3324
      %v3425 = vunpack.c.l.b16 %v3325
      %v3426 = vunpack.c.h.b16 %v3325
      %v3427 = vunpack.c.l.b16 %v3326
      %v3428 = vunpack.c.h.b16 %v3326
      %v3429 = vunpack.c.l.b16 %v3327
      %v3430 = vunpack.c.l.b16 %v3328
      %v3431 = vunpack.c.h.b16 %v3328
      %v3432 = vunpack.c.l.b16 %v3329
      %v3433 = vunpack.c.h.b16 %v3329
      %v3434 = vunpack.c.l.b16 %v3330
      %v3435 = vunpack.c.l.b16 %v3331
      %v3436 = vunpack.c.h.b16 %v3331
      %v3437 = vunpack.c.l.b16 %v3332
      %v3438 = vunpack.c.h.b16 %v3332
      %v3439 = vunpack.c.l.b16 %v3333
      %v3440 = vunpack.c.l.b16 %v3334
      %v3441 = vunpack.c.h.b16 %v3334
      %v3442 = vunpack.c.l.b16 %v3335
      %v3443 = vunpack.c.h.b16 %v3335
      %v3444 = vunpack.c.l.b16 %v3336
      %v3445 = vunpack.c.l.b16 %v3337
      %v3446 = vunpack.c.h.b16 %v3337
      %v3447 = vunpack.c.l.b16 %v3338
      %v3448 = vunpack.c.h.b16 %v3338
      %v3449 = vunpack.c.l.b16 %v3339
      %v3450 = vunpack.c.l.b16 %v3340
      %v3451 = vunpack.c.h.b16 %v3340
      %v3452 = vunpack.c.l.b16 %v3341
      %v3453 = vunpack.c.h.b16 %v3341
      %v3454 = vunpack.c.l.b16 %v3342
      %v3455 = vunpack.c.l.b16 %v3343
      %v3456 = vunpack.c.h.b16 %v3343
      %v3457 = vunpack.c.l.b16 %v3344
      %v3458 = vunpack.c.h.b16 %v3344
      %v3459 = vunpack.c.l.b16 %v3345
      %v3460 = vunpack.c.l.b16 %v3346
      %v3461 = vunpack.c.h.b16 %v3346
      %v3462 = vunpack.c.l.b16 %v3347
      %v3463 = vunpack.c.h.b16 %v3347
      %v3464 = vunpack.c.l.b16 %v3348
      %v3465 = vunpack.c.l.b16 %v3349
      %v3466 = vunpack.c.h.b16 %v3349
      %v3467 = vunpack.c.l.b16 %v3350
      %v3468 = vunpack.c.h.b16 %v3350
      %v3469 = vunpack.c.l.b16 %v3351
      %v3470 = vunpack.c.l.b16 %v3352
      %v3471 = vunpack.c.h.b16 %v3352
      %v3472 = vunpack.c.l.b16 %v3353
      %v3473 = vunpack.c.h.b16 %v3353
      %v3474 = vunpack.c.l.b16 %v3354
      %v3475 = vunpack.c.l.b16 %v3355
      %v3476 = vunpack.c.h.b16 %v3355
      %v3477 = vunpack.c.l.b16 %v3356
      %v3478 = vunpack.c.h.b16 %v3356
      %v3479 = vunpack.c.l.b16 %v3357
      %v3480 = vunpack.c.l.b16 %v3358
      %v3481 = vunpack.c.h.b16 %v3358
      %v3482 = vunpack.c.l.b16 %v3359
      %v3483 = vunpack.c.h.b16 %v3359
      %v3484 = vunpack.c.l.b16 %v3360
      %v3485 = vunpack.c.l.b16 %v3361
      %v3486 = vunpack.c.h.b16 %v3361
      %v3487 = vunpack.c.l.b16 %v3362
      %v3488 = vunpack.c.h.b16 %v3362
      %v3489 = vunpack.c.l.b16 %v3363
      %v3490 = vunpack.c.l.b16 %v3364
      %v3491 = vunpack.c.h.b16 %v3364
      %v3492 = vunpack.c.l.b16 %v3365
      %v3493 = vunpack.c.h.b16 %v3365
      %v3494 = vunpack.c.l.b16 %v3366
      %v3495 = vpack.c.b16 %v3420, %v3415
      %v3496 = vpack.c.b16 %v3421, %v3416
      %v3497 = vpack.c.b16 %v3422, %v3417
      %v3498 = vpack.c.b16 %v3423, %v3418
      %v3499 = vpack.c.b16 %v3424, %v3419
      %v3500 = vpack.c.b16 %v3430, %v3425
      %v3501 = vpack.c.b16 %v3431, %v3426
      %v3502 = vpack.c.b16 %v3432, %v3427
      %v3503 = vpack.c.b16 %v3433, %v3428
      %v3504 = vpack.c.b16 %v3434, %v3429
      %v3505 = vpack.c.b16 %v3440, %v3435
      %v3506 = vpack.c.b16 %v3441, %v3436
      %v3507 = vpack.c.b16 %v3442, %v3437
      %v3508 = vpack.c.b16 %v3443, %v3438
      %v3509 = vpack.c.b16 %v3444, %v3439
      %v3510 = vpack.c.b16 %v3450, %v3445
      %v3511 = vpack.c.b16 %v3451, %v3446
      %v3512 = vpack.c.b16 %v3452, %v3447
      %v3513 = vpack.c.b16 %v3453, %v3448
      %v3514 = vpack.c.b16 %v3454, %v3449
      %v3515 = vpack.c.b16 %v3460, %v3455
      %v3516 = vpack.c.b16 %v3461, %v3456
      %v3517 = vpack.c.b16 %v3462, %v3457
      %v3518 = vpack.c.b16 %v3463, %v3458
      %v3519 = vpack.c.b16 %v3464, %v3459
      %v3520 = vpack.c.b16 %v3470, %v3465
      %v3521 = vpack.c.b16 %v3471, %v3466
      %v3522 = vpack.c.b16 %v3472, %v3467
      %v3523 = vpack.c.b16 %v3473, %v3468
      %v3524 = vpack.c.b16 %v3474, %v3469
      %v3525 = vpack.c.b16 %v3480, %v3475
      %v3526 = vpack.c.b16 %v3481, %v3476
      %v3527 = vpack.c.b16 %v3482, %v3477
      %v3528 = vpack.c.b16 %v3483, %v3478
      %v3529 = vpack.c.b16 %v3484, %v3479
      %v3530 = vpack.c.b16 %v3490, %v3485
      %v3531 = vpack.c.b16 %v3491, %v3486
      %v3532 = vpack.c.b16 %v3492, %v3487
      %v3533 = vpack.c.b16 %v3493, %v3488
      %v3534 = vpack.c.b16 %v3494, %v3489
      %3575 = vmatprep.subr.bf16.mxu0 %v3496
      %3576 = vmatpush1.bf16.msra.mxu0 %v3495
      %3577 = vmatprep.subr.bf16.mxu0 %v3501
      %3578 = vmatpush1.bf16.msra.mxu0 %v3500
      %3579 = vmatprep.subr.bf16.mxu0 %v3506
      %3580 = vmatpush1.bf16.msra.mxu0 %v3505
      %3581 = vmatprep.subr.bf16.mxu0 %v3511
      %3582 = vmatpush1.bf16.msra.mxu0 %v3510
      %3583 = vmatprep.subr.bf16.mxu0 %v3516
      %3584 = vmatpush1.bf16.msra.mxu0 %v3515
      %3585 = vmatprep.subr.bf16.mxu0 %v3521
      %3586 = vmatpush1.bf16.msra.mxu0 %v3520
      %3587 = vmatprep.subr.bf16.mxu0 %v3526
      %3588 = vmatpush1.bf16.msra.mxu0 %v3525
      %3589 = vmatprep.subr.bf16.mxu0 %v3531
      %3590 = vmatpush1.bf16.msra.mxu0 %v3530
      %3591 = vmatprep.subr.bf16.mxu0 0
      %3592 = vmatpush1.bf16.msra.mxu0 0
      %3593 = vmatprep.subr.bf16.mxu0 0
      %3594 = vmatpush1.bf16.msra.mxu0 0
      %3595 = vmatprep.subr.bf16.mxu0 0
      %3596 = vmatpush1.bf16.msra.mxu0 0
      %3597 = vmatprep.subr.bf16.mxu0 0
      %3598 = vmatpush1.bf16.msra.mxu0 0
      %3599 = vmatprep.subr.bf16.mxu0 0
      %3600 = vmatpush1.bf16.msra.mxu0 0
      %3601 = vmatprep.subr.bf16.mxu0 0
      %3602 = vmatpush1.bf16.msra.mxu0 0
      %3603 = vmatprep.subr.bf16.mxu0 0
      %3604 = vmatpush1.bf16.msra.mxu0 0
      %3605 = vmatprep.subr.bf16.mxu0 0
      %3606 = vmatpush1.bf16.msra.mxu0 0
      %3607 = vmatprep.mubr.bf16.mxu0 0
      %3608 = vmatmul.mubr.bf16.gmra.mrb[0].mxu0 %v3315
      %v3609 = vpop.f32.mrb[0].mxu0
      %v3610 = vadd.f32 0.0, %v3609
      %v3611 = vpop.f32.mrb[0].mxu0
      %v3612 = vadd.f32 0.0, %v3611
      %v3613 = vpop.f32.mrb[0].mxu0
      %v3614 = vpop.f32.mrb[0].mxu0
      %3615 = vdwg.mxu0
      %3616 = vmatprep.subr.bf16.mxu0 %v3498
      %3617 = vmatpush1.bf16.msra.mxu0 %v3497
      %3618 = vmatprep.subr.bf16.mxu0 %v3503
      %3619 = vmatpush1.bf16.msra.mxu0 %v3502
      %3620 = vmatprep.subr.bf16.mxu0 %v3508
      %3621 = vmatpush1.bf16.msra.mxu0 %v3507
      %3622 = vmatprep.subr.bf16.mxu0 %v3513
      %3623 = vmatpush1.bf16.msra.mxu0 %v3512
      %3624 = vmatprep.subr.bf16.mxu0 %v3518
      %3625 = vmatpush1.bf16.msra.mxu0 %v3517
      %3626 = vmatprep.subr.bf16.mxu0 %v3523
      %3627 = vmatpush1.bf16.msra.mxu0 %v3522
      %3628 = vmatprep.subr.bf16.mxu0 %v3528
      %3629 = vmatpush1.bf16.msra.mxu0 %v3527
      %3630 = vmatprep.subr.bf16.mxu0 %v3533
      %3631 = vmatpush1.bf16.msra.mxu0 %v3532
      %3632 = vmatprep.subr.bf16.mxu0 0
      %3633 = vmatpush1.bf16.msra.mxu0 0
      %3634 = vmatprep.subr.bf16.mxu0 0
      %3635 = vmatpush1.bf16.msra.mxu0 0
      %3636 = vmatprep.subr.bf16.mxu0 0
      %3637 = vmatpush1.bf16.msra.mxu0 0
      %3638 = vmatprep.subr.bf16.mxu0 0
      %3639 = vmatpush1.bf16.msra.mxu0 0
      %3640 = vmatprep.subr.bf16.mxu0 0
      %3641 = vmatpush1.bf16.msra.mxu0 0
      %3642 = vmatprep.subr.bf16.mxu0 0
      %3643 = vmatpush1.bf16.msra.mxu0 0
      %3644 = vmatprep.subr.bf16.mxu0 0
      %3645 = vmatpush1.bf16.msra.mxu0 0
      %3646 = vmatprep.subr.bf16.mxu0 0
      %3647 = vmatpush1.bf16.msra.mxu0 0
      %3648 = vmatprep.mubr.bf16.mxu0 0
      %3649 = vmatmul.mubr.bf16.gmra.mrb[0].mxu0 %v3315
      %v3650 = vpop.f32.mrb[0].mxu0
      %v3651 = vadd.f32 0.0, %v3650
      %v3652 = vpop.f32.mrb[0].mxu0
      %v3653 = vadd.f32 0.0, %v3652
      %v3654 = vpop.f32.mrb[0].mxu0
      %v3655 = vpop.f32.mrb[0].mxu0
      %3656 = vdwg.mxu0
      %3657 = vmatprep.subr.bf16.mxu0 0
      %3658 = vmatpush1.bf16.msra.mxu0 %v3499
      %3659 = vmatprep.subr.bf16.mxu0 0
      %3660 = vmatpush1.bf16.msra.mxu0 %v3504
      %3661 = vmatprep.subr.bf16.mxu0 0
      %3662 = vmatpush1.bf16.msra.mxu0 %v3509
      %3663 = vmatprep.subr.bf16.mxu0 0
      %3664 = vmatpush1.bf16.msra.mxu0 %v3514
      %3665 = vmatprep.subr.bf16.mxu0 0
      %3666 = vmatpush1.bf16.msra.mxu0 %v3519
      %3667 = vmatprep.subr.bf16.mxu0 0
      %3668 = vmatpush1.bf16.msra.mxu0 %v3524
      %3669 = vmatprep.subr.bf16.mxu0 0
      %3670 = vmatpush1.bf16.msra.mxu0 %v3529
      %3671 = vmatprep.subr.bf16.mxu0 0
      %3672 = vmatpush1.bf16.msra.mxu0 %v3534
      %3673 = vmatprep.subr.bf16.mxu0 0
      %3674 = vmatpush1.bf16.msra.mxu0 0
      %3675 = vmatprep.subr.bf16.mxu0 0
      %3676 = vmatpush1.bf16.msra.mxu0 0
      %3677 = vmatprep.subr.bf16.mxu0 0
      %3678 = vmatpush1.bf16.msra.mxu0 0
      %3679 = vmatprep.subr.bf16.mxu0 0
      %3680 = vmatpush1.bf16.msra.mxu0 0
      %3681 = vmatprep.subr.bf16.mxu0 0
      %3682 = vmatpush1.bf16.msra.mxu0 0
      %3683 = vmatprep.subr.bf16.mxu0 0
      %3684 = vmatpush1.bf16.msra.mxu0 0
      %3685 = vmatprep.subr.bf16.mxu0 0
      %3686 = vmatpush1.bf16.msra.mxu0 0
      %3687 = vmatprep.subr.bf16.mxu0 0
      %3688 = vmatpush1.bf16.msra.mxu0 0
      %3689 = vmatprep.mubr.bf16.mxu0 0
      %3690 = vmatmul.mubr.bf16.gmra.mrb[0].mxu0 %v3315
      %v3691 = vpop.f32.mrb[0].mxu0
      %v3692 = vadd.f32 0.0, %v3691
      %v3693 = vpop.f32.mrb[0].mxu0
      %v3694 = vpop.f32.mrb[0].mxu0
      %v3695 = vpop.f32.mrb[0].mxu0
      %3696 = vdwg.mxu0
      %v3702 = vcombine.low %v3610, %v3612
      %v3703 = vcombine.low %v3651, %v3653
      %v3705 = vunpack.c.l.s4 1983009808
      %v3706 = vunpack.c.0.s8 %v3705
      %v3707 = vlaneseq
      %v3708 = vshrl.u32 %v3707, 7
      %v3709 = vsub.s32 %v3706, %v3708
      %v3710 = vrot.slane %v3702, %v3709
      %v3712 = vunpack.c.l.s4 1983009808
      %v3713 = vunpack.c.0.s8 %v3712
      %v3714 = vlaneseq
      %v3715 = vshrl.u32 %v3714, 7
      %v3716 = vsub.s32 %v3713, %v3715
      %v3717 = vrot.slane %v3703, %v3716
      %v3718 = vcombine.low %v3710, %v3717
      %v3720 = vunpack.c.l.s4 1983009808
      %v3721 = vunpack.c.0.s8 %v3720
      %v3722 = vlaneseq
      %v3723 = vshrl.u32 %v3722, 7
      %v3724 = vsub.s32 %v3721, %v3723
      %v3725 = vrot.slane %v3692, %v3724
      %v3728 = vadd.f32 %v3316, %v3718
      %v3729 = vadd.f32 %v3317, %v3725
      %3730 = vst [vmem:[#allocation3] sm:$0xff] %v3728
      %3731 = vst.msk [vmem:[#allocation3 + $0x8] sm:$0x3] %vm1204, %v3729
      %s3732 = sadd.s32 %s785, 7
      %s3733 = smul.u32 %s3732, 2
      %s3734 = scalar_lea.vmem [#allocation2], %s3733
      %v3735 = vld [vmem:[%s3734] sm:$0x3]
      %v3736 = vpack.c.bf16 %v3735, %v3735
      %v3737 = vld [vmem:[#allocation3] sm:$0xff]
      %v3738 = vld [vmem:[#allocation3 + $0x8] sm:$0x3]
      %s3739 = scalar_lea.vmem %s242, 2240
      %v3740 = vld [vmem:[%s3739] sm:$0xff]
      %v3741 = vld [vmem:[%s3739 + $0x8] sm:$0xff]
      %v3742 = vld [vmem:[%s3739 + $0x10] sm:$0xf]
      %v3743 = vld [vmem:[%s3739 + $0x14] sm:$0xff]
      %v3744 = vld [vmem:[%s3739 + $0x1c] sm:$0xff]
      %v3745 = vld [vmem:[%s3739 + $0x24] sm:$0xf]
      %v3746 = vld [vmem:[%s3739 + $0x28] sm:$0xff]
      %v3747 = vld [vmem:[%s3739 + $0x30] sm:$0xff]
      %v3748 = vld [vmem:[%s3739 + $0x38] sm:$0xf]
      %v3749 = vld [vmem:[%s3739 + $0x3c] sm:$0xff]
      %v3750 = vld [vmem:[%s3739 + $0x44] sm:$0xff]
      %v3751 = vld [vmem:[%s3739 + $0x4c] sm:$0xf]
      %v3752 = vld [vmem:[%s3739 + $0x50] sm:$0xff]
      %v3753 = vld [vmem:[%s3739 + $0x58] sm:$0xff]
      %v3754 = vld [vmem:[%s3739 + $0x60] sm:$0xf]
      %v3755 = vld [vmem:[%s3739 + $0x64] sm:$0xff]
      %v3756 = vld [vmem:[%s3739 + $0x6c] sm:$0xff]
      %v3757 = vld [vmem:[%s3739 + $0x74] sm:$0xf]
      %v3758 = vld [vmem:[%s3739 + $0x78] sm:$0xff]
      %v3759 = vld [vmem:[%s3739 + $0x80] sm:$0xff]
      %v3760 = vld [vmem:[%s3739 + $0x88] sm:$0xf]
      %v3761 = vld [vmem:[%s3739 + $0x8c] sm:$0xff]
      %v3762 = vld [vmem:[%s3739 + $0x94] sm:$0xff]
      %v3763 = vld [vmem:[%s3739 + $0x9c] sm:$0xf]
      %v3764 = vld [vmem:[%s3739 + $0xa0] sm:$0xff]
      %v3765 = vld [vmem:[%s3739 + $0xa8] sm:$0xff]
      %v3766 = vld [vmem:[%s3739 + $0xb0] sm:$0xf]
      %v3767 = vld [vmem:[%s3739 + $0xb4] sm:$0xff]
      %v3768 = vld [vmem:[%s3739 + $0xbc] sm:$0xff]
      %v3769 = vld [vmem:[%s3739 + $0xc4] sm:$0xf]
      %v3770 = vld [vmem:[%s3739 + $0xc8] sm:$0xff]
      %v3771 = vld [vmem:[%s3739 + $0xd0] sm:$0xff]
      %v3772 = vld [vmem:[%s3739 + $0xd8] sm:$0xf]
      %v3773 = vld [vmem:[%s3739 + $0xdc] sm:$0xff]
      %v3774 = vld [vmem:[%s3739 + $0xe4] sm:$0xff]
      %v3775 = vld [vmem:[%s3739 + $0xec] sm:$0xf]
      %v3776 = vld [vmem:[%s3739 + $0xf0] sm:$0xff]
      %v3777 = vld [vmem:[%s3739 + $0xf8] sm:$0xff]
      %v3778 = vld [vmem:[%s3739 + $0x100] sm:$0xf]
      %v3779 = vld [vmem:[%s3739 + $0x104] sm:$0xff]
      %v3780 = vld [vmem:[%s3739 + $0x10c] sm:$0xff]
      %v3781 = vld [vmem:[%s3739 + $0x114] sm:$0xf]
      %v3782 = vld [vmem:[%s3739 + $0x118] sm:$0xff]
      %v3783 = vld [vmem:[%s3739 + $0x120] sm:$0xff]
      %v3784 = vld [vmem:[%s3739 + $0x128] sm:$0xf]
      %v3785 = vld [vmem:[%s3739 + $0x12c] sm:$0xff]
      %v3786 = vld [vmem:[%s3739 + $0x134] sm:$0xff]
      %v3787 = vld [vmem:[%s3739 + $0x13c] sm:$0xf]
      %v3836 = vunpack.c.l.b16 %v3740
      %v3837 = vunpack.c.h.b16 %v3740
      %v3838 = vunpack.c.l.b16 %v3741
      %v3839 = vunpack.c.h.b16 %v3741
      %v3840 = vunpack.c.l.b16 %v3742
      %v3841 = vunpack.c.l.b16 %v3743
      %v3842 = vunpack.c.h.b16 %v3743
      %v3843 = vunpack.c.l.b16 %v3744
      %v3844 = vunpack.c.h.b16 %v3744
      %v3845 = vunpack.c.l.b16 %v3745
      %v3846 = vunpack.c.l.b16 %v3746
      %v3847 = vunpack.c.h.b16 %v3746
      %v3848 = vunpack.c.l.b16 %v3747
      %v3849 = vunpack.c.h.b16 %v3747
      %v3850 = vunpack.c.l.b16 %v3748
      %v3851 = vunpack.c.l.b16 %v3749
      %v3852 = vunpack.c.h.b16 %v3749
      %v3853 = vunpack.c.l.b16 %v3750
      %v3854 = vunpack.c.h.b16 %v3750
      %v3855 = vunpack.c.l.b16 %v3751
      %v3856 = vunpack.c.l.b16 %v3752
      %v3857 = vunpack.c.h.b16 %v3752
      %v3858 = vunpack.c.l.b16 %v3753
      %v3859 = vunpack.c.h.b16 %v3753
      %v3860 = vunpack.c.l.b16 %v3754
      %v3861 = vunpack.c.l.b16 %v3755
      %v3862 = vunpack.c.h.b16 %v3755
      %v3863 = vunpack.c.l.b16 %v3756
      %v3864 = vunpack.c.h.b16 %v3756
      %v3865 = vunpack.c.l.b16 %v3757
      %v3866 = vunpack.c.l.b16 %v3758
      %v3867 = vunpack.c.h.b16 %v3758
      %v3868 = vunpack.c.l.b16 %v3759
      %v3869 = vunpack.c.h.b16 %v3759
      %v3870 = vunpack.c.l.b16 %v3760
      %v3871 = vunpack.c.l.b16 %v3761
      %v3872 = vunpack.c.h.b16 %v3761
      %v3873 = vunpack.c.l.b16 %v3762
      %v3874 = vunpack.c.h.b16 %v3762
      %v3875 = vunpack.c.l.b16 %v3763
      %v3876 = vunpack.c.l.b16 %v3764
      %v3877 = vunpack.c.h.b16 %v3764
      %v3878 = vunpack.c.l.b16 %v3765
      %v3879 = vunpack.c.h.b16 %v3765
      %v3880 = vunpack.c.l.b16 %v3766
      %v3881 = vunpack.c.l.b16 %v3767
      %v3882 = vunpack.c.h.b16 %v3767
      %v3883 = vunpack.c.l.b16 %v3768
      %v3884 = vunpack.c.h.b16 %v3768
      %v3885 = vunpack.c.l.b16 %v3769
      %v3886 = vunpack.c.l.b16 %v3770
      %v3887 = vunpack.c.h.b16 %v3770
      %v3888 = vunpack.c.l.b16 %v3771
      %v3889 = vunpack.c.h.b16 %v3771
      %v3890 = vunpack.c.l.b16 %v3772
      %v3891 = vunpack.c.l.b16 %v3773
      %v3892 = vunpack.c.h.b16 %v3773
      %v3893 = vunpack.c.l.b16 %v3774
      %v3894 = vunpack.c.h.b16 %v3774
      %v3895 = vunpack.c.l.b16 %v3775
      %v3896 = vunpack.c.l.b16 %v3776
      %v3897 = vunpack.c.h.b16 %v3776
      %v3898 = vunpack.c.l.b16 %v3777
      %v3899 = vunpack.c.h.b16 %v3777
      %v3900 = vunpack.c.l.b16 %v3778
      %v3901 = vunpack.c.l.b16 %v3779
      %v3902 = vunpack.c.h.b16 %v3779
      %v3903 = vunpack.c.l.b16 %v3780
      %v3904 = vunpack.c.h.b16 %v3780
      %v3905 = vunpack.c.l.b16 %v3781
      %v3906 = vunpack.c.l.b16 %v3782
      %v3907 = vunpack.c.h.b16 %v3782
      %v3908 = vunpack.c.l.b16 %v3783
      %v3909 = vunpack.c.h.b16 %v3783
      %v3910 = vunpack.c.l.b16 %v3784
      %v3911 = vunpack.c.l.b16 %v3785
      %v3912 = vunpack.c.h.b16 %v3785
      %v3913 = vunpack.c.l.b16 %v3786
      %v3914 = vunpack.c.h.b16 %v3786
      %v3915 = vunpack.c.l.b16 %v3787
      %v3916 = vpack.c.b16 %v3841, %v3836
      %v3917 = vpack.c.b16 %v3842, %v3837
      %v3918 = vpack.c.b16 %v3843, %v3838
      %v3919 = vpack.c.b16 %v3844, %v3839
      %v3920 = vpack.c.b16 %v3845, %v3840
      %v3921 = vpack.c.b16 %v3851, %v3846
      %v3922 = vpack.c.b16 %v3852, %v3847
      %v3923 = vpack.c.b16 %v3853, %v3848
      %v3924 = vpack.c.b16 %v3854, %v3849
      %v3925 = vpack.c.b16 %v3855, %v3850
      %v3926 = vpack.c.b16 %v3861, %v3856
      %v3927 = vpack.c.b16 %v3862, %v3857
      %v3928 = vpack.c.b16 %v3863, %v3858
      %v3929 = vpack.c.b16 %v3864, %v3859
      %v3930 = vpack.c.b16 %v3865, %v3860
      %v3931 = vpack.c.b16 %v3871, %v3866
      %v3932 = vpack.c.b16 %v3872, %v3867
      %v3933 = vpack.c.b16 %v3873, %v3868
      %v3934 = vpack.c.b16 %v3874, %v3869
      %v3935 = vpack.c.b16 %v3875, %v3870
      %v3936 = vpack.c.b16 %v3881, %v3876
      %v3937 = vpack.c.b16 %v3882, %v3877
      %v3938 = vpack.c.b16 %v3883, %v3878
      %v3939 = vpack.c.b16 %v3884, %v3879
      %v3940 = vpack.c.b16 %v3885, %v3880
      %v3941 = vpack.c.b16 %v3891, %v3886
      %v3942 = vpack.c.b16 %v3892, %v3887
      %v3943 = vpack.c.b16 %v3893, %v3888
      %v3944 = vpack.c.b16 %v3894, %v3889
      %v3945 = vpack.c.b16 %v3895, %v3890
      %v3946 = vpack.c.b16 %v3901, %v3896
      %v3947 = vpack.c.b16 %v3902, %v3897
      %v3948 = vpack.c.b16 %v3903, %v3898
      %v3949 = vpack.c.b16 %v3904, %v3899
      %v3950 = vpack.c.b16 %v3905, %v3900
      %v3951 = vpack.c.b16 %v3911, %v3906
      %v3952 = vpack.c.b16 %v3912, %v3907
      %v3953 = vpack.c.b16 %v3913, %v3908
      %v3954 = vpack.c.b16 %v3914, %v3909
      %v3955 = vpack.c.b16 %v3915, %v3910
      %3996 = vmatprep.subr.bf16.mxu0 %v3917
      %3997 = vmatpush1.bf16.msra.mxu0 %v3916
      %3998 = vmatprep.subr.bf16.mxu0 %v3922
      %3999 = vmatpush1.bf16.msra.mxu0 %v3921
      %4000 = vmatprep.subr.bf16.mxu0 %v3927
      %4001 = vmatpush1.bf16.msra.mxu0 %v3926
      %4002 = vmatprep.subr.bf16.mxu0 %v3932
      %4003 = vmatpush1.bf16.msra.mxu0 %v3931
      %4004 = vmatprep.subr.bf16.mxu0 %v3937
      %4005 = vmatpush1.bf16.msra.mxu0 %v3936
      %4006 = vmatprep.subr.bf16.mxu0 %v3942
      %4007 = vmatpush1.bf16.msra.mxu0 %v3941
      %4008 = vmatprep.subr.bf16.mxu0 %v3947
      %4009 = vmatpush1.bf16.msra.mxu0 %v3946
      %4010 = vmatprep.subr.bf16.mxu0 %v3952
      %4011 = vmatpush1.bf16.msra.mxu0 %v3951
      %4012 = vmatprep.subr.bf16.mxu0 0
      %4013 = vmatpush1.bf16.msra.mxu0 0
      %4014 = vmatprep.subr.bf16.mxu0 0
      %4015 = vmatpush1.bf16.msra.mxu0 0
      %4016 = vmatprep.subr.bf16.mxu0 0
      %4017 = vmatpush1.bf16.msra.mxu0 0
      %4018 = vmatprep.subr.bf16.mxu0 0
      %4019 = vmatpush1.bf16.msra.mxu0 0
      %4020 = vmatprep.subr.bf16.mxu0 0
      %4021 = vmatpush1.bf16.msra.mxu0 0
      %4022 = vmatprep.subr.bf16.mxu0 0
      %4023 = vmatpush1.bf16.msra.mxu0 0
      %4024 = vmatprep.subr.bf16.mxu0 0
      %4025 = vmatpush1.bf16.msra.mxu0 0
      %4026 = vmatprep.subr.bf16.mxu0 0
      %4027 = vmatpush1.bf16.msra.mxu0 0
      %4028 = vmatprep.mubr.bf16.mxu0 0
      %4029 = vmatmul.mubr.bf16.gmra.mrb[0].mxu0 %v3736
      %v4030 = vpop.f32.mrb[0].mxu0
      %v4031 = vadd.f32 0.0, %v4030
      %v4032 = vpop.f32.mrb[0].mxu0
      %v4033 = vadd.f32 0.0, %v4032
      %v4034 = vpop.f32.mrb[0].mxu0
      %v4035 = vpop.f32.mrb[0].mxu0
      %4036 = vdwg.mxu0
      %4037 = vmatprep.subr.bf16.mxu0 %v3919
      %4038 = vmatpush1.bf16.msra.mxu0 %v3918
      %4039 = vmatprep.subr.bf16.mxu0 %v3924
      %4040 = vmatpush1.bf16.msra.mxu0 %v3923
      %4041 = vmatprep.subr.bf16.mxu0 %v3929
      %4042 = vmatpush1.bf16.msra.mxu0 %v3928
      %4043 = vmatprep.subr.bf16.mxu0 %v3934
      %4044 = vmatpush1.bf16.msra.mxu0 %v3933
      %4045 = vmatprep.subr.bf16.mxu0 %v3939
      %4046 = vmatpush1.bf16.msra.mxu0 %v3938
      %4047 = vmatprep.subr.bf16.mxu0 %v3944
      %4048 = vmatpush1.bf16.msra.mxu0 %v3943
      %4049 = vmatprep.subr.bf16.mxu0 %v3949
      %4050 = vmatpush1.bf16.msra.mxu0 %v3948
      %4051 = vmatprep.subr.bf16.mxu0 %v3954
      %4052 = vmatpush1.bf16.msra.mxu0 %v3953
      %4053 = vmatprep.subr.bf16.mxu0 0
      %4054 = vmatpush1.bf16.msra.mxu0 0
      %4055 = vmatprep.subr.bf16.mxu0 0
      %4056 = vmatpush1.bf16.msra.mxu0 0
      %4057 = vmatprep.subr.bf16.mxu0 0
      %4058 = vmatpush1.bf16.msra.mxu0 0
      %4059 = vmatprep.subr.bf16.mxu0 0
      %4060 = vmatpush1.bf16.msra.mxu0 0
      %4061 = vmatprep.subr.bf16.mxu0 0
      %4062 = vmatpush1.bf16.msra.mxu0 0
      %4063 = vmatprep.subr.bf16.mxu0 0
      %4064 = vmatpush1.bf16.msra.mxu0 0
      %4065 = vmatprep.subr.bf16.mxu0 0
      %4066 = vmatpush1.bf16.msra.mxu0 0
      %4067 = vmatprep.subr.bf16.mxu0 0
      %4068 = vmatpush1.bf16.msra.mxu0 0
      %4069 = vmatprep.mubr.bf16.mxu0 0
      %4070 = vmatmul.mubr.bf16.gmra.mrb[0].mxu0 %v3736
      %v4071 = vpop.f32.mrb[0].mxu0
      %v4072 = vadd.f32 0.0, %v4071
      %v4073 = vpop.f32.mrb[0].mxu0
      %v4074 = vadd.f32 0.0, %v4073
      %v4075 = vpop.f32.mrb[0].mxu0
      %v4076 = vpop.f32.mrb[0].mxu0
      %4077 = vdwg.mxu0
      %4078 = vmatprep.subr.bf16.mxu0 0
      %4079 = vmatpush1.bf16.msra.mxu0 %v3920
      %4080 = vmatprep.subr.bf16.mxu0 0
      %4081 = vmatpush1.bf16.msra.mxu0 %v3925
      %4082 = vmatprep.subr.bf16.mxu0 0
      %4083 = vmatpush1.bf16.msra.mxu0 %v3930
      %4084 = vmatprep.subr.bf16.mxu0 0
      %4085 = vmatpush1.bf16.msra.mxu0 %v3935
      %4086 = vmatprep.subr.bf16.mxu0 0
      %4087 = vmatpush1.bf16.msra.mxu0 %v3940
      %4088 = vmatprep.subr.bf16.mxu0 0
      %4089 = vmatpush1.bf16.msra.mxu0 %v3945
      %4090 = vmatprep.subr.bf16.mxu0 0
      %4091 = vmatpush1.bf16.msra.mxu0 %v3950
      %4092 = vmatprep.subr.bf16.mxu0 0
      %4093 = vmatpush1.bf16.msra.mxu0 %v3955
      %4094 = vmatprep.subr.bf16.mxu0 0
      %4095 = vmatpush1.bf16.msra.mxu0 0
      %4096 = vmatprep.subr.bf16.mxu0 0
      %4097 = vmatpush1.bf16.msra.mxu0 0
      %4098 = vmatprep.subr.bf16.mxu0 0
      %4099 = vmatpush1.bf16.msra.mxu0 0
      %4100 = vmatprep.subr.bf16.mxu0 0
      %4101 = vmatpush1.bf16.msra.mxu0 0
      %4102 = vmatprep.subr.bf16.mxu0 0
      %4103 = vmatpush1.bf16.msra.mxu0 0
      %4104 = vmatprep.subr.bf16.mxu0 0
      %4105 = vmatpush1.bf16.msra.mxu0 0
      %4106 = vmatprep.subr.bf16.mxu0 0
      %4107 = vmatpush1.bf16.msra.mxu0 0
      %4108 = vmatprep.subr.bf16.mxu0 0
      %4109 = vmatpush1.bf16.msra.mxu0 0
      %4110 = vmatprep.mubr.bf16.mxu0 0
      %4111 = vmatmul.mubr.bf16.gmra.mrb[0].mxu0 %v3736
      %v4112 = vpop.f32.mrb[0].mxu0
      %v4113 = vadd.f32 0.0, %v4112
      %v4114 = vpop.f32.mrb[0].mxu0
      %v4115 = vpop.f32.mrb[0].mxu0
      %v4116 = vpop.f32.mrb[0].mxu0
      %4117 = vdwg.mxu0
      %v4123 = vcombine.low %v4031, %v4033
      %v4124 = vcombine.low %v4072, %v4074
      %v4126 = vunpack.c.l.s4 1983009808
      %v4127 = vunpack.c.0.s8 %v4126
      %v4128 = vlaneseq
      %v4129 = vshrl.u32 %v4128, 7
      %v4130 = vsub.s32 %v4127, %v4129
      %v4131 = vrot.slane %v4123, %v4130
      %v4133 = vunpack.c.l.s4 1983009808
      %v4134 = vunpack.c.0.s8 %v4133
      %v4135 = vlaneseq
      %v4136 = vshrl.u32 %v4135, 7
      %v4137 = vsub.s32 %v4134, %v4136
      %v4138 = vrot.slane %v4124, %v4137
      %v4139 = vcombine.low %v4131, %v4138
      %v4141 = vunpack.c.l.s4 1983009808
      %v4142 = vunpack.c.0.s8 %v4141
      %v4143 = vlaneseq
      %v4144 = vshrl.u32 %v4143, 7
      %v4145 = vsub.s32 %v4142, %v4144
      %v4146 = vrot.slane %v4113, %v4145
      %v4149 = vadd.f32 %v3737, %v4139
      %v4150 = vadd.f32 %v3738, %v4146
      %4151 = vst [vmem:[#allocation3] sm:$0xff] %v4149
      %4152 = vst.msk [vmem:[#allocation3 + $0x8] sm:$0x3] %vm1204, %v4150
      %p4153 = scmp.eq.s32.totalorder %s19, 1
      // Predicated region
      $region49: #{discriminator_forward.1} parent=43 // pred_check
        %p4154 = pneg %p4153
      $region50: #{discriminator_forward.1} parent=43 // pred_check_branch
        %4156 = sbr.rel (%p4154) target = $region52
      $region51: #{discriminator_forward.1} parent=43 // pred_region
        %v4157 = vld [vmem:[#allocation3] sm:$0xff]
        %v4158 = vld [vmem:[#allocation3 + $0x8] sm:$0x3]
        %v4159 = vld [vmem:[%s3] sm:$0x1f]
        %v4161 = vlaneseq
        %v4162 = vshrl.u32 %v4161, 7
        %v4163 = vsub.s32 0, %v4162
        %v4164 = vrot.slane %v4159, %v4163
        %v4165 = vlaneseq
        %v4166 = vshrl.u32 %v4165, 7
        %v4167 = vsub.s32 1, %v4166
        %v4168 = vrot.slane %v4159, %v4167
        %v4169 = vlaneseq
        %v4170 = vshrl.u32 %v4169, 7
        %v4171 = vsub.s32 2, %v4170
        %v4172 = vrot.slane %v4159, %v4171
        %v4173 = vlaneseq
        %v4174 = vshrl.u32 %v4173, 7
        %v4175 = vsub.s32 3, %v4174
        %v4176 = vrot.slane %v4159, %v4175
        %v4177 = vlaneseq
        %v4178 = vshrl.u32 %v4177, 7
        %v4179 = vsub.s32 4, %v4178
        %v4180 = vrot.slane %v4159, %v4179
        %v4181 = vcombine.low %v4164, %v4168
        %v4182 = vcombine.low %v4172, %v4176
        %v4184 = vunpack.c.l.s4 1983009808
        %v4185 = vunpack.c.0.s8 %v4184
        %v4186 = vlaneseq
        %v4187 = vshrl.u32 %v4186, 7
        %v4188 = vsub.s32 %v4185, %v4187
        %v4189 = vrot.slane %v4181, %v4188
        %v4191 = vunpack.c.l.s4 1983009808
        %v4192 = vunpack.c.0.s8 %v4191
        %v4193 = vlaneseq
        %v4194 = vshrl.u32 %v4193, 7
        %v4195 = vsub.s32 %v4192, %v4194
        %v4196 = vrot.slane %v4182, %v4195
        %v4197 = vcombine.low %v4189, %v4196
        %v4199 = vunpack.c.l.s4 1983009808
        %v4200 = vunpack.c.0.s8 %v4199
        %v4201 = vlaneseq
        %v4202 = vshrl.u32 %v4201, 7
        %v4203 = vsub.s32 %v4200, %v4202
        %v4204 = vrot.slane %v4180, %v4203
        %v4207 = vadd.f32 %v4157, %v4197
        %v4208 = vadd.f32 %v4158, %v4204
        %vm4209 = vcmp.ge.f32.partialorder %v4207, 0.0
        %vm4210 = vcmp.ge.f32.partialorder %v4208, 0.0
        %v4211 = vmul.f32 %v4207, 0.2
        %v4212 = vmul.f32 %v4208, 0.2
        %v4213 = vsel %vm4209, %v4207, %v4211
        %v4214 = vsel %vm4210, %v4208, %v4212
        %v4215 = vld [vmem:[%s4] sm:$0x1f]
        %v4217 = vlaneseq
        %v4218 = vshrl.u32 %v4217, 7
        %v4219 = vsub.s32 0, %v4218
        %v4220 = vrot.slane %v4215, %v4219
        %v4221 = vlaneseq
        %v4222 = vshrl.u32 %v4221, 7
        %v4223 = vsub.s32 1, %v4222
        %v4224 = vrot.slane %v4215, %v4223
        %v4225 = vlaneseq
        %v4226 = vshrl.u32 %v4225, 7
        %v4227 = vsub.s32 2, %v4226
        %v4228 = vrot.slane %v4215, %v4227
        %v4229 = vlaneseq
        %v4230 = vshrl.u32 %v4229, 7
        %v4231 = vsub.s32 3, %v4230
        %v4232 = vrot.slane %v4215, %v4231
        %v4233 = vlaneseq
        %v4234 = vshrl.u32 %v4233, 7
        %v4235 = vsub.s32 4, %v4234
        %v4236 = vrot.slane %v4215, %v4235
        %v4237 = vcombine.low %v4220, %v4224
        %v4238 = vcombine.low %v4228, %v4232
        %v4240 = vunpack.c.l.s4 1983009808
        %v4241 = vunpack.c.0.s8 %v4240
        %v4242 = vlaneseq
        %v4243 = vshrl.u32 %v4242, 7
        %v4244 = vsub.s32 %v4241, %v4243
        %v4245 = vrot.slane %v4237, %v4244
        %v4247 = vunpack.c.l.s4 1983009808
        %v4248 = vunpack.c.0.s8 %v4247
        %v4249 = vlaneseq
        %v4250 = vshrl.u32 %v4249, 7
        %v4251 = vsub.s32 %v4248, %v4250
        %v4252 = vrot.slane %v4238, %v4251
        %v4253 = vcombine.low %v4245, %v4252
        %v4255 = vunpack.c.l.s4 1983009808
        %v4256 = vunpack.c.0.s8 %v4255
        %v4257 = vlaneseq
        %v4258 = vshrl.u32 %v4257, 7
        %v4259 = vsub.s32 %v4256, %v4258
        %v4260 = vrot.slane %v4236, %v4259
        %v4263 = vmul.f32 %v4213, %v4253
        %v4264 = vmul.f32 %v4214, %v4260
        %v4267 = vcombine.high %v4263, %v4263
        %v4269 = vunpack.c.l.s4 1983009808
        %v4270 = vunpack.c.0.s8 %v4269
        %v4271 = vlaneseq
        %v4272 = vshrl.u32 %v4271, 7
        %v4273 = vsub.s32 %v4270, %v4272
        %v4274 = vrot.slane %v4263, %v4273
        %v4276 = vunpack.c.l.s4 1983009808
        %v4277 = vunpack.c.0.s8 %v4276
        %v4278 = vlaneseq
        %v4279 = vshrl.u32 %v4278, 7
        %v4280 = vsub.s32 %v4277, %v4279
        %v4281 = vrot.slane %v4267, %v4280
        %v4282 = vcombine.high %v4274, %v4274
        %v4283 = vcombine.high %v4281, %v4281
        %v4285 = vunpack.c.l.s4 1983009808
        %v4286 = vunpack.c.0.s8 %v4285
        %v4287 = vlaneseq
        %v4288 = vshrl.u32 %v4287, 7
        %v4289 = vsub.s32 %v4286, %v4288
        %v4290 = vrot.slane %v4264, %v4289
        %vm4296 = vcmask 1041408
        %v4297 = vsel %vm4296, %v4274, 0.0
        %v4298 = vsel %vm4296, %v4282, 0.0
        %v4299 = vadd.f32 %v4297, %v4298
        %v4300 = vsel %vm4296, %v4281, 0.0
        %v4301 = vadd.f32 %v4299, %v4300
        %v4302 = vsel %vm4296, %v4283, 0.0
        %v4303 = vadd.f32 %v4301, %v4302
        %v4304 = vsel %vm1204, %v4290, 0.0
        %v4305 = vadd.f32 %v4303, %v4304
        %4306 = vadd.xlane.f32.xlu0 %v4305
        %v4307 = vpop.xlane.xlu0 %4306
        %v4308 = vld [vmem:[#allocation4] sm:$0x1]
        %v4310 = vlaneseq
        %v4311 = vshrl.u32 %v4310, 7
        %v4312 = vsub.s32 0, %v4311
        %v4313 = vrot.slane %v4308, %v4312
        %v4315 = vadd.f32 %v4307, %v4313
        %vm4316 = vcmask 1024
        %4317 = vst.msk [vmem:[%s6] sm:$0x3] %vm4316, %v4315
      $region52: #{discriminator_forward.1} parent=43 // pred_fallthru
        _
      // Predicated region
      $region53: #{discriminator_forward.1} parent=43 // pred_check
        %p4318 = pneg %p163
      $region54: #{discriminator_forward.1} parent=43 // pred_check_branch
        %4320 = sbr.rel (%p4318) target = $region56
      $region55: #{discriminator_forward.1} parent=43 // pred_region
        _
      $region56: #{discriminator_forward.1} parent=43 // pred_fallthru
        _
      // Predicated region
      $region57: #{discriminator_forward.1} parent=43 // pred_check
        %p4321 = pneg %p163
      $region58: #{discriminator_forward.1} parent=43 // pred_check_branch
        %4323 = sbr.rel (%p4321) target = $region60
      $region59: #{discriminator_forward.1} parent=43 // pred_region
        _
      $region60: #{discriminator_forward.1} parent=43 // pred_fallthru
        _
    $region44: #{discriminator_forward.1} parent=5 // pred_fallthru
      _
    %p4324 = scmp.le.s32.totalorder 2, %s14
    // Predicated region
    $region61: #{discriminator_forward.1} parent=5 // pred_check
      %p4325 = pneg %p4324
    $region62: #{discriminator_forward.1} parent=5 // pred_check_branch
      %4327 = sbr.rel (%p4325) target = $region64
    $region63: #{discriminator_forward.1} parent=5 // pred_region
      %s4328 = ssub.s32 %s14, 2
    $region64: #{discriminator_forward.1} parent=5 // pred_fallthru
      _
  $region6: #{discriminator_forward.1} parent=0 // loop_footer
    %s18 = sadd.s32 1, %s14
  $region7: #{discriminator_forward.1} parent=0 // loop_footer_branch
    %13 = sbr.rel target = $region3
  $region8: #{discriminator_forward.1} parent=0 // loop_exit
    _

</llo_original>
